<compile_context>
chip_gen: v5e
topology: v5e:2x2
jax: 0.10.0
libtpu: 0.0.40
codegen_flags: <defaults>
</compile_context>

<pallas_src>
import functools

import jax
import jax.numpy as jnp
from jax import lax
from jax.experimental import pallas as pl
from jax.experimental.pallas import tpu as pltpu
import numpy as np


def _round_up(v, m):
    return (v + m - 1) // m * m


# ----------------------------- in-kernel helpers -----------------------------

def _pool2x2(x):
    # x: (H, W, C) -> (H//2, W//2, C), 2x2 mean pool.
    # NOTE: reshape-and-index form kept on purpose (known-good Mosaic lowering);
    # the stride-2-slice variant is a minor vld/vst optimization only.
    H, W, C = x.shape
    xw = x.reshape(H, W // 2, 2, C)
    xw = xw[:, :, 0, :] + xw[:, :, 1, :]
    xh = xw.reshape(H // 2, 2, W // 2, C)
    return (xh[:, 0, :, :] + xh[:, 1, :, :]) * 0.25


def _auto_row_strip(Ho, Wo, Cin, Cp, use_im2col, in_itemsize, budget_bytes=8 << 20):
    """Largest row strip (divisor of Ho, preferring multiples of 8 sublanes) whose
    per-strip compute working set (tap/patch slices + f32 accumulator) fits budget."""
    k = (9 * Cin) if use_im2col else Cin

    def ws(rs):
        return rs * Wo * (2 * k * in_itemsize + Cp * 4)

    if ws(Ho) <= budget_bytes:
        return Ho
    fallback = 1
    for cand in range(Ho - 1, 0, -1):
        if Ho % cand or ws(cand) > budget_bytes:
            continue
        if cand % 8 == 0:
            return cand
        fallback = max(fallback, cand)
    return fallback


def _make_kernel(H, W, Cin, Cp_h, Cp_l, Wp_h, Wp_l, RS_h, RS_l, pre_pool,
                 use_im2col, op_cast_dtype):
    # Effective "high" resolution (stride==2 pools the input first, in-kernel).
    Hh, Wh = (H // 2, W // 2) if pre_pool else (H, W)
    Hl, Wl = Hh // 2, Wh // 2

    def conv_branch(xin, w_ref, pad_ref, o_ref, Ho, Wo, Cp, Wp, RS):
        zdt = pad_ref.dtype
        # Zero ONLY the 1-pixel halo border (+ sublane-alignment tail); the interior
        # is fully overwritten below, so no full-buffer memset per grid step.
        pad_ref[0:1, :, :] = jnp.zeros((1, Wp, Cin), zdt)
        pad_ref[Ho + 1:Ho + 2, :, :] = jnp.zeros((1, Wp, Cin), zdt)
        pad_ref[:, 0:1, :] = jnp.zeros((Ho + 2, 1, Cin), zdt)
        pad_ref[:, Wo + 1:Wp, :] = jnp.zeros((Ho + 2, Wp - Wo - 1, Cin), zdt)
        pad_ref[1:Ho + 1, 1:Wo + 1, :] = xin

        # Weights loaded once per branch (reused by every row strip).
        if use_im2col:
            w_flat = w_ref[...].reshape(9 * Cin, Cp)           # (9*Cin, Cp)
        else:
            w_taps = [w_ref[t] for t in range(9)]              # 9 x (Cin, Cp)

        num_strips = Ho // RS

        def do_strip(r0):
            # (RS+2, Wp, Cin) window of the padded input for this output-row strip.
            xp = pad_ref[pl.ds(r0, RS + 2), :, :]
            if use_im2col:
                cols = []
                for t in range(9):
                    dy, dx = divmod(t, 3)
                    cols.append(xp[dy:dy + RS, dx:dx + Wo, :].reshape(RS * Wo, Cin))
                patches = jnp.concatenate(cols, axis=-1)        # lane-aligned (Cin%128==0)
                if op_cast_dtype is not None:
                    patches = patches.astype(op_cast_dtype)
                acc = jnp.dot(patches, w_flat, preferred_element_type=jnp.float32)
            else:
                acc = jnp.zeros((RS * Wo, Cp), jnp.float32)
                for t in range(9):
                    dy, dx = divmod(t, 3)
                    sl = xp[dy:dy + RS, dx:dx + Wo, :].reshape(RS * Wo, Cin)
                    if op_cast_dtype is not None:
                        sl = sl.astype(op_cast_dtype)
                    acc = acc + jnp.dot(sl, w_taps[t],
                                        preferred_element_type=jnp.float32)
            # Lane-dense store: Cp is a multiple of 128 (padded in the wrapper).
            o_ref[0, pl.ds(r0, RS)] = acc.reshape(RS, Wo, Cp).astype(o_ref.dtype)

        if num_strips == 1:
            do_strip(0)
        else:
            def body(s, carry):
                do_strip(pl.multiple_of(s * RS, RS))
                return carry
            lax.fori_loop(0, num_strips, body, 0)

    def kernel(x_ref, wh_ref, wl_ref, oh_ref, ol_ref, pad_h_ref, pad_l_ref):
        x = x_ref[0]                                  # (H, W, Cin)
        if pre_pool:                                  # stride == 2 path
            x = _pool2x2(x)
        # high -> high: conv at (effective) full resolution
        conv_branch(x, wh_ref, pad_h_ref, oh_ref, Hh, Wh, Cp_h, Wp_h, RS_h)
        # high -> low: 2x2 pool (in VMEM) then conv at half resolution
        conv_branch(_pool2x2(x), wl_ref, pad_l_ref, ol_ref, Hl, Wl, Cp_l, Wp_l, RS_l)

    return kernel, (Hh, Wh, Hl, Wl)


# ----------------------------- public wrapper -----------------------------

def first_octave_conv_forward(x_nchw, w_h2h_hwio, w_h2l_hwio, *, stride=1,
                              mxu_dtype=None, cast_early=True, row_strip=None):
    """FirstOctaveConv.forward. x_nchw: (N, Cin, H, W); weights (3, 3, Cin, Cout).
    Returns (X_h, X_l) in NCHW.
    mxu_dtype=jnp.bfloat16 uses bf16 MXU operands (f32 accumulation); cast_early=True
    (v6e/v7x) casts before pool/pad/patch-build, cast_early=False (v5e) casts only
    at the dot.  row_strip overrides the auto-chosen output-row strip size."""
    N, Cin, H, W = x_nchw.shape
    C_h = w_h2h_hwio.shape[-1]
    C_l = w_h2l_hwio.shape[-1]
    assert w_h2h_hwio.shape[:3] == (3, 3, Cin)
    assert w_h2l_hwio.shape[:3] == (3, 3, Cin)
    pre_pool = (stride == 2)
    need = 4 if pre_pool else 2
    assert H % need == 0 and W % need == 0, "spatial dims must support the 2x2 pools"

    out_dtype = x_nchw.dtype
    Hh, Wh = (H // 2, W // 2) if pre_pool else (H, W)
    Hl, Wl = Hh // 2, Wh // 2

    early = (mxu_dtype is not None) and cast_early
    compute_dtype = mxu_dtype if early else x_nchw.dtype
    op_cast_dtype = mxu_dtype if (mxu_dtype is not None and not early) else None

    # NCHW -> NHWC so channels sit on the lane axis (keep the surrounding graph NHWC
    # in a full network so these transposes leave the hot path).
    x = jnp.transpose(x_nchw, (0, 2, 3, 1)).astype(compute_dtype)

    # Lane-dense output stores + full-width MXU N: pad Cout to a multiple of 128
    # with zero weight columns; strip the extra channels off after the kernel.
    # TODO(synk): for very small Cout, fold W into the lane axis instead to avoid
    # the padded HBM writeback.
    Cp_h = _round_up(C_h, 128)
    Cp_l = _round_up(C_l, 128)
    w_dtype = mxu_dtype if mxu_dtype is not None else x_nchw.dtype

    def prep_w(w, Cp):
        w = jnp.asarray(w, w_dtype).reshape(9, Cin, w.shape[-1])   # (dy,dx) -> tap
        if Cp != w.shape[-1]:
            w = jnp.pad(w, ((0, 0), (0, 0), (0, Cp - w.shape[-1])))
        return w

    w_h = prep_w(w_h2h_hwio, Cp_h)
    w_l = prep_w(w_h2l_hwio, Cp_l)

    # im2col (one big matmul) only when the lane-axis concat is aligned; otherwise
    # 9 accumulating per-tap matmuls (no patch-matrix blow-up in VMEM).
    use_im2col = (Cin % 128 == 0)

    in_item = jnp.dtype(compute_dtype).itemsize
    if row_strip is not None:
        RS_h = min(row_strip, Hh)
        RS_l = min(row_strip, Hl)
        assert Hh % RS_h == 0 and Hl % RS_l == 0
    else:
        RS_h = _auto_row_strip(Hh, Wh, Cin, Cp_h, use_im2col, in_item)
        RS_l = _auto_row_strip(Hl, Wl, Cin, Cp_l, use_im2col, in_item)

    # Halo buffers with the W+2 axis rounded up to a multiple of 8 sublanes.
    Wp_h = _round_up(Wh + 2, 8)
    Wp_l = _round_up(Wl + 2, 8)

    kernel, _ = _make_kernel(H, W, Cin, Cp_h, Cp_l, Wp_h, Wp_l, RS_h, RS_l,
                             pre_pool, use_im2col, op_cast_dtype)

    # Explicit VMEM budget (double-buffered blocks + halo scratch + strip temps),
    # kept under v7x's 64 MiB physical ceiling.
    w_item = jnp.dtype(w_dtype).itemsize
    out_item = jnp.dtype(out_dtype).itemsize
    k_dim = (9 * Cin) if use_im2col else Cin
    strip_tmp = max(RS_h * Wh * (2 * k_dim * in_item + Cp_h * 4),
                    RS_l * Wl * (2 * k_dim * in_item + Cp_l * 4))
    est = (2 * H * W * Cin * in_item
           + 2 * 9 * Cin * (Cp_h + Cp_l) * w_item
           + 2 * (Hh * Wh * Cp_h + Hl * Wl * Cp_l) * out_item
           + ((Hh + 2) * Wp_h + (Hl + 2) * Wp_l) * Cin * in_item
           + 2 * strip_tmp)
    vmem_limit = int(min(max(2 * est, 32 << 20), 64 << 20))

    flops = 2 * N * 9 * Cin * (Hh * Wh * Cp_h + Hl * Wl * Cp_l)
    bytes_accessed = int(x.size * x.dtype.itemsize
                         + w_h.size * w_h.dtype.itemsize
                         + w_l.size * w_l.dtype.itemsize
                         + N * (Hh * Wh * Cp_h + Hl * Wl * Cp_l) * out_item)

    # TODO(synk): for v7x megacore at N==1, add an output-row grid axis marked
    # "parallel" (2-row halo via Element indexing) so both TensorCores have work;
    # the current row strips are an in-kernel serial loop.
    out_h, out_l = pl.pallas_call(
        kernel,
        out_shape=(jax.ShapeDtypeStruct((N, Hh, Wh, Cp_h), out_dtype),
                   jax.ShapeDtypeStruct((N, Hl, Wl, Cp_l), out_dtype)),
        grid_spec=pltpu.PrefetchScalarGridSpec(
            num_scalar_prefetch=0,
            grid=(N,),
            in_specs=[
                pl.BlockSpec((1, H, W, Cin), lambda n: (n, 0, 0, 0)),
                pl.BlockSpec((9, Cin, Cp_h), lambda n: (0, 0, 0)),
                pl.BlockSpec((9, Cin, Cp_l), lambda n: (0, 0, 0)),
            ],
            out_specs=(
                pl.BlockSpec((1, Hh, Wh, Cp_h), lambda n: (n, 0, 0, 0)),
                pl.BlockSpec((1, Hl, Wl, Cp_l), lambda n: (n, 0, 0, 0)),
            ),
            scratch_shapes=[
                pltpu.VMEM((Hh + 2, Wp_h, Cin), compute_dtype),   # halo, high branch
                pltpu.VMEM((Hl + 2, Wp_l, Cin), compute_dtype),   # halo, low branch
            ],
        ),
        compiler_params=pltpu.CompilerParams(
            dimension_semantics=("parallel",),
            vmem_limit_bytes=vmem_limit),
        cost_estimate=pl.CostEstimate(flops=flops, transcendentals=0,
                                      bytes_accessed=bytes_accessed),
    )(x, w_h, w_l)

    # Strip the Cout padding, NHWC -> NCHW (module API is PyTorch-style NCHW).
    out_h = out_h[..., :C_h]
    out_l = out_l[..., :C_l]
    return (jnp.transpose(out_h, (0, 3, 1, 2)),
            jnp.transpose(out_l, (0, 3, 1, 2)))


# ----------------------------- pure-JAX reference -----------------------------

def _ref_forward(x_nchw, w_h2h_oihw, w_h2l_oihw, stride=1):
    def conv(x, w):
        return lax.conv_general_dilated(
            x, w, window_strides=(1, 1), padding=((1, 1), (1, 1)),
            dimension_numbers=("NCHW", "OIHW", "NCHW"),
            precision=lax.Precision.HIGHEST)

    def pool(x):
        n, c, h, w = x.shape
        return x.reshape(n, c, h // 2, 2, w // 2, 2).mean(axis=(3, 5))

    x = pool(x_nchw) if stride == 2 else x_nchw
    return conv(x, w_h2h_oihw), conv(pool(x), w_h2l_oihw)


# ----------------------------- main -----------------------------

if __name__ == "__main__":
    key = jax.random.PRNGKey(0)
    alpha = 0.5

    # ---------- config 1: small channels (per-tap accumulate path) ----------
    N, IN_C, OUT_C, H, W = 2, 4, 8, 16, 16
    c_l = int(alpha * OUT_C)          # h2l output channels
    c_h = OUT_C - c_l                 # h2h output channels

    k_x, k_wh, k_wl, k_x2, k_wh2, k_wl2 = jax.random.split(key, 6)
    x = jax.random.normal(k_x, (N, IN_C, H, W), jnp.float32)
    # PyTorch Conv2d weights are (Cout, Cin, kH, kW); derive the (kH, kW, Cin, Cout)
    # layout used by the Pallas wrapper from the same tensor.
    w_h2h_oihw = jax.random.normal(k_wh, (c_h, IN_C, 3, 3), jnp.float32) * 0.1
    w_h2l_oihw = jax.random.normal(k_wl, (c_l, IN_C, 3, 3), jnp.float32) * 0.1
    w_h2h_hwio = jnp.transpose(w_h2h_oihw, (2, 3, 1, 0))
    w_h2l_hwio = jnp.transpose(w_h2l_oihw, (2, 3, 1, 0))

    ref_h, ref_l = _ref_forward(x, w_h2h_oihw, w_h2l_oihw, stride=1)

    # stride = 1, f32 (strict check)
    fwd = jax.jit(functools.partial(first_octave_conv_forward, stride=1))
    out_h, out_l = fwd(x, w_h2h_hwio, w_h2l_hwio)
    jax.block_until_ready((out_h, out_l))
    np.testing.assert_allclose(np.asarray(out_h), np.asarray(ref_h), rtol=1e-4, atol=1e-4)
    np.testing.assert_allclose(np.asarray(out_l), np.asarray(ref_l), rtol=1e-4, atol=1e-4)

    # stride = 2 path (extra 2x2 pre-pool fused into the same kernel)
    fwd2 = jax.jit(functools.partial(first_octave_conv_forward, stride=2))
    out_h2, out_l2 = fwd2(x, w_h2h_hwio, w_h2l_hwio)
    jax.block_until_ready((out_h2, out_l2))
    ref_h2, ref_l2 = _ref_forward(x, w_h2h_oihw, w_h2l_oihw, stride=2)
    np.testing.assert_allclose(np.asarray(out_h2), np.asarray(ref_h2), rtol=1e-4, atol=1e-4)
    np.testing.assert_allclose(np.asarray(out_l2), np.asarray(ref_l2), rtol=1e-4, atol=1e-4)

    # forced row strips (exercises the bounded-VMEM strip loop used at large H/W)
    fwd_rs = jax.jit(functools.partial(first_octave_conv_forward, stride=1, row_strip=8))
    out_hr, out_lr = fwd_rs(x, w_h2h_hwio, w_h2l_hwio)
    jax.block_until_ready((out_hr, out_lr))
    np.testing.assert_allclose(np.asarray(out_hr), np.asarray(ref_h), rtol=1e-4, atol=1e-4)
    np.testing.assert_allclose(np.asarray(out_lr), np.asarray(ref_l), rtol=1e-4, atol=1e-4)

    # bf16 MXU, early cast (v6e/v7x) and late cast (v5e); f32 accumulation both ways.
    fwd_bf16e = jax.jit(functools.partial(first_octave_conv_forward, stride=1,
                                          mxu_dtype=jnp.bfloat16, cast_early=True))
    bh, bl = fwd_bf16e(x, w_h2h_hwio, w_h2l_hwio)
    jax.block_until_ready((bh, bl))
    np.testing.assert_allclose(np.asarray(bh), np.asarray(ref_h), rtol=5e-2, atol=5e-2)
    np.testing.assert_allclose(np.asarray(bl), np.asarray(ref_l), rtol=5e-2, atol=5e-2)

    fwd_bf16l = jax.jit(functools.partial(first_octave_conv_forward, stride=1,
                                          mxu_dtype=jnp.bfloat16, cast_early=False))
    bh2, bl2 = fwd_bf16l(x, w_h2h_hwio, w_h2l_hwio)
    jax.block_until_ready((bh2, bl2))
    np.testing.assert_allclose(np.asarray(bh2), np.asarray(ref_h), rtol=5e-2, atol=5e-2)
    np.testing.assert_allclose(np.asarray(bl2), np.asarray(ref_l), rtol=5e-2, atol=5e-2)

    # ---------- config 2: lane-aligned channels (fused im2col path, Cin=128) ----------
    N2, IN_C2, OUT_C2, H2, W2 = 1, 128, 128, 16, 16
    c_l2 = int(alpha * OUT_C2)
    c_h2 = OUT_C2 - c_l2
    x2 = jax.random.normal(k_x2, (N2, IN_C2, H2, W2), jnp.float32)
    w_h2h2_oihw = jax.random.normal(k_wh2, (c_h2, IN_C2, 3, 3), jnp.float32) * 0.05
    w_h2l2_oihw = jax.random.normal(k_wl2, (c_l2, IN_C2, 3, 3), jnp.float32) * 0.05
    out_h3, out_l3 = jax.jit(functools.partial(first_octave_conv_forward, stride=1))(
        x2, jnp.transpose(w_h2h2_oihw, (2, 3, 1, 0)),
        jnp.transpose(w_h2l2_oihw, (2, 3, 1, 0)))
    jax.block_until_ready((out_h3, out_l3))
    ref_h3, ref_l3 = _ref_forward(x2, w_h2h2_oihw, w_h2l2_oihw, stride=1)
    np.testing.assert_allclose(np.asarray(out_h3), np.asarray(ref_h3), rtol=1e-2, atol=1e-2)
    np.testing.assert_allclose(np.asarray(out_l3), np.asarray(ref_l3), rtol=1e-2, atol=1e-2)

    print("KERNEL_OK")
</pallas_src>

<mosaic_0001>
module attributes {stable_mosaic.version = 11 : i64} {
  func.func @kernel(%arg0: i32, %arg1: memref<1x16x16x4xf32, #tpu.memory_space<vmem>>, %arg2: memref<9x4x128xf32, #tpu.memory_space<vmem>>, %arg3: memref<9x4x128xf32, #tpu.memory_space<vmem>>, %arg4: memref<1x16x16x128xf32, #tpu.memory_space<vmem>>, %arg5: memref<1x8x8x128xf32, #tpu.memory_space<vmem>>, %arg6: memref<18x24x4xf32, #tpu.memory_space<vmem>>, %arg7: memref<10x16x4xf32, #tpu.memory_space<vmem>>) attributes {dimension_semantics = [#tpu.dimension_semantics<parallel>], iteration_bounds = array<i64: 2>, scalar_prefetch = 0 : i64, scratch_operands = 2 : i64, tpu.core_type = #tpu.core_type<tc>, window_params = [{transform_indices = @transform_0, window_bounds = array<i64: 1, 16, 16, 4>}, {pipeline_mode = #tpu.pipeline_mode<synchronous>, transform_indices = @transform_1, window_bounds = array<i64: 9, 4, 128>}, {pipeline_mode = #tpu.pipeline_mode<synchronous>, transform_indices = @transform_2, window_bounds = array<i64: 9, 4, 128>}, {transform_indices = @transform_3, window_bounds = array<i64: 1, 16, 16, 128>}, {transform_indices = @transform_4, window_bounds = array<i64: 1, 8, 8, 128>}]} {
    %c0 = arith.constant 0 : index
    %c0_0 = arith.constant 0 : index
    %c0_1 = arith.constant 0 : index
    %c0_2 = arith.constant 0 : index
    %0 = vector.load %arg1[%c0, %c0_0, %c0_1, %c0_2] : memref<1x16x16x4xf32, #tpu.memory_space<vmem>>, vector<1x16x16x4xf32>
    %1 = vector.shape_cast %0 : vector<1x16x16x4xf32> to vector<16x16x4xf32>
    %cst = arith.constant 0.000000e+00 : f32
    %2 = vector.broadcast %cst : f32 to vector<1x24x4xf32>
    %c0_3 = arith.constant 0 : index
    %c0_4 = arith.constant 0 : index
    %c0_5 = arith.constant 0 : index
    %3 = vector.load %arg6[%c0_3, %c0_4, %c0_5] : memref<18x24x4xf32, #tpu.memory_space<vmem>>, vector<1x24x4xf32>
    tpu.vector_store %arg6[%c0_3, %c0_4, %c0_5], %2 {strides = array<i32>} : memref<18x24x4xf32, #tpu.memory_space<vmem>>, vector<1x24x4xf32>,
    %cst_6 = arith.constant 0.000000e+00 : f32
    %4 = vector.broadcast %cst_6 : f32 to vector<1x24x4xf32>
    %c17 = arith.constant 17 : index
    %c0_7 = arith.constant 0 : index
    %c0_8 = arith.constant 0 : index
    %5 = vector.load %arg6[%c17, %c0_7, %c0_8] : memref<18x24x4xf32, #tpu.memory_space<vmem>>, vector<1x24x4xf32>
    tpu.vector_store %arg6[%c17, %c0_7, %c0_8], %4 {strides = array<i32>} : memref<18x24x4xf32, #tpu.memory_space<vmem>>, vector<1x24x4xf32>,
    %cst_9 = arith.constant 0.000000e+00 : f32
    %6 = vector.broadcast %cst_9 : f32 to vector<18x1x4xf32>
    %c0_10 = arith.constant 0 : index
    %c0_11 = arith.constant 0 : index
    %c0_12 = arith.constant 0 : index
    %7 = vector.load %arg6[%c0_10, %c0_11, %c0_12] : memref<18x24x4xf32, #tpu.memory_space<vmem>>, vector<18x1x4xf32>
    tpu.vector_store %arg6[%c0_10, %c0_11, %c0_12], %6 {strides = array<i32>} : memref<18x24x4xf32, #tpu.memory_space<vmem>>, vector<18x1x4xf32>,
    %cst_13 = arith.constant 0.000000e+00 : f32
    %8 = vector.broadcast %cst_13 : f32 to vector<18x7x4xf32>
    %c0_14 = arith.constant 0 : index
    %c17_15 = arith.constant 17 : index
    %c0_16 = arith.constant 0 : index
    %9 = vector.load %arg6[%c0_14, %c17_15, %c0_16] : memref<18x24x4xf32, #tpu.memory_space<vmem>>, vector<18x7x4xf32>
    tpu.vector_store %arg6[%c0_14, %c17_15, %c0_16], %8 {strides = array<i32>} : memref<18x24x4xf32, #tpu.memory_space<vmem>>, vector<18x7x4xf32>,
    %c1 = arith.constant 1 : index
    %c1_17 = arith.constant 1 : index
    %c0_18 = arith.constant 0 : index
    %10 = vector.load %arg6[%c1, %c1_17, %c0_18] : memref<18x24x4xf32, #tpu.memory_space<vmem>>, vector<16x16x4xf32>
    tpu.vector_store %arg6[%c1, %c1_17, %c0_18], %1 {strides = array<i32>} : memref<18x24x4xf32, #tpu.memory_space<vmem>>, vector<16x16x4xf32>,
    %c0_19 = arith.constant 0 : index
    %c0_20 = arith.constant 0 : index
    %c0_21 = arith.constant 0 : index
    %11 = vector.load %arg2[%c0_19, %c0_20, %c0_21] : memref<9x4x128xf32, #tpu.memory_space<vmem>>, vector<1x4x128xf32>
    %12 = vector.shape_cast %11 : vector<1x4x128xf32> to vector<4x128xf32>
    %c1_22 = arith.constant 1 : index
    %c0_23 = arith.constant 0 : index
    %c0_24 = arith.constant 0 : index
    %13 = vector.load %arg2[%c1_22, %c0_23, %c0_24] : memref<9x4x128xf32, #tpu.memory_space<vmem>>, vector<1x4x128xf32>
    %14 = vector.shape_cast %13 : vector<1x4x128xf32> to vector<4x128xf32>
    %c2 = arith.constant 2 : index
    %c0_25 = arith.constant 0 : index
    %c0_26 = arith.constant 0 : index
    %15 = vector.load %arg2[%c2, %c0_25, %c0_26] : memref<9x4x128xf32, #tpu.memory_space<vmem>>, vector<1x4x128xf32>
    %16 = vector.shape_cast %15 : vector<1x4x128xf32> to vector<4x128xf32>
    %c3 = arith.constant 3 : index
    %c0_27 = arith.constant 0 : index
    %c0_28 = arith.constant 0 : index
    %17 = vector.load %arg2[%c3, %c0_27, %c0_28] : memref<9x4x128xf32, #tpu.memory_space<vmem>>, vector<1x4x128xf32>
    %18 = vector.shape_cast %17 : vector<1x4x128xf32> to vector<4x128xf32>
    %c4 = arith.constant 4 : index
    %c0_29 = arith.constant 0 : index
    %c0_30 = arith.constant 0 : index
    %19 = vector.load %arg2[%c4, %c0_29, %c0_30] : memref<9x4x128xf32, #tpu.memory_space<vmem>>, vector<1x4x128xf32>
    %20 = vector.shape_cast %19 : vector<1x4x128xf32> to vector<4x128xf32>
    %c5 = arith.constant 5 : index
    %c0_31 = arith.constant 0 : index
    %c0_32 = arith.constant 0 : index
    %21 = vector.load %arg2[%c5, %c0_31, %c0_32] : memref<9x4x128xf32, #tpu.memory_space<vmem>>, vector<1x4x128xf32>
    %22 = vector.shape_cast %21 : vector<1x4x128xf32> to vector<4x128xf32>
    %c6 = arith.constant 6 : index
    %c0_33 = arith.constant 0 : index
    %c0_34 = arith.constant 0 : index
    %23 = vector.load %arg2[%c6, %c0_33, %c0_34] : memref<9x4x128xf32, #tpu.memory_space<vmem>>, vector<1x4x128xf32>
    %24 = vector.shape_cast %23 : vector<1x4x128xf32> to vector<4x128xf32>
    %c7 = arith.constant 7 : index
    %c0_35 = arith.constant 0 : index
    %c0_36 = arith.constant 0 : index
    %25 = vector.load %arg2[%c7, %c0_35, %c0_36] : memref<9x4x128xf32, #tpu.memory_space<vmem>>, vector<1x4x128xf32>
    %26 = vector.shape_cast %25 : vector<1x4x128xf32> to vector<4x128xf32>
    %c8 = arith.constant 8 : index
    %c0_37 = arith.constant 0 : index
    %c0_38 = arith.constant 0 : index
    %27 = vector.load %arg2[%c8, %c0_37, %c0_38] : memref<9x4x128xf32, #tpu.memory_space<vmem>>, vector<1x4x128xf32>
    %28 = vector.shape_cast %27 : vector<1x4x128xf32> to vector<4x128xf32>
    %c0_39 = arith.constant 0 : index
    %c0_40 = arith.constant 0 : index
    %c0_41 = arith.constant 0 : index
    %29 = vector.load %arg6[%c0_39, %c0_40, %c0_41] : memref<18x24x4xf32, #tpu.memory_space<vmem>>, vector<18x24x4xf32>
    %cst_42 = arith.constant 0.000000e+00 : f32
    %30 = vector.broadcast %cst_42 : f32 to vector<256x128xf32>
    %31 = vector.extract_strided_slice %29 {offsets = [0, 0, 0], sizes = [16, 16, 4], strides = [1, 1, 1]} : vector<18x24x4xf32> to vector<16x16x4xf32>
    %32 = vector.shape_cast %31 : vector<16x16x4xf32> to vector<256x4xf32>
    %cst_43 = arith.constant dense<0.000000e+00> : vector<256x128xf32>
    %33 = tpu.matmul %32, %12, %cst_43 {dimension_numbers = #tpu.dot_dimension_numbers<[1], [0], [0], [1], [0, 0, 1, 1], [], []>} : vector<256x4xf32>, vector<4x128xf32>, vector<256x128xf32> -> vector<256x128xf32>
    %34 = arith.addf %30, %33 : vector<256x128xf32>
    %35 = vector.extract_strided_slice %29 {offsets = [0, 1, 0], sizes = [16, 16, 4], strides = [1, 1, 1]} : vector<18x24x4xf32> to vector<16x16x4xf32>
    %36 = vector.shape_cast %35 : vector<16x16x4xf32> to vector<256x4xf32>
    %cst_44 = arith.constant dense<0.000000e+00> : vector<256x128xf32>
    %37 = tpu.matmul %36, %14, %cst_44 {dimension_numbers = #tpu.dot_dimension_numbers<[1], [0], [0], [1], [0, 0, 1, 1], [], []>} : vector<256x4xf32>, vector<4x128xf32>, vector<256x128xf32> -> vector<256x128xf32>
    %38 = arith.addf %34, %37 : vector<256x128xf32>
    %39 = vector.extract_strided_slice %29 {offsets = [0, 2, 0], sizes = [16, 16, 4], strides = [1, 1, 1]} : vector<18x24x4xf32> to vector<16x16x4xf32>
    %40 = vector.shape_cast %39 : vector<16x16x4xf32> to vector<256x4xf32>
    %cst_45 = arith.constant dense<0.000000e+00> : vector<256x128xf32>
    %41 = tpu.matmul %40, %16, %cst_45 {dimension_numbers = #tpu.dot_dimension_numbers<[1], [0], [0], [1], [0, 0, 1, 1], [], []>} : vector<256x4xf32>, vector<4x128xf32>, vector<256x128xf32> -> vector<256x128xf32>
    %42 = arith.addf %38, %41 : vector<256x128xf32>
    %43 = vector.extract_strided_slice %29 {offsets = [1, 0, 0], sizes = [16, 16, 4], strides = [1, 1, 1]} : vector<18x24x4xf32> to vector<16x16x4xf32>
    %44 = vector.shape_cast %43 : vector<16x16x4xf32> to vector<256x4xf32>
    %cst_46 = arith.constant dense<0.000000e+00> : vector<256x128xf32>
    %45 = tpu.matmul %44, %18, %cst_46 {dimension_numbers = #tpu.dot_dimension_numbers<[1], [0], [0], [1], [0, 0, 1, 1], [], []>} : vector<256x4xf32>, vector<4x128xf32>, vector<256x128xf32> -> vector<256x128xf32>
    %46 = arith.addf %42, %45 : vector<256x128xf32>
    %47 = vector.extract_strided_slice %29 {offsets = [1, 1, 0], sizes = [16, 16, 4], strides = [1, 1, 1]} : vector<18x24x4xf32> to vector<16x16x4xf32>
    %48 = vector.shape_cast %47 : vector<16x16x4xf32> to vector<256x4xf32>
    %cst_47 = arith.constant dense<0.000000e+00> : vector<256x128xf32>
    %49 = tpu.matmul %48, %20, %cst_47 {dimension_numbers = #tpu.dot_dimension_numbers<[1], [0], [0], [1], [0, 0, 1, 1], [], []>} : vector<256x4xf32>, vector<4x128xf32>, vector<256x128xf32> -> vector<256x128xf32>
    %50 = arith.addf %46, %49 : vector<256x128xf32>
    %51 = vector.extract_strided_slice %29 {offsets = [1, 2, 0], sizes = [16, 16, 4], strides = [1, 1, 1]} : vector<18x24x4xf32> to vector<16x16x4xf32>
    %52 = vector.shape_cast %51 : vector<16x16x4xf32> to vector<256x4xf32>
    %cst_48 = arith.constant dense<0.000000e+00> : vector<256x128xf32>
    %53 = tpu.matmul %52, %22, %cst_48 {dimension_numbers = #tpu.dot_dimension_numbers<[1], [0], [0], [1], [0, 0, 1, 1], [], []>} : vector<256x4xf32>, vector<4x128xf32>, vector<256x128xf32> -> vector<256x128xf32>
    %54 = arith.addf %50, %53 : vector<256x128xf32>
    %55 = vector.extract_strided_slice %29 {offsets = [2, 0, 0], sizes = [16, 16, 4], strides = [1, 1, 1]} : vector<18x24x4xf32> to vector<16x16x4xf32>
    %56 = vector.shape_cast %55 : vector<16x16x4xf32> to vector<256x4xf32>
    %cst_49 = arith.constant dense<0.000000e+00> : vector<256x128xf32>
    %57 = tpu.matmul %56, %24, %cst_49 {dimension_numbers = #tpu.dot_dimension_numbers<[1], [0], [0], [1], [0, 0, 1, 1], [], []>} : vector<256x4xf32>, vector<4x128xf32>, vector<256x128xf32> -> vector<256x128xf32>
    %58 = arith.addf %54, %57 : vector<256x128xf32>
    %59 = vector.extract_strided_slice %29 {offsets = [2, 1, 0], sizes = [16, 16, 4], strides = [1, 1, 1]} : vector<18x24x4xf32> to vector<16x16x4xf32>
    %60 = vector.shape_cast %59 : vector<16x16x4xf32> to vector<256x4xf32>
    %cst_50 = arith.constant dense<0.000000e+00> : vector<256x128xf32>
    %61 = tpu.matmul %60, %26, %cst_50 {dimension_numbers = #tpu.dot_dimension_numbers<[1], [0], [0], [1], [0, 0, 1, 1], [], []>} : vector<256x4xf32>, vector<4x128xf32>, vector<256x128xf32> -> vector<256x128xf32>
    %62 = arith.addf %58, %61 : vector<256x128xf32>
    %63 = vector.extract_strided_slice %29 {offsets = [2, 2, 0], sizes = [16, 16, 4], strides = [1, 1, 1]} : vector<18x24x4xf32> to vector<16x16x4xf32>
    %64 = vector.shape_cast %63 : vector<16x16x4xf32> to vector<256x4xf32>
    %cst_51 = arith.constant dense<0.000000e+00> : vector<256x128xf32>
    %65 = tpu.matmul %64, %28, %cst_51 {dimension_numbers = #tpu.dot_dimension_numbers<[1], [0], [0], [1], [0, 0, 1, 1], [], []>} : vector<256x4xf32>, vector<4x128xf32>, vector<256x128xf32> -> vector<256x128xf32>
    %66 = arith.addf %62, %65 : vector<256x128xf32>
    %67 = vector.shape_cast %66 : vector<256x128xf32> to vector<16x16x128xf32>
    %c0_52 = arith.constant 0 : index
    %c0_53 = arith.constant 0 : index
    %c0_54 = arith.constant 0 : index
    %c0_55 = arith.constant 0 : index
    %68 = vector.load %arg4[%c0_52, %c0_53, %c0_54, %c0_55] : memref<1x16x16x128xf32, #tpu.memory_space<vmem>>, vector<1x16x16x128xf32>
    %69 = vector.shape_cast %68 : vector<1x16x16x128xf32> to vector<16x16x128xf32>
    %70 = vector.shape_cast %67 : vector<16x16x128xf32> to vector<1x16x16x128xf32>
    tpu.vector_store %arg4[%c0_52, %c0_53, %c0_54, %c0_55], %70 {strides = array<i32>} : memref<1x16x16x128xf32, #tpu.memory_space<vmem>>, vector<1x16x16x128xf32>,
    %71 = vector.shape_cast %1 : vector<16x16x4xf32> to vector<16x8x2x4xf32>
    %72 = vector.extract_strided_slice %71 {offsets = [0, 0, 0, 0], sizes = [16, 8, 1, 4], strides = [1, 1, 1, 1]} : vector<16x8x2x4xf32> to vector<16x8x1x4xf32>
    %73 = vector.shape_cast %72 : vector<16x8x1x4xf32> to vector<16x8x4xf32>
    %74 = vector.extract_strided_slice %71 {offsets = [0, 0, 1, 0], sizes = [16, 8, 1, 4], strides = [1, 1, 1, 1]} : vector<16x8x2x4xf32> to vector<16x8x1x4xf32>
    %75 = vector.shape_cast %74 : vector<16x8x1x4xf32> to vector<16x8x4xf32>
    %76 = arith.addf %73, %75 : vector<16x8x4xf32>
    %77 = vector.shape_cast %76 : vector<16x8x4xf32> to vector<8x2x8x4xf32>
    %78 = vector.extract_strided_slice %77 {offsets = [0, 0, 0, 0], sizes = [8, 1, 8, 4], strides = [1, 1, 1, 1]} : vector<8x2x8x4xf32> to vector<8x1x8x4xf32>
    %79 = vector.shape_cast %78 : vector<8x1x8x4xf32> to vector<8x8x4xf32>
    %80 = vector.extract_strided_slice %77 {offsets = [0, 1, 0, 0], sizes = [8, 1, 8, 4], strides = [1, 1, 1, 1]} : vector<8x2x8x4xf32> to vector<8x1x8x4xf32>
    %81 = vector.shape_cast %80 : vector<8x1x8x4xf32> to vector<8x8x4xf32>
    %82 = arith.addf %79, %81 : vector<8x8x4xf32>
    %cst_56 = arith.constant 2.500000e-01 : f32
    %83 = vector.broadcast %cst_56 : f32 to vector<8x8x4xf32>
    %84 = arith.mulf %82, %83 : vector<8x8x4xf32>
    %cst_57 = arith.constant 0.000000e+00 : f32
    %85 = vector.broadcast %cst_57 : f32 to vector<1x16x4xf32>
    %c0_58 = arith.constant 0 : index
    %c0_59 = arith.constant 0 : index
    %c0_60 = arith.constant 0 : index
    %86 = vector.load %arg7[%c0_58, %c0_59, %c0_60] : memref<10x16x4xf32, #tpu.memory_space<vmem>>, vector<1x16x4xf32>
    tpu.vector_store %arg7[%c0_58, %c0_59, %c0_60], %85 {strides = array<i32>} : memref<10x16x4xf32, #tpu.memory_space<vmem>>, vector<1x16x4xf32>,
    %cst_61 = arith.constant 0.000000e+00 : f32
    %87 = vector.broadcast %cst_61 : f32 to vector<1x16x4xf32>
    %c9 = arith.constant 9 : index
    %c0_62 = arith.constant 0 : index
    %c0_63 = arith.constant 0 : index
    %88 = vector.load %arg7[%c9, %c0_62, %c0_63] : memref<10x16x4xf32, #tpu.memory_space<vmem>>, vector<1x16x4xf32>
    tpu.vector_store %arg7[%c9, %c0_62, %c0_63], %87 {strides = array<i32>} : memref<10x16x4xf32, #tpu.memory_space<vmem>>, vector<1x16x4xf32>,
    %cst_64 = arith.constant 0.000000e+00 : f32
    %89 = vector.broadcast %cst_64 : f32 to vector<10x1x4xf32>
    %c0_65 = arith.constant 0 : index
    %c0_66 = arith.constant 0 : index
    %c0_67 = arith.constant 0 : index
    %90 = vector.load %arg7[%c0_65, %c0_66, %c0_67] : memref<10x16x4xf32, #tpu.memory_space<vmem>>, vector<10x1x4xf32>
    tpu.vector_store %arg7[%c0_65, %c0_66, %c0_67], %89 {strides = array<i32>} : memref<10x16x4xf32, #tpu.memory_space<vmem>>, vector<10x1x4xf32>,
    %cst_68 = arith.constant 0.000000e+00 : f32
    %91 = vector.broadcast %cst_68 : f32 to vector<10x7x4xf32>
    %c0_69 = arith.constant 0 : index
    %c9_70 = arith.constant 9 : index
    %c0_71 = arith.constant 0 : index
    %92 = vector.load %arg7[%c0_69, %c9_70, %c0_71] : memref<10x16x4xf32, #tpu.memory_space<vmem>>, vector<10x7x4xf32>
    tpu.vector_store %arg7[%c0_69, %c9_70, %c0_71], %91 {strides = array<i32>} : memref<10x16x4xf32, #tpu.memory_space<vmem>>, vector<10x7x4xf32>,
    %c1_72 = arith.constant 1 : index
    %c1_73 = arith.constant 1 : index
    %c0_74 = arith.constant 0 : index
    %93 = vector.load %arg7[%c1_72, %c1_73, %c0_74] : memref<10x16x4xf32, #tpu.memory_space<vmem>>, vector<8x8x4xf32>
    tpu.vector_store %arg7[%c1_72, %c1_73, %c0_74], %84 {strides = array<i32>} : memref<10x16x4xf32, #tpu.memory_space<vmem>>, vector<8x8x4xf32>,
    %c0_75 = arith.constant 0 : index
    %c0_76 = arith.constant 0 : index
    %c0_77 = arith.constant 0 : index
    %94 = vector.load %arg3[%c0_75, %c0_76, %c0_77] : memref<9x4x128xf32, #tpu.memory_space<vmem>>, vector<1x4x128xf32>
    %95 = vector.shape_cast %94 : vector<1x4x128xf32> to vector<4x128xf32>
    %c1_78 = arith.constant 1 : index
    %c0_79 = arith.constant 0 : index
    %c0_80 = arith.constant 0 : index
    %96 = vector.load %arg3[%c1_78, %c0_79, %c0_80] : memref<9x4x128xf32, #tpu.memory_space<vmem>>, vector<1x4x128xf32>
    %97 = vector.shape_cast %96 : vector<1x4x128xf32> to vector<4x128xf32>
    %c2_81 = arith.constant 2 : index
    %c0_82 = arith.constant 0 : index
    %c0_83 = arith.constant 0 : index
    %98 = vector.load %arg3[%c2_81, %c0_82, %c0_83] : memref<9x4x128xf32, #tpu.memory_space<vmem>>, vector<1x4x128xf32>
    %99 = vector.shape_cast %98 : vector<1x4x128xf32> to vector<4x128xf32>
    %c3_84 = arith.constant 3 : index
    %c0_85 = arith.constant 0 : index
    %c0_86 = arith.constant 0 : index
    %100 = vector.load %arg3[%c3_84, %c0_85, %c0_86] : memref<9x4x128xf32, #tpu.memory_space<vmem>>, vector<1x4x128xf32>
    %101 = vector.shape_cast %100 : vector<1x4x128xf32> to vector<4x128xf32>
    %c4_87 = arith.constant 4 : index
    %c0_88 = arith.constant 0 : index
    %c0_89 = arith.constant 0 : index
    %102 = vector.load %arg3[%c4_87, %c0_88, %c0_89] : memref<9x4x128xf32, #tpu.memory_space<vmem>>, vector<1x4x128xf32>
    %103 = vector.shape_cast %102 : vector<1x4x128xf32> to vector<4x128xf32>
    %c5_90 = arith.constant 5 : index
    %c0_91 = arith.constant 0 : index
    %c0_92 = arith.constant 0 : index
    %104 = vector.load %arg3[%c5_90, %c0_91, %c0_92] : memref<9x4x128xf32, #tpu.memory_space<vmem>>, vector<1x4x128xf32>
    %105 = vector.shape_cast %104 : vector<1x4x128xf32> to vector<4x128xf32>
    %c6_93 = arith.constant 6 : index
    %c0_94 = arith.constant 0 : index
    %c0_95 = arith.constant 0 : index
    %106 = vector.load %arg3[%c6_93, %c0_94, %c0_95] : memref<9x4x128xf32, #tpu.memory_space<vmem>>, vector<1x4x128xf32>
    %107 = vector.shape_cast %106 : vector<1x4x128xf32> to vector<4x128xf32>
    %c7_96 = arith.constant 7 : index
    %c0_97 = arith.constant 0 : index
    %c0_98 = arith.constant 0 : index
    %108 = vector.load %arg3[%c7_96, %c0_97, %c0_98] : memref<9x4x128xf32, #tpu.memory_space<vmem>>, vector<1x4x128xf32>
    %109 = vector.shape_cast %108 : vector<1x4x128xf32> to vector<4x128xf32>
    %c8_99 = arith.constant 8 : index
    %c0_100 = arith.constant 0 : index
    %c0_101 = arith.constant 0 : index
    %110 = vector.load %arg3[%c8_99, %c0_100, %c0_101] : memref<9x4x128xf32, #tpu.memory_space<vmem>>, vector<1x4x128xf32>
    %111 = vector.shape_cast %110 : vector<1x4x128xf32> to vector<4x128xf32>
    %c0_102 = arith.constant 0 : index
    %c0_103 = arith.constant 0 : index
    %c0_104 = arith.constant 0 : index
    %112 = vector.load %arg7[%c0_102, %c0_103, %c0_104] : memref<10x16x4xf32, #tpu.memory_space<vmem>>, vector<10x16x4xf32>
    %cst_105 = arith.constant 0.000000e+00 : f32
    %113 = vector.broadcast %cst_105 : f32 to vector<64x128xf32>
    %114 = vector.extract_strided_slice %112 {offsets = [0, 0, 0], sizes = [8, 8, 4], strides = [1, 1, 1]} : vector<10x16x4xf32> to vector<8x8x4xf32>
    %115 = vector.shape_cast %114 : vector<8x8x4xf32> to vector<64x4xf32>
    %cst_106 = arith.constant dense<0.000000e+00> : vector<64x128xf32>
    %116 = tpu.matmul %115, %95, %cst_106 {dimension_numbers = #tpu.dot_dimension_numbers<[1], [0], [0], [1], [0, 0, 1, 1], [], []>} : vector<64x4xf32>, vector<4x128xf32>, vector<64x128xf32> -> vector<64x128xf32>
    %117 = arith.addf %113, %116 : vector<64x128xf32>
    %118 = vector.extract_strided_slice %112 {offsets = [0, 1, 0], sizes = [8, 8, 4], strides = [1, 1, 1]} : vector<10x16x4xf32> to vector<8x8x4xf32>
    %119 = vector.shape_cast %118 : vector<8x8x4xf32> to vector<64x4xf32>
    %cst_107 = arith.constant dense<0.000000e+00> : vector<64x128xf32>
    %120 = tpu.matmul %119, %97, %cst_107 {dimension_numbers = #tpu.dot_dimension_numbers<[1], [0], [0], [1], [0, 0, 1, 1], [], []>} : vector<64x4xf32>, vector<4x128xf32>, vector<64x128xf32> -> vector<64x128xf32>
    %121 = arith.addf %117, %120 : vector<64x128xf32>
    %122 = vector.extract_strided_slice %112 {offsets = [0, 2, 0], sizes = [8, 8, 4], strides = [1, 1, 1]} : vector<10x16x4xf32> to vector<8x8x4xf32>
    %123 = vector.shape_cast %122 : vector<8x8x4xf32> to vector<64x4xf32>
    %cst_108 = arith.constant dense<0.000000e+00> : vector<64x128xf32>
    %124 = tpu.matmul %123, %99, %cst_108 {dimension_numbers = #tpu.dot_dimension_numbers<[1], [0], [0], [1], [0, 0, 1, 1], [], []>} : vector<64x4xf32>, vector<4x128xf32>, vector<64x128xf32> -> vector<64x128xf32>
    %125 = arith.addf %121, %124 : vector<64x128xf32>
    %126 = vector.extract_strided_slice %112 {offsets = [1, 0, 0], sizes = [8, 8, 4], strides = [1, 1, 1]} : vector<10x16x4xf32> to vector<8x8x4xf32>
    %127 = vector.shape_cast %126 : vector<8x8x4xf32> to vector<64x4xf32>
    %cst_109 = arith.constant dense<0.000000e+00> : vector<64x128xf32>
    %128 = tpu.matmul %127, %101, %cst_109 {dimension_numbers = #tpu.dot_dimension_numbers<[1], [0], [0], [1], [0, 0, 1, 1], [], []>} : vector<64x4xf32>, vector<4x128xf32>, vector<64x128xf32> -> vector<64x128xf32>
    %129 = arith.addf %125, %128 : vector<64x128xf32>
    %130 = vector.extract_strided_slice %112 {offsets = [1, 1, 0], sizes = [8, 8, 4], strides = [1, 1, 1]} : vector<10x16x4xf32> to vector<8x8x4xf32>
    %131 = vector.shape_cast %130 : vector<8x8x4xf32> to vector<64x4xf32>
    %cst_110 = arith.constant dense<0.000000e+00> : vector<64x128xf32>
    %132 = tpu.matmul %131, %103, %cst_110 {dimension_numbers = #tpu.dot_dimension_numbers<[1], [0], [0], [1], [0, 0, 1, 1], [], []>} : vector<64x4xf32>, vector<4x128xf32>, vector<64x128xf32> -> vector<64x128xf32>
    %133 = arith.addf %129, %132 : vector<64x128xf32>
    %134 = vector.extract_strided_slice %112 {offsets = [1, 2, 0], sizes = [8, 8, 4], strides = [1, 1, 1]} : vector<10x16x4xf32> to vector<8x8x4xf32>
    %135 = vector.shape_cast %134 : vector<8x8x4xf32> to vector<64x4xf32>
    %cst_111 = arith.constant dense<0.000000e+00> : vector<64x128xf32>
    %136 = tpu.matmul %135, %105, %cst_111 {dimension_numbers = #tpu.dot_dimension_numbers<[1], [0], [0], [1], [0, 0, 1, 1], [], []>} : vector<64x4xf32>, vector<4x128xf32>, vector<64x128xf32> -> vector<64x128xf32>
    %137 = arith.addf %133, %136 : vector<64x128xf32>
    %138 = vector.extract_strided_slice %112 {offsets = [2, 0, 0], sizes = [8, 8, 4], strides = [1, 1, 1]} : vector<10x16x4xf32> to vector<8x8x4xf32>
    %139 = vector.shape_cast %138 : vector<8x8x4xf32> to vector<64x4xf32>
    %cst_112 = arith.constant dense<0.000000e+00> : vector<64x128xf32>
    %140 = tpu.matmul %139, %107, %cst_112 {dimension_numbers = #tpu.dot_dimension_numbers<[1], [0], [0], [1], [0, 0, 1, 1], [], []>} : vector<64x4xf32>, vector<4x128xf32>, vector<64x128xf32> -> vector<64x128xf32>
    %141 = arith.addf %137, %140 : vector<64x128xf32>
    %142 = vector.extract_strided_slice %112 {offsets = [2, 1, 0], sizes = [8, 8, 4], strides = [1, 1, 1]} : vector<10x16x4xf32> to vector<8x8x4xf32>
    %143 = vector.shape_cast %142 : vector<8x8x4xf32> to vector<64x4xf32>
    %cst_113 = arith.constant dense<0.000000e+00> : vector<64x128xf32>
    %144 = tpu.matmul %143, %109, %cst_113 {dimension_numbers = #tpu.dot_dimension_numbers<[1], [0], [0], [1], [0, 0, 1, 1], [], []>} : vector<64x4xf32>, vector<4x128xf32>, vector<64x128xf32> -> vector<64x128xf32>
    %145 = arith.addf %141, %144 : vector<64x128xf32>
    %146 = vector.extract_strided_slice %112 {offsets = [2, 2, 0], sizes = [8, 8, 4], strides = [1, 1, 1]} : vector<10x16x4xf32> to vector<8x8x4xf32>
    %147 = vector.shape_cast %146 : vector<8x8x4xf32> to vector<64x4xf32>
    %cst_114 = arith.constant dense<0.000000e+00> : vector<64x128xf32>
    %148 = tpu.matmul %147, %111, %cst_114 {dimension_numbers = #tpu.dot_dimension_numbers<[1], [0], [0], [1], [0, 0, 1, 1], [], []>} : vector<64x4xf32>, vector<4x128xf32>, vector<64x128xf32> -> vector<64x128xf32>
    %149 = arith.addf %145, %148 : vector<64x128xf32>
    %150 = vector.shape_cast %149 : vector<64x128xf32> to vector<8x8x128xf32>
    %c0_115 = arith.constant 0 : index
    %c0_116 = arith.constant 0 : index
    %c0_117 = arith.constant 0 : index
    %c0_118 = arith.constant 0 : index
    %151 = vector.load %arg5[%c0_115, %c0_116, %c0_117, %c0_118] : memref<1x8x8x128xf32, #tpu.memory_space<vmem>>, vector<1x8x8x128xf32>
    %152 = vector.shape_cast %151 : vector<1x8x8x128xf32> to vector<8x8x128xf32>
    %153 = vector.shape_cast %150 : vector<8x8x128xf32> to vector<1x8x8x128xf32>
    tpu.vector_store %arg5[%c0_115, %c0_116, %c0_117, %c0_118], %153 {strides = array<i32>} : memref<1x8x8x128xf32, #tpu.memory_space<vmem>>, vector<1x8x8x128xf32>,
    return
  }
  func.func @transform_0(%arg0: i32) -> (i32, i32, i32, i32) {
    %c0_i32 = arith.constant 0 : i32
    %c0_i32_0 = arith.constant 0 : i32
    %c0_i32_1 = arith.constant 0 : i32
    %c0_i32_2 = arith.constant 0 : i32
    return %arg0, %c0_i32, %c0_i32_0, %c0_i32_1 : i32, i32, i32, i32
  }
  func.func @transform_1(%arg0: i32) -> (i32, i32, i32) {
    %c0_i32 = arith.constant 0 : i32
    %c0_i32_0 = arith.constant 0 : i32
    %c0_i32_1 = arith.constant 0 : i32
    %c0_i32_2 = arith.constant 0 : i32
    return %c0_i32, %c0_i32_0, %c0_i32_1 : i32, i32, i32
  }
  func.func @transform_2(%arg0: i32) -> (i32, i32, i32) {
    %c0_i32 = arith.constant 0 : i32
    %c0_i32_0 = arith.constant 0 : i32
    %c0_i32_1 = arith.constant 0 : i32
    %c0_i32_2 = arith.constant 0 : i32
    return %c0_i32, %c0_i32_0, %c0_i32_1 : i32, i32, i32
  }
  func.func @transform_3(%arg0: i32) -> (i32, i32, i32, i32) {
    %c0_i32 = arith.constant 0 : i32
    %c0_i32_0 = arith.constant 0 : i32
    %c0_i32_1 = arith.constant 0 : i32
    %c0_i32_2 = arith.constant 0 : i32
    return %arg0, %c0_i32, %c0_i32_0, %c0_i32_1 : i32, i32, i32, i32
  }
  func.func @transform_4(%arg0: i32) -> (i32, i32, i32, i32) {
    %c0_i32 = arith.constant 0 : i32
    %c0_i32_0 = arith.constant 0 : i32
    %c0_i32_1 = arith.constant 0 : i32
    %c0_i32_2 = arith.constant 0 : i32
    return %arg0, %c0_i32, %c0_i32_0, %c0_i32_1 : i32, i32, i32, i32
  }
}

</mosaic_0001>

<llo_original>
// kernel: first_octave_conv_forward.1
$region0: #{first_octave_conv_forward.1}
  #allocation0 [shape = 'u32[]', space=smem, size = 0x4, offset = 0x4, fixed_abs, tag = 'smem constant byte address 0x4 - core index']
  #allocation1 [shape = 'u32[72,128]{1,0:T(1,128)}', space=vmem, size = 0x9000, scoped, tag = 'internal scratch']
  #allocation2 [shape = 'f32[18,24,4]{2,1,0:T(8,128)}', space=vmem, size = 0x36000, scoped, tag = 'scratch operand']
  #allocation3 [shape = 'f32[10,16,4]{2,1,0:T(8,128)}', space=vmem, size = 0x14000, scoped, tag = 'scratch operand']
  %s0 = inlined_call_operand.vmem [shape: f32[2,16,16,4], index: 0, kind: input, shape index: {}]
  %s1 = inlined_call_operand.vmem [shape: f32[9,4,128], index: 1, kind: input, shape index: {}]
  %s2 = inlined_call_operand.vmem [shape: f32[9,4,128], index: 2, kind: input, shape index: {}]
  %s3 = inlined_call_operand.vmem [shape: f32[2,16,16,128], index: 3, kind: output, shape index: {0}]
  %s4 = inlined_call_operand.vmem [shape: f32[2,8,8,128], index: 4, kind: output, shape index: {1}]
  %5 = xla_tuple %s3, %s4
  %s6 = sld [smem:[#allocation0]]
  $region53: #{first_octave_conv_forward.1} parent=0
    _
  %s8 = ssub.s32 1, %s6
  %s9 = scalar_select 0, %s8, %s6
  loop: start=0, step=1, limit=4
  $region2: #{first_octave_conv_forward.1} parent=0 // loop_pre_header
    _
  $region3: #{first_octave_conv_forward.1} parent=0 // loop_header
    %s11 = sphi 0, %s15
    %p12 = scmp.ge.s32.totalorder %s11, 4
    %s21 = sphi 0, %s23
    %s24 = sphi 0, %s21
    %s25 = sphi 0, %s24
    %s41 = sphi 0, %s25
    %s45 = sphi 0, %s45
    %s47 = sphi 0, %s45
    %s48 = sphi 0, %s47
    %s62 = sphi 0, %s48
    %s66 = sphi 0, %s66
    %s68 = sphi 0, %s66
    %s69 = sphi 0, %s68
    %s83 = sphi 0, %s69
    %s89 = sphi 0, %s91
    %s92 = sphi 0, %s89
    %s93 = sphi 0, %s92
    %s109 = sphi 0, %s93
    %s115 = sphi 0, %s117
    %s118 = sphi 0, %s115
    %s119 = sphi 0, %s118
    %s135 = sphi 0, %s119
  $region4: #{first_octave_conv_forward.1} parent=0 // loop_header_branch
    %14 = sbr.rel (%p12) target = $region8
  $region5: #{first_octave_conv_forward.1} parent=0 // loop_body
    %s16 = ssub.s32 %s11, 1
    %s17 = ssub.s32 %s11, 2
    %s18 = sadd.s32 %s11, 1
    %s19 = ssub.s32 %s11, %s18
    %p20 = scmp.eq.s32.totalorder %s19, 0
    %s22 = sadd.s32 %s21, 1
    %s23 = scalar_select %p20, %s21, %s22
    %p26 = pneg %p20
    %p27 = scmp.eq.s32.totalorder %s11, 1
    %p28 = por %p26, %p27
    %p29 = scmp.ne.s32.totalorder %s21, %s24
    %p30 = scmp.eq.s32.totalorder %s11, 0
    %p31 = por %p29, %p30
    %p32 = scmp.ne.s32.totalorder %s21, %s24
    %p33 = scmp.eq.s32.totalorder %s16, 1
    %p34 = por %p32, %p33
    %p35 = scmp.ne.s32.totalorder %s24, %s25
    %p36 = scmp.eq.s32.totalorder %s16, 0
    %p37 = por %p35, %p36
    %p38 = scmp.ne.s32.totalorder %s24, %s25
    %p39 = scmp.eq.s32.totalorder %s17, 1
    %p40 = por %p38, %p39
    %p42 = scmp.ne.s32.totalorder %s25, %s41
    %p43 = scmp.eq.s32.totalorder %s17, 0
    %p44 = por %p42, %p43
    %s46 = sadd.s32 %s45, 1
    %p49 = scmp.eq.s32.totalorder %s11, 1
    %p50 = scmp.ne.s32.totalorder %s45, %s47
    %p51 = scmp.eq.s32.totalorder %s11, 0
    %p52 = por %p50, %p51
    %p53 = scmp.ne.s32.totalorder %s45, %s47
    %p54 = scmp.eq.s32.totalorder %s16, 1
    %p55 = por %p53, %p54
    %p56 = scmp.ne.s32.totalorder %s47, %s48
    %p57 = scmp.eq.s32.totalorder %s16, 0
    %p58 = por %p56, %p57
    %p59 = scmp.ne.s32.totalorder %s47, %s48
    %p60 = scmp.eq.s32.totalorder %s17, 1
    %p61 = por %p59, %p60
    %p63 = scmp.ne.s32.totalorder %s48, %s62
    %p64 = scmp.eq.s32.totalorder %s17, 0
    %p65 = por %p63, %p64
    %s67 = sadd.s32 %s66, 1
    %p70 = scmp.eq.s32.totalorder %s11, 1
    %p71 = scmp.ne.s32.totalorder %s66, %s68
    %p72 = scmp.eq.s32.totalorder %s11, 0
    %p73 = por %p71, %p72
    %p74 = scmp.ne.s32.totalorder %s66, %s68
    %p75 = scmp.eq.s32.totalorder %s16, 1
    %p76 = por %p74, %p75
    %p77 = scmp.ne.s32.totalorder %s68, %s69
    %p78 = scmp.eq.s32.totalorder %s16, 0
    %p79 = por %p77, %p78
    %p80 = scmp.ne.s32.totalorder %s68, %s69
    %p81 = scmp.eq.s32.totalorder %s17, 1
    %p82 = por %p80, %p81
    %p84 = scmp.ne.s32.totalorder %s69, %s83
    %p85 = scmp.eq.s32.totalorder %s17, 0
    %p86 = por %p84, %p85
    %s87 = ssub.s32 %s11, %s18
    %p88 = scmp.eq.s32.totalorder %s87, 0
    %s90 = sadd.s32 %s89, 1
    %s91 = scalar_select %p88, %s89, %s90
    %p94 = pneg %p88
    %p95 = scmp.eq.s32.totalorder %s11, 1
    %p96 = por %p94, %p95
    %p97 = scmp.ne.s32.totalorder %s89, %s92
    %p98 = scmp.eq.s32.totalorder %s11, 0
    %p99 = por %p97, %p98
    %p100 = scmp.ne.s32.totalorder %s89, %s92
    %p101 = scmp.eq.s32.totalorder %s16, 1
    %p102 = por %p100, %p101
    %p103 = scmp.ne.s32.totalorder %s92, %s93
    %p104 = scmp.eq.s32.totalorder %s16, 0
    %p105 = por %p103, %p104
    %p106 = scmp.ne.s32.totalorder %s92, %s93
    %p107 = scmp.eq.s32.totalorder %s17, 1
    %p108 = por %p106, %p107
    %p110 = scmp.ne.s32.totalorder %s93, %s109
    %p111 = scmp.eq.s32.totalorder %s17, 0
    %p112 = por %p110, %p111
    %s113 = ssub.s32 %s11, %s18
    %p114 = scmp.eq.s32.totalorder %s113, 0
    %s116 = sadd.s32 %s115, 1
    %s117 = scalar_select %p114, %s115, %s116
    %p120 = pneg %p114
    %p121 = scmp.eq.s32.totalorder %s11, 1
    %p122 = por %p120, %p121
    %p123 = scmp.ne.s32.totalorder %s115, %s118
    %p124 = scmp.eq.s32.totalorder %s11, 0
    %p125 = por %p123, %p124
    %p126 = scmp.ne.s32.totalorder %s115, %s118
    %p127 = scmp.eq.s32.totalorder %s16, 1
    %p128 = por %p126, %p127
    %p129 = scmp.ne.s32.totalorder %s118, %s119
    %p130 = scmp.eq.s32.totalorder %s16, 0
    %p131 = por %p129, %p130
    %p132 = scmp.ne.s32.totalorder %s118, %s119
    %p133 = scmp.eq.s32.totalorder %s17, 1
    %p134 = por %p132, %p133
    %p136 = scmp.ne.s32.totalorder %s119, %s135
    %p137 = scmp.eq.s32.totalorder %s17, 0
    %p138 = por %p136, %p137
    %p139 = scmp.le.s32.totalorder 1, %s11
    %p140 = scmp.lt.s32.totalorder %s11, 3
    %p141 = pnand %p139, %p140
    %p142 = pneg %p141
    // Predicated region
    $region9: #{first_octave_conv_forward.1} parent=5 // pred_check
      _
    $region10: #{first_octave_conv_forward.1} parent=5 // pred_check_branch
      %144 = sbr.rel (%p141) target = $region12
    $region11: #{first_octave_conv_forward.1} parent=5 // pred_region
      %s145 = ssub.s32 %s11, 1
      // Predicated region
      $region13: #{first_octave_conv_forward.1} parent=11 // pred_check
        %p146 = pneg %p58
      $region14: #{first_octave_conv_forward.1} parent=11 // pred_check_branch
        %148 = sbr.rel (%p146) target = $region16
      $region15: #{first_octave_conv_forward.1} parent=11 // pred_region
        _
      $region16: #{first_octave_conv_forward.1} parent=11 // pred_fallthru
        _
      // Predicated region
      $region17: #{first_octave_conv_forward.1} parent=11 // pred_check
        %p149 = pneg %p79
      $region18: #{first_octave_conv_forward.1} parent=11 // pred_check_branch
        %151 = sbr.rel (%p149) target = $region20
      $region19: #{first_octave_conv_forward.1} parent=11 // pred_region
        _
      $region20: #{first_octave_conv_forward.1} parent=11 // pred_fallthru
        _
    $region12: #{first_octave_conv_forward.1} parent=5 // pred_fallthru
      _
    %p152 = scmp.lt.s32.totalorder %s11, 2
    // Predicated region
    $region21: #{first_octave_conv_forward.1} parent=5 // pred_check
      %p153 = pneg %p152
    $region22: #{first_octave_conv_forward.1} parent=5 // pred_check_branch
      %155 = sbr.rel (%p153) target = $region24
    $region23: #{first_octave_conv_forward.1} parent=5 // pred_region
      // Predicated region
      $region25: #{first_octave_conv_forward.1} parent=23 // pred_check
        %p156 = pneg %p31
      $region26: #{first_octave_conv_forward.1} parent=23 // pred_check_branch
        %158 = sbr.rel (%p156) target = $region28
      $region27: #{first_octave_conv_forward.1} parent=23 // pred_region
        %p159 = scmp.lt.s32.totalorder %s11, 1
        %s160 = scalar_select %p159, %s11, 1
        %s161 = smul.addr %s160, 32
        %s162 = smul.addr %s161, 8
        %s163 = scalar_lea.vmem %s0, %s162
      $region28: #{first_octave_conv_forward.1} parent=23 // pred_fallthru
        _
    $region24: #{first_octave_conv_forward.1} parent=5 // pred_fallthru
      _
    %p164 = scmp.le.s32.totalorder 1, %s11
    %p165 = scmp.lt.s32.totalorder %s11, 3
    %p166 = pnand %p164, %p165
    %p167 = pneg %p166
    // Predicated region
    $region29: #{first_octave_conv_forward.1} parent=5 // pred_check
      _
    $region30: #{first_octave_conv_forward.1} parent=5 // pred_check_branch
      %169 = sbr.rel (%p166) target = $region32
    $region31: #{first_octave_conv_forward.1} parent=5 // pred_region
      %s170 = ssub.s32 %s11, 1
      %p171 = scmp.lt.s32.totalorder %s16, 1
      %s172 = scalar_select %p171, %s16, 1
      %s173 = smul.addr %s172, 32
      %s174 = smul.addr %s173, 8
      %s175 = scalar_lea.vmem %s0, %s174
      %p176 = pneg %p37
      %p177 = pneg %p34
      %p178 = pneg %p58
      %p179 = pneg %p55
      %p180 = pneg %p79
      %p181 = pneg %p76
      %p182 = pneg %p105
      %p183 = pneg %p102
      %p184 = scmp.lt.s32.totalorder %s16, 1
      %s185 = scalar_select %p184, %s16, 1
      %s186 = smul.addr %s185, 32
      %s187 = smul.addr %s186, 8
      %s188 = scalar_lea.vmem %s3, %s187
      %p189 = pneg %p131
      %p190 = pneg %p128
      %p191 = scmp.lt.s32.totalorder %s16, 1
      %s192 = scalar_select %p191, %s16, 1
      %s193 = smul.addr %s192, 8
      %s194 = smul.addr %s193, 8
      %s195 = scalar_lea.vmem %s4, %s194
      %p196 = scmp.lt.s32.totalorder %s16, 1
      %s197 = scalar_select %p196, %s16, 1
      %s198 = smul.addr %s197, 32
      %s199 = smul.addr %s198, 8
      %s200 = scalar_lea.vmem %s0, %s199
      %p201 = scmp.lt.s32.totalorder %s16, 1
      %s202 = scalar_select %p201, %s16, 1
      %s203 = smul.addr %s202, 32
      %s204 = smul.addr %s203, 8
      %s205 = scalar_lea.vmem %s3, %s204
      %p206 = scmp.lt.s32.totalorder %s16, 1
      %s207 = scalar_select %p206, %s16, 1
      %s208 = smul.addr %s207, 8
      %s209 = smul.addr %s208, 8
      %s210 = scalar_lea.vmem %s4, %s209
      %v211 = vld [vmem:[%s200] sm:$0xff]
      %v212 = vld [vmem:[%s200 + $0x8] sm:$0xff]
      %v213 = vld [vmem:[%s200 + $0x10] sm:$0xff]
      %v214 = vld [vmem:[%s200 + $0x18] sm:$0xff]
      %v215 = vld [vmem:[%s200 + $0x20] sm:$0xff]
      %v216 = vld [vmem:[%s200 + $0x28] sm:$0xff]
      %v217 = vld [vmem:[%s200 + $0x30] sm:$0xff]
      %v218 = vld [vmem:[%s200 + $0x38] sm:$0xff]
      %v219 = vld [vmem:[%s200 + $0x40] sm:$0xff]
      %v220 = vld [vmem:[%s200 + $0x48] sm:$0xff]
      %v221 = vld [vmem:[%s200 + $0x50] sm:$0xff]
      %v222 = vld [vmem:[%s200 + $0x58] sm:$0xff]
      %v223 = vld [vmem:[%s200 + $0x60] sm:$0xff]
      %v224 = vld [vmem:[%s200 + $0x68] sm:$0xff]
      %v225 = vld [vmem:[%s200 + $0x70] sm:$0xff]
      %v226 = vld [vmem:[%s200 + $0x78] sm:$0xff]
      %v227 = vld [vmem:[%s200 + $0x80] sm:$0xff]
      %v228 = vld [vmem:[%s200 + $0x88] sm:$0xff]
      %v229 = vld [vmem:[%s200 + $0x90] sm:$0xff]
      %v230 = vld [vmem:[%s200 + $0x98] sm:$0xff]
      %v231 = vld [vmem:[%s200 + $0xa0] sm:$0xff]
      %v232 = vld [vmem:[%s200 + $0xa8] sm:$0xff]
      %v233 = vld [vmem:[%s200 + $0xb0] sm:$0xff]
      %v234 = vld [vmem:[%s200 + $0xb8] sm:$0xff]
      %v235 = vld [vmem:[%s200 + $0xc0] sm:$0xff]
      %v236 = vld [vmem:[%s200 + $0xc8] sm:$0xff]
      %v237 = vld [vmem:[%s200 + $0xd0] sm:$0xff]
      %v238 = vld [vmem:[%s200 + $0xd8] sm:$0xff]
      %v239 = vld [vmem:[%s200 + $0xe0] sm:$0xff]
      %v240 = vld [vmem:[%s200 + $0xe8] sm:$0xff]
      %v241 = vld [vmem:[%s200 + $0xf0] sm:$0xff]
      %v242 = vld [vmem:[%s200 + $0xf8] sm:$0xff]
      %vm243 = vcmask 31744
      %244 = vst.msk [vmem:[#allocation2] sm:$0xff] %vm243, 0.0
      %245 = vst.msk [vmem:[#allocation2 + $0x8] sm:$0xff] %vm243, 0.0
      %246 = vst.msk [vmem:[#allocation2 + $0x10] sm:$0xff] %vm243, 0.0
      %s247 = scalar_lea.vmem [#allocation2], 408
      %248 = vst.msk [vmem:[%s247] sm:$0xff] %vm243, 0.0
      %249 = vst.msk [vmem:[%s247 + $0x8] sm:$0xff] %vm243, 0.0
      %250 = vst.msk [vmem:[%s247 + $0x10] sm:$0xff] %vm243, 0.0
      %vm251 = vcmask 24576
      %252 = vst.msk [vmem:[#allocation2] sm:$0x1] %vm251, 0.0
      %253 = vst.msk [vmem:[#allocation2 + $0x18] sm:$0x1] %vm251, 0.0
      %254 = vst.msk [vmem:[#allocation2 + $0x30] sm:$0x1] %vm251, 0.0
      %255 = vst.msk [vmem:[#allocation2 + $0x48] sm:$0x1] %vm251, 0.0
      %256 = vst.msk [vmem:[#allocation2 + $0x60] sm:$0x1] %vm251, 0.0
      %257 = vst.msk [vmem:[#allocation2 + $0x78] sm:$0x1] %vm251, 0.0
      %258 = vst.msk [vmem:[#allocation2 + $0x90] sm:$0x1] %vm251, 0.0
      %259 = vst.msk [vmem:[#allocation2 + $0xa8] sm:$0x1] %vm251, 0.0
      %260 = vst.msk [vmem:[#allocation2 + $0xc0] sm:$0x1] %vm251, 0.0
      %261 = vst.msk [vmem:[#allocation2 + $0xd8] sm:$0x1] %vm251, 0.0
      %262 = vst.msk [vmem:[#allocation2 + $0xf0] sm:$0x1] %vm251, 0.0
      %263 = vst.msk [vmem:[#allocation2 + $0x108] sm:$0x1] %vm251, 0.0
      %264 = vst.msk [vmem:[#allocation2 + $0x120] sm:$0x1] %vm251, 0.0
      %265 = vst.msk [vmem:[#allocation2 + $0x138] sm:$0x1] %vm251, 0.0
      %266 = vst.msk [vmem:[#allocation2 + $0x150] sm:$0x1] %vm251, 0.0
      %267 = vst.msk [vmem:[#allocation2 + $0x168] sm:$0x1] %vm251, 0.0
      %268 = vst.msk [vmem:[#allocation2 + $0x180] sm:$0x1] %vm251, 0.0
      %269 = vst.msk [vmem:[#allocation2 + $0x198] sm:$0x1] %vm251, 0.0
      %vm270 = vcmask 30720
      %271 = vst.msk [vmem:[#allocation2 + $0x11] sm:$0x7f] %vm270, 0.0
      %272 = vst.msk [vmem:[#allocation2 + $0x29] sm:$0x7f] %vm270, 0.0
      %273 = vst.msk [vmem:[#allocation2 + $0x41] sm:$0x7f] %vm270, 0.0
      %274 = vst.msk [vmem:[#allocation2 + $0x59] sm:$0x7f] %vm270, 0.0
      %275 = vst.msk [vmem:[#allocation2 + $0x71] sm:$0x7f] %vm270, 0.0
      %276 = vst.msk [vmem:[#allocation2 + $0x89] sm:$0x7f] %vm270, 0.0
      %277 = vst.msk [vmem:[#allocation2 + $0xa1] sm:$0x7f] %vm270, 0.0
      %278 = vst.msk [vmem:[#allocation2 + $0xb9] sm:$0x7f] %vm270, 0.0
      %279 = vst.msk [vmem:[#allocation2 + $0xd1] sm:$0x7f] %vm270, 0.0
      %280 = vst.msk [vmem:[#allocation2 + $0xe9] sm:$0x7f] %vm270, 0.0
      %281 = vst.msk [vmem:[#allocation2 + $0x101] sm:$0x7f] %vm270, 0.0
      %282 = vst.msk [vmem:[#allocation2 + $0x119] sm:$0x7f] %vm270, 0.0
      %283 = vst.msk [vmem:[#allocation2 + $0x131] sm:$0x7f] %vm270, 0.0
      %284 = vst.msk [vmem:[#allocation2 + $0x149] sm:$0x7f] %vm270, 0.0
      %285 = vst.msk [vmem:[#allocation2 + $0x161] sm:$0x7f] %vm270, 0.0
      %286 = vst.msk [vmem:[#allocation2 + $0x179] sm:$0x7f] %vm270, 0.0
      %287 = vst.msk [vmem:[#allocation2 + $0x191] sm:$0x7f] %vm270, 0.0
      %288 = vst.msk [vmem:[#allocation2 + $0x1a9] sm:$0x7f] %vm270, 0.0
      %s289 = scalar_lea.vmem [#allocation2], 24
      %290 = vst.msk [vmem:[%s289 + $0x1] sm:$0xff] %vm243, %v211
      %291 = vst.msk [vmem:[%s289 + $0x9] sm:$0xff] %vm243, %v212
      %292 = vst.msk [vmem:[%s289 + $0x19] sm:$0xff] %vm243, %v213
      %293 = vst.msk [vmem:[%s289 + $0x21] sm:$0xff] %vm243, %v214
      %294 = vst.msk [vmem:[%s289 + $0x31] sm:$0xff] %vm243, %v215
      %295 = vst.msk [vmem:[%s289 + $0x39] sm:$0xff] %vm243, %v216
      %296 = vst.msk [vmem:[%s289 + $0x49] sm:$0xff] %vm243, %v217
      %297 = vst.msk [vmem:[%s289 + $0x51] sm:$0xff] %vm243, %v218
      %298 = vst.msk [vmem:[%s289 + $0x61] sm:$0xff] %vm243, %v219
      %299 = vst.msk [vmem:[%s289 + $0x69] sm:$0xff] %vm243, %v220
      %300 = vst.msk [vmem:[%s289 + $0x79] sm:$0xff] %vm243, %v221
      %301 = vst.msk [vmem:[%s289 + $0x81] sm:$0xff] %vm243, %v222
      %302 = vst.msk [vmem:[%s289 + $0x91] sm:$0xff] %vm243, %v223
      %303 = vst.msk [vmem:[%s289 + $0x99] sm:$0xff] %vm243, %v224
      %304 = vst.msk [vmem:[%s289 + $0xa9] sm:$0xff] %vm243, %v225
      %305 = vst.msk [vmem:[%s289 + $0xb1] sm:$0xff] %vm243, %v226
      %306 = vst.msk [vmem:[%s289 + $0xc1] sm:$0xff] %vm243, %v227
      %307 = vst.msk [vmem:[%s289 + $0xc9] sm:$0xff] %vm243, %v228
      %308 = vst.msk [vmem:[%s289 + $0xd9] sm:$0xff] %vm243, %v229
      %309 = vst.msk [vmem:[%s289 + $0xe1] sm:$0xff] %vm243, %v230
      %310 = vst.msk [vmem:[%s289 + $0xf1] sm:$0xff] %vm243, %v231
      %311 = vst.msk [vmem:[%s289 + $0xf9] sm:$0xff] %vm243, %v232
      %312 = vst.msk [vmem:[%s289 + $0x109] sm:$0xff] %vm243, %v233
      %313 = vst.msk [vmem:[%s289 + $0x111] sm:$0xff] %vm243, %v234
      %314 = vst.msk [vmem:[%s289 + $0x121] sm:$0xff] %vm243, %v235
      %315 = vst.msk [vmem:[%s289 + $0x129] sm:$0xff] %vm243, %v236
      %316 = vst.msk [vmem:[%s289 + $0x139] sm:$0xff] %vm243, %v237
      %317 = vst.msk [vmem:[%s289 + $0x141] sm:$0xff] %vm243, %v238
      %318 = vst.msk [vmem:[%s289 + $0x151] sm:$0xff] %vm243, %v239
      %319 = vst.msk [vmem:[%s289 + $0x159] sm:$0xff] %vm243, %v240
      %320 = vst.msk [vmem:[%s289 + $0x169] sm:$0xff] %vm243, %v241
      %321 = vst.msk [vmem:[%s289 + $0x171] sm:$0xff] %vm243, %v242
      %v322 = vld [vmem:[%s1] sm:$0xf]
      %s323 = scalar_lea.vmem %s1, 4
      %v324 = vld [vmem:[%s323] sm:$0xf]
      %s325 = scalar_lea.vmem %s1, 8
      %v326 = vld [vmem:[%s325] sm:$0xf]
      %s327 = scalar_lea.vmem %s1, 12
      %v328 = vld [vmem:[%s327] sm:$0xf]
      %s329 = scalar_lea.vmem %s1, 16
      %v330 = vld [vmem:[%s329] sm:$0xf]
      %s331 = scalar_lea.vmem %s1, 20
      %v332 = vld [vmem:[%s331] sm:$0xf]
      %s333 = scalar_lea.vmem %s1, 24
      %v334 = vld [vmem:[%s333] sm:$0xf]
      %s335 = scalar_lea.vmem %s1, 28
      %v336 = vld [vmem:[%s335] sm:$0xf]
      %s337 = scalar_lea.vmem %s1, 32
      %v338 = vld [vmem:[%s337] sm:$0xf]
      %v339 = vld [vmem:[#allocation2] sm:$0xff]
      %v340 = vld [vmem:[#allocation2 + $0x8] sm:$0xff]
      %v341 = vld [vmem:[#allocation2 + $0x10] sm:$0xff]
      %v342 = vld [vmem:[#allocation2 + $0x18] sm:$0xff]
      %v343 = vld [vmem:[#allocation2 + $0x20] sm:$0xff]
      %v344 = vld [vmem:[#allocation2 + $0x28] sm:$0xff]
      %v345 = vld [vmem:[#allocation2 + $0x30] sm:$0xff]
      %v346 = vld [vmem:[#allocation2 + $0x38] sm:$0xff]
      %v347 = vld [vmem:[#allocation2 + $0x40] sm:$0xff]
      %v348 = vld [vmem:[#allocation2 + $0x48] sm:$0xff]
      %v349 = vld [vmem:[#allocation2 + $0x50] sm:$0xff]
      %v350 = vld [vmem:[#allocation2 + $0x58] sm:$0xff]
      %v351 = vld [vmem:[#allocation2 + $0x60] sm:$0xff]
      %v352 = vld [vmem:[#allocation2 + $0x68] sm:$0xff]
      %v353 = vld [vmem:[#allocation2 + $0x70] sm:$0xff]
      %v354 = vld [vmem:[#allocation2 + $0x78] sm:$0xff]
      %v355 = vld [vmem:[#allocation2 + $0x80] sm:$0xff]
      %v356 = vld [vmem:[#allocation2 + $0x88] sm:$0xff]
      %v357 = vld [vmem:[#allocation2 + $0x90] sm:$0xff]
      %v358 = vld [vmem:[#allocation2 + $0x98] sm:$0xff]
      %v359 = vld [vmem:[#allocation2 + $0xa0] sm:$0xff]
      %v360 = vld [vmem:[#allocation2 + $0xa8] sm:$0xff]
      %v361 = vld [vmem:[#allocation2 + $0xb0] sm:$0xff]
      %v362 = vld [vmem:[#allocation2 + $0xb8] sm:$0xff]
      %v363 = vld [vmem:[#allocation2 + $0xc0] sm:$0xff]
      %v364 = vld [vmem:[#allocation2 + $0xc8] sm:$0xff]
      %v365 = vld [vmem:[#allocation2 + $0xd0] sm:$0xff]
      %v366 = vld [vmem:[#allocation2 + $0xd8] sm:$0xff]
      %v367 = vld [vmem:[#allocation2 + $0xe0] sm:$0xff]
      %v368 = vld [vmem:[#allocation2 + $0xe8] sm:$0xff]
      %v369 = vld [vmem:[#allocation2 + $0xf0] sm:$0xff]
      %v370 = vld [vmem:[#allocation2 + $0xf8] sm:$0xff]
      %v371 = vld [vmem:[#allocation2 + $0x100] sm:$0xff]
      %v372 = vld [vmem:[#allocation2 + $0x108] sm:$0xff]
      %v373 = vld [vmem:[#allocation2 + $0x110] sm:$0xff]
      %v374 = vld [vmem:[#allocation2 + $0x118] sm:$0xff]
      %v375 = vld [vmem:[#allocation2 + $0x120] sm:$0xff]
      %v376 = vld [vmem:[#allocation2 + $0x128] sm:$0xff]
      %v377 = vld [vmem:[#allocation2 + $0x130] sm:$0xff]
      %v378 = vld [vmem:[#allocation2 + $0x138] sm:$0xff]
      %v379 = vld [vmem:[#allocation2 + $0x140] sm:$0xff]
      %v380 = vld [vmem:[#allocation2 + $0x148] sm:$0xff]
      %v381 = vld [vmem:[#allocation2 + $0x150] sm:$0xff]
      %v382 = vld [vmem:[#allocation2 + $0x158] sm:$0xff]
      %v383 = vld [vmem:[#allocation2 + $0x160] sm:$0xff]
      %v384 = vld [vmem:[#allocation2 + $0x168] sm:$0xff]
      %v385 = vld [vmem:[#allocation2 + $0x170] sm:$0xff]
      %v386 = vld [vmem:[#allocation2 + $0x178] sm:$0xff]
      %v387 = vld [vmem:[#allocation2 + $0x180] sm:$0xff]
      %v388 = vld [vmem:[#allocation2 + $0x188] sm:$0xff]
      %v389 = vld [vmem:[#allocation2 + $0x190] sm:$0xff]
      %v390 = vld [vmem:[#allocation2 + $0x198] sm:$0xff]
      %v391 = vld [vmem:[#allocation2 + $0x1a0] sm:$0xff]
      %v392 = vld [vmem:[#allocation2 + $0x1a8] sm:$0xff]
      %vm441 = vcmask 1046528
      %v442 = vrot.slane %v339, 1
      %v443 = vrot.slane %v340, 1
      %v444 = vsel %vm441, %v442, %v443
      %v445 = vrot.slane %v341, 1
      %v446 = vsel %vm441, %v443, %v445
      %v447 = vrot.slane %v342, 1
      %v448 = vrot.slane %v343, 1
      %v449 = vsel %vm441, %v447, %v448
      %v450 = vrot.slane %v344, 1
      %v451 = vsel %vm441, %v448, %v450
      %v452 = vrot.slane %v345, 1
      %v453 = vrot.slane %v346, 1
      %v454 = vsel %vm441, %v452, %v453
      %v455 = vrot.slane %v347, 1
      %v456 = vsel %vm441, %v453, %v455
      %v457 = vrot.slane %v348, 1
      %v458 = vrot.slane %v349, 1
      %v459 = vsel %vm441, %v457, %v458
      %v460 = vrot.slane %v350, 1
      %v461 = vsel %vm441, %v458, %v460
      %v462 = vrot.slane %v351, 1
      %v463 = vrot.slane %v352, 1
      %v464 = vsel %vm441, %v462, %v463
      %v465 = vrot.slane %v353, 1
      %v466 = vsel %vm441, %v463, %v465
      %v467 = vrot.slane %v354, 1
      %v468 = vrot.slane %v355, 1
      %v469 = vsel %vm441, %v467, %v468
      %v470 = vrot.slane %v356, 1
      %v471 = vsel %vm441, %v468, %v470
      %v472 = vrot.slane %v357, 1
      %v473 = vrot.slane %v358, 1
      %v474 = vsel %vm441, %v472, %v473
      %v475 = vrot.slane %v359, 1
      %v476 = vsel %vm441, %v473, %v475
      %v477 = vrot.slane %v360, 1
      %v478 = vrot.slane %v361, 1
      %v479 = vsel %vm441, %v477, %v478
      %v480 = vrot.slane %v362, 1
      %v481 = vsel %vm441, %v478, %v480
      %v482 = vrot.slane %v363, 1
      %v483 = vrot.slane %v364, 1
      %v484 = vsel %vm441, %v482, %v483
      %v485 = vrot.slane %v365, 1
      %v486 = vsel %vm441, %v483, %v485
      %v487 = vrot.slane %v366, 1
      %v488 = vrot.slane %v367, 1
      %v489 = vsel %vm441, %v487, %v488
      %v490 = vrot.slane %v368, 1
      %v491 = vsel %vm441, %v488, %v490
      %v492 = vrot.slane %v369, 1
      %v493 = vrot.slane %v370, 1
      %v494 = vsel %vm441, %v492, %v493
      %v495 = vrot.slane %v371, 1
      %v496 = vsel %vm441, %v493, %v495
      %v497 = vrot.slane %v372, 1
      %v498 = vrot.slane %v373, 1
      %v499 = vsel %vm441, %v497, %v498
      %v500 = vrot.slane %v374, 1
      %v501 = vsel %vm441, %v498, %v500
      %v502 = vrot.slane %v375, 1
      %v503 = vrot.slane %v376, 1
      %v504 = vsel %vm441, %v502, %v503
      %v505 = vrot.slane %v377, 1
      %v506 = vsel %vm441, %v503, %v505
      %v507 = vrot.slane %v378, 1
      %v508 = vrot.slane %v379, 1
      %v509 = vsel %vm441, %v507, %v508
      %v510 = vrot.slane %v380, 1
      %v511 = vsel %vm441, %v508, %v510
      %v512 = vrot.slane %v381, 1
      %v513 = vrot.slane %v382, 1
      %v514 = vsel %vm441, %v512, %v513
      %v515 = vrot.slane %v383, 1
      %v516 = vsel %vm441, %v513, %v515
      %v517 = vrot.slane %v384, 1
      %v518 = vrot.slane %v385, 1
      %v519 = vsel %vm441, %v517, %v518
      %v520 = vrot.slane %v386, 1
      %v521 = vsel %vm441, %v518, %v520
      %v522 = vsel %vm243, %v444, 0
      %v524 = vsel %vm243, %v446, 0
      %v526 = vsel %vm243, %v449, 0
      %v528 = vsel %vm243, %v451, 0
      %v530 = vsel %vm243, %v454, 0
      %v532 = vsel %vm243, %v456, 0
      %v534 = vsel %vm243, %v459, 0
      %v536 = vsel %vm243, %v461, 0
      %v538 = vsel %vm243, %v464, 0
      %v540 = vsel %vm243, %v466, 0
      %v542 = vsel %vm243, %v469, 0
      %v544 = vsel %vm243, %v471, 0
      %v546 = vsel %vm243, %v474, 0
      %v548 = vsel %vm243, %v476, 0
      %v550 = vsel %vm243, %v479, 0
      %v552 = vsel %vm243, %v481, 0
      %v554 = vsel %vm243, %v484, 0
      %v556 = vsel %vm243, %v486, 0
      %v558 = vsel %vm243, %v489, 0
      %v560 = vsel %vm243, %v491, 0
      %v562 = vsel %vm243, %v494, 0
      %v564 = vsel %vm243, %v496, 0
      %v566 = vsel %vm243, %v499, 0
      %v568 = vsel %vm243, %v501, 0
      %v570 = vsel %vm243, %v504, 0
      %v572 = vsel %vm243, %v506, 0
      %v574 = vsel %vm243, %v509, 0
      %v576 = vsel %vm243, %v511, 0
      %v578 = vsel %vm243, %v514, 0
      %v580 = vsel %vm243, %v516, 0
      %v582 = vsel %vm243, %v519, 0
      %v584 = vsel %vm243, %v521, 0
      %vm586 = vcmask 1043456
      %v588 = vsel %vm586, %v324, 0
      %590 = vmatpush.msra.mxu0 0.0
      %591 = vmatpush.msra.mxu0 0.0
      %592 = vmatpush.msra.mxu0 0.0
      %593 = vmatpush.msra.mxu0 0.0
      %594 = vmatpush.msra.mxu0 0.0
      %595 = vmatpush.msra.mxu0 0.0
      %596 = vmatpush.msra.mxu0 0.0
      %597 = vmatpush.msra.mxu0 0.0
      %598 = vmatpush.msra.mxu0 0.0
      %599 = vmatpush.msra.mxu0 0.0
      %600 = vmatpush.msra.mxu0 0.0
      %601 = vmatpush.msra.mxu0 0.0
      %602 = vmatpush.msra.mxu0 0.0
      %603 = vmatpush.msra.mxu0 0.0
      %604 = vmatpush.msra.mxu0 0.0
      %605 = vmatpush.msra.mxu0 %v588
      %606 = vmatmul.f32.gmra.mxu0 %v522
      %v607 = vpop.f32.mrf.mxu0
      %v608 = vadd.f32 0.0, %v607
      %609 = vmatmul.f32.gmra.mxu0 %v524
      %v610 = vpop.f32.mrf.mxu0
      %v611 = vadd.f32 0.0, %v610
      %612 = vmatmul.f32.gmra.mxu0 %v526
      %v613 = vpop.f32.mrf.mxu0
      %v614 = vadd.f32 0.0, %v613
      %615 = vmatmul.f32.gmra.mxu0 %v528
      %v616 = vpop.f32.mrf.mxu0
      %v617 = vadd.f32 0.0, %v616
      %618 = vmatmul.f32.gmra.mxu0 %v530
      %v619 = vpop.f32.mrf.mxu0
      %v620 = vadd.f32 0.0, %v619
      %621 = vmatmul.f32.gmra.mxu0 %v532
      %v622 = vpop.f32.mrf.mxu0
      %v623 = vadd.f32 0.0, %v622
      %624 = vmatmul.f32.gmra.mxu0 %v534
      %v625 = vpop.f32.mrf.mxu0
      %v626 = vadd.f32 0.0, %v625
      %627 = vmatmul.f32.gmra.mxu0 %v536
      %v628 = vpop.f32.mrf.mxu0
      %v629 = vadd.f32 0.0, %v628
      %630 = vmatmul.f32.gmra.mxu0 %v538
      %v631 = vpop.f32.mrf.mxu0
      %v632 = vadd.f32 0.0, %v631
      %633 = vmatmul.f32.gmra.mxu0 %v540
      %v634 = vpop.f32.mrf.mxu0
      %v635 = vadd.f32 0.0, %v634
      %636 = vmatmul.f32.gmra.mxu0 %v542
      %v637 = vpop.f32.mrf.mxu0
      %v638 = vadd.f32 0.0, %v637
      %639 = vmatmul.f32.gmra.mxu0 %v544
      %v640 = vpop.f32.mrf.mxu0
      %v641 = vadd.f32 0.0, %v640
      %642 = vmatmul.f32.gmra.mxu0 %v546
      %v643 = vpop.f32.mrf.mxu0
      %v644 = vadd.f32 0.0, %v643
      %645 = vmatmul.f32.gmra.mxu0 %v548
      %v646 = vpop.f32.mrf.mxu0
      %v647 = vadd.f32 0.0, %v646
      %648 = vmatmul.f32.gmra.mxu0 %v550
      %v649 = vpop.f32.mrf.mxu0
      %v650 = vadd.f32 0.0, %v649
      %651 = vmatmul.f32.gmra.mxu0 %v552
      %v652 = vpop.f32.mrf.mxu0
      %v653 = vadd.f32 0.0, %v652
      %654 = vmatmul.f32.gmra.mxu0 %v554
      %v655 = vpop.f32.mrf.mxu0
      %v656 = vadd.f32 0.0, %v655
      %657 = vmatmul.f32.gmra.mxu0 %v556
      %v658 = vpop.f32.mrf.mxu0
      %v659 = vadd.f32 0.0, %v658
      %660 = vmatmul.f32.gmra.mxu0 %v558
      %v661 = vpop.f32.mrf.mxu0
      %v662 = vadd.f32 0.0, %v661
      %663 = vmatmul.f32.gmra.mxu0 %v560
      %v664 = vpop.f32.mrf.mxu0
      %v665 = vadd.f32 0.0, %v664
      %666 = vmatmul.f32.gmra.mxu0 %v562
      %v667 = vpop.f32.mrf.mxu0
      %v668 = vadd.f32 0.0, %v667
      %669 = vmatmul.f32.gmra.mxu0 %v564
      %v670 = vpop.f32.mrf.mxu0
      %v671 = vadd.f32 0.0, %v670
      %672 = vmatmul.f32.gmra.mxu0 %v566
      %v673 = vpop.f32.mrf.mxu0
      %v674 = vadd.f32 0.0, %v673
      %675 = vmatmul.f32.gmra.mxu0 %v568
      %v676 = vpop.f32.mrf.mxu0
      %v677 = vadd.f32 0.0, %v676
      %678 = vmatmul.f32.gmra.mxu0 %v570
      %v679 = vpop.f32.mrf.mxu0
      %v680 = vadd.f32 0.0, %v679
      %681 = vmatmul.f32.gmra.mxu0 %v572
      %v682 = vpop.f32.mrf.mxu0
      %v683 = vadd.f32 0.0, %v682
      %684 = vmatmul.f32.gmra.mxu0 %v574
      %v685 = vpop.f32.mrf.mxu0
      %v686 = vadd.f32 0.0, %v685
      %687 = vmatmul.f32.gmra.mxu0 %v576
      %v688 = vpop.f32.mrf.mxu0
      %v689 = vadd.f32 0.0, %v688
      %690 = vmatmul.f32.gmra.mxu0 %v578
      %v691 = vpop.f32.mrf.mxu0
      %v692 = vadd.f32 0.0, %v691
      %693 = vmatmul.f32.gmra.mxu0 %v580
      %v694 = vpop.f32.mrf.mxu0
      %v695 = vadd.f32 0.0, %v694
      %696 = vmatmul.f32.gmra.mxu0 %v582
      %v697 = vpop.f32.mrf.mxu0
      %v698 = vadd.f32 0.0, %v697
      %699 = vmatmul.f32.gmra.mxu0 %v584
      %v700 = vpop.f32.mrf.mxu0
      %v701 = vadd.f32 0.0, %v700
      %702 = vdwg.mxu0
      %v703 = vsel %vm243, %v339, 0
      %v705 = vsel %vm243, %v340, 0
      %v707 = vsel %vm243, %v342, 0
      %v709 = vsel %vm243, %v343, 0
      %v711 = vsel %vm243, %v345, 0
      %v713 = vsel %vm243, %v346, 0
      %v715 = vsel %vm243, %v348, 0
      %v717 = vsel %vm243, %v349, 0
      %v719 = vsel %vm243, %v351, 0
      %v721 = vsel %vm243, %v352, 0
      %v723 = vsel %vm243, %v354, 0
      %v725 = vsel %vm243, %v355, 0
      %v727 = vsel %vm243, %v357, 0
      %v729 = vsel %vm243, %v358, 0
      %v731 = vsel %vm243, %v360, 0
      %v733 = vsel %vm243, %v361, 0
      %v735 = vsel %vm243, %v363, 0
      %v737 = vsel %vm243, %v364, 0
      %v739 = vsel %vm243, %v366, 0
      %v741 = vsel %vm243, %v367, 0
      %v743 = vsel %vm243, %v369, 0
      %v745 = vsel %vm243, %v370, 0
      %v747 = vsel %vm243, %v372, 0
      %v749 = vsel %vm243, %v373, 0
      %v751 = vsel %vm243, %v375, 0
      %v753 = vsel %vm243, %v376, 0
      %v755 = vsel %vm243, %v378, 0
      %v757 = vsel %vm243, %v379, 0
      %v759 = vsel %vm243, %v381, 0
      %v761 = vsel %vm243, %v382, 0
      %v763 = vsel %vm243, %v384, 0
      %v765 = vsel %vm243, %v385, 0
      %v768 = vsel %vm586, %v322, 0
      %770 = vmatpush.msra.mxu0 0.0
      %771 = vmatpush.msra.mxu0 0.0
      %772 = vmatpush.msra.mxu0 0.0
      %773 = vmatpush.msra.mxu0 0.0
      %774 = vmatpush.msra.mxu0 0.0
      %775 = vmatpush.msra.mxu0 0.0
      %776 = vmatpush.msra.mxu0 0.0
      %777 = vmatpush.msra.mxu0 0.0
      %778 = vmatpush.msra.mxu0 0.0
      %779 = vmatpush.msra.mxu0 0.0
      %780 = vmatpush.msra.mxu0 0.0
      %781 = vmatpush.msra.mxu0 0.0
      %782 = vmatpush.msra.mxu0 0.0
      %783 = vmatpush.msra.mxu0 0.0
      %784 = vmatpush.msra.mxu0 0.0
      %785 = vmatpush.msra.mxu0 %v768
      %786 = vmatmul.f32.gmra.mxu0 %v703
      %v787 = vpop.f32.mrf.mxu0
      %v788 = vadd.f32 %v608, %v787
      %789 = vmatmul.f32.gmra.mxu0 %v705
      %v790 = vpop.f32.mrf.mxu0
      %v791 = vadd.f32 %v611, %v790
      %792 = vmatmul.f32.gmra.mxu0 %v707
      %v793 = vpop.f32.mrf.mxu0
      %v794 = vadd.f32 %v614, %v793
      %795 = vmatmul.f32.gmra.mxu0 %v709
      %v796 = vpop.f32.mrf.mxu0
      %v797 = vadd.f32 %v617, %v796
      %798 = vmatmul.f32.gmra.mxu0 %v711
      %v799 = vpop.f32.mrf.mxu0
      %v800 = vadd.f32 %v620, %v799
      %801 = vmatmul.f32.gmra.mxu0 %v713
      %v802 = vpop.f32.mrf.mxu0
      %v803 = vadd.f32 %v623, %v802
      %804 = vmatmul.f32.gmra.mxu0 %v715
      %v805 = vpop.f32.mrf.mxu0
      %v806 = vadd.f32 %v626, %v805
      %807 = vmatmul.f32.gmra.mxu0 %v717
      %v808 = vpop.f32.mrf.mxu0
      %v809 = vadd.f32 %v629, %v808
      %810 = vmatmul.f32.gmra.mxu0 %v719
      %v811 = vpop.f32.mrf.mxu0
      %v812 = vadd.f32 %v632, %v811
      %813 = vmatmul.f32.gmra.mxu0 %v721
      %v814 = vpop.f32.mrf.mxu0
      %v815 = vadd.f32 %v635, %v814
      %816 = vmatmul.f32.gmra.mxu0 %v723
      %v817 = vpop.f32.mrf.mxu0
      %v818 = vadd.f32 %v638, %v817
      %819 = vmatmul.f32.gmra.mxu0 %v725
      %v820 = vpop.f32.mrf.mxu0
      %v821 = vadd.f32 %v641, %v820
      %822 = vmatmul.f32.gmra.mxu0 %v727
      %v823 = vpop.f32.mrf.mxu0
      %v824 = vadd.f32 %v644, %v823
      %825 = vmatmul.f32.gmra.mxu0 %v729
      %v826 = vpop.f32.mrf.mxu0
      %v827 = vadd.f32 %v647, %v826
      %828 = vmatmul.f32.gmra.mxu0 %v731
      %v829 = vpop.f32.mrf.mxu0
      %v830 = vadd.f32 %v650, %v829
      %831 = vmatmul.f32.gmra.mxu0 %v733
      %v832 = vpop.f32.mrf.mxu0
      %v833 = vadd.f32 %v653, %v832
      %834 = vmatmul.f32.gmra.mxu0 %v735
      %v835 = vpop.f32.mrf.mxu0
      %v836 = vadd.f32 %v656, %v835
      %837 = vmatmul.f32.gmra.mxu0 %v737
      %v838 = vpop.f32.mrf.mxu0
      %v839 = vadd.f32 %v659, %v838
      %840 = vmatmul.f32.gmra.mxu0 %v739
      %v841 = vpop.f32.mrf.mxu0
      %v842 = vadd.f32 %v662, %v841
      %843 = vmatmul.f32.gmra.mxu0 %v741
      %v844 = vpop.f32.mrf.mxu0
      %v845 = vadd.f32 %v665, %v844
      %846 = vmatmul.f32.gmra.mxu0 %v743
      %v847 = vpop.f32.mrf.mxu0
      %v848 = vadd.f32 %v668, %v847
      %849 = vmatmul.f32.gmra.mxu0 %v745
      %v850 = vpop.f32.mrf.mxu0
      %v851 = vadd.f32 %v671, %v850
      %852 = vmatmul.f32.gmra.mxu0 %v747
      %v853 = vpop.f32.mrf.mxu0
      %v854 = vadd.f32 %v674, %v853
      %855 = vmatmul.f32.gmra.mxu0 %v749
      %v856 = vpop.f32.mrf.mxu0
      %v857 = vadd.f32 %v677, %v856
      %858 = vmatmul.f32.gmra.mxu0 %v751
      %v859 = vpop.f32.mrf.mxu0
      %v860 = vadd.f32 %v680, %v859
      %861 = vmatmul.f32.gmra.mxu0 %v753
      %v862 = vpop.f32.mrf.mxu0
      %v863 = vadd.f32 %v683, %v862
      %864 = vmatmul.f32.gmra.mxu0 %v755
      %v865 = vpop.f32.mrf.mxu0
      %v866 = vadd.f32 %v686, %v865
      %867 = vmatmul.f32.gmra.mxu0 %v757
      %v868 = vpop.f32.mrf.mxu0
      %v869 = vadd.f32 %v689, %v868
      %870 = vmatmul.f32.gmra.mxu0 %v759
      %v871 = vpop.f32.mrf.mxu0
      %v872 = vadd.f32 %v692, %v871
      %873 = vmatmul.f32.gmra.mxu0 %v761
      %v874 = vpop.f32.mrf.mxu0
      %v875 = vadd.f32 %v695, %v874
      %876 = vmatmul.f32.gmra.mxu0 %v763
      %v877 = vpop.f32.mrf.mxu0
      %v878 = vadd.f32 %v698, %v877
      %879 = vmatmul.f32.gmra.mxu0 %v765
      %v880 = vpop.f32.mrf.mxu0
      %v881 = vadd.f32 %v701, %v880
      %882 = vdwg.mxu0
      %vm883 = vcmask 1045504
      %v884 = vrot.slane %v339, 2
      %v885 = vrot.slane %v340, 2
      %v886 = vsel %vm883, %v884, %v885
      %v887 = vrot.slane %v341, 2
      %v888 = vsel %vm883, %v885, %v887
      %v889 = vrot.slane %v342, 2
      %v890 = vrot.slane %v343, 2
      %v891 = vsel %vm883, %v889, %v890
      %v892 = vrot.slane %v344, 2
      %v893 = vsel %vm883, %v890, %v892
      %v894 = vrot.slane %v345, 2
      %v895 = vrot.slane %v346, 2
      %v896 = vsel %vm883, %v894, %v895
      %v897 = vrot.slane %v347, 2
      %v898 = vsel %vm883, %v895, %v897
      %v899 = vrot.slane %v348, 2
      %v900 = vrot.slane %v349, 2
      %v901 = vsel %vm883, %v899, %v900
      %v902 = vrot.slane %v350, 2
      %v903 = vsel %vm883, %v900, %v902
      %v904 = vrot.slane %v351, 2
      %v905 = vrot.slane %v352, 2
      %v906 = vsel %vm883, %v904, %v905
      %v907 = vrot.slane %v353, 2
      %v908 = vsel %vm883, %v905, %v907
      %v909 = vrot.slane %v354, 2
      %v910 = vrot.slane %v355, 2
      %v911 = vsel %vm883, %v909, %v910
      %v912 = vrot.slane %v356, 2
      %v913 = vsel %vm883, %v910, %v912
      %v914 = vrot.slane %v357, 2
      %v915 = vrot.slane %v358, 2
      %v916 = vsel %vm883, %v914, %v915
      %v917 = vrot.slane %v359, 2
      %v918 = vsel %vm883, %v915, %v917
      %v919 = vrot.slane %v360, 2
      %v920 = vrot.slane %v361, 2
      %v921 = vsel %vm883, %v919, %v920
      %v922 = vrot.slane %v362, 2
      %v923 = vsel %vm883, %v920, %v922
      %v924 = vrot.slane %v363, 2
      %v925 = vrot.slane %v364, 2
      %v926 = vsel %vm883, %v924, %v925
      %v927 = vrot.slane %v365, 2
      %v928 = vsel %vm883, %v925, %v927
      %v929 = vrot.slane %v366, 2
      %v930 = vrot.slane %v367, 2
      %v931 = vsel %vm883, %v929, %v930
      %v932 = vrot.slane %v368, 2
      %v933 = vsel %vm883, %v930, %v932
      %v934 = vrot.slane %v369, 2
      %v935 = vrot.slane %v370, 2
      %v936 = vsel %vm883, %v934, %v935
      %v937 = vrot.slane %v371, 2
      %v938 = vsel %vm883, %v935, %v937
      %v939 = vrot.slane %v372, 2
      %v940 = vrot.slane %v373, 2
      %v941 = vsel %vm883, %v939, %v940
      %v942 = vrot.slane %v374, 2
      %v943 = vsel %vm883, %v940, %v942
      %v944 = vrot.slane %v375, 2
      %v945 = vrot.slane %v376, 2
      %v946 = vsel %vm883, %v944, %v945
      %v947 = vrot.slane %v377, 2
      %v948 = vsel %vm883, %v945, %v947
      %v949 = vrot.slane %v378, 2
      %v950 = vrot.slane %v379, 2
      %v951 = vsel %vm883, %v949, %v950
      %v952 = vrot.slane %v380, 2
      %v953 = vsel %vm883, %v950, %v952
      %v954 = vrot.slane %v381, 2
      %v955 = vrot.slane %v382, 2
      %v956 = vsel %vm883, %v954, %v955
      %v957 = vrot.slane %v383, 2
      %v958 = vsel %vm883, %v955, %v957
      %v959 = vrot.slane %v384, 2
      %v960 = vrot.slane %v385, 2
      %v961 = vsel %vm883, %v959, %v960
      %v962 = vrot.slane %v386, 2
      %v963 = vsel %vm883, %v960, %v962
      %v964 = vsel %vm243, %v886, 0
      %v966 = vsel %vm243, %v888, 0
      %v968 = vsel %vm243, %v891, 0
      %v970 = vsel %vm243, %v893, 0
      %v972 = vsel %vm243, %v896, 0
      %v974 = vsel %vm243, %v898, 0
      %v976 = vsel %vm243, %v901, 0
      %v978 = vsel %vm243, %v903, 0
      %v980 = vsel %vm243, %v906, 0
      %v982 = vsel %vm243, %v908, 0
      %v984 = vsel %vm243, %v911, 0
      %v986 = vsel %vm243, %v913, 0
      %v988 = vsel %vm243, %v916, 0
      %v990 = vsel %vm243, %v918, 0
      %v992 = vsel %vm243, %v921, 0
      %v994 = vsel %vm243, %v923, 0
      %v996 = vsel %vm243, %v926, 0
      %v998 = vsel %vm243, %v928, 0
      %v1000 = vsel %vm243, %v931, 0
      %v1002 = vsel %vm243, %v933, 0
      %v1004 = vsel %vm243, %v936, 0
      %v1006 = vsel %vm243, %v938, 0
      %v1008 = vsel %vm243, %v941, 0
      %v1010 = vsel %vm243, %v943, 0
      %v1012 = vsel %vm243, %v946, 0
      %v1014 = vsel %vm243, %v948, 0
      %v1016 = vsel %vm243, %v951, 0
      %v1018 = vsel %vm243, %v953, 0
      %v1020 = vsel %vm243, %v956, 0
      %v1022 = vsel %vm243, %v958, 0
      %v1024 = vsel %vm243, %v961, 0
      %v1026 = vsel %vm243, %v963, 0
      %v1029 = vsel %vm586, %v326, 0
      %1031 = vmatpush.msra.mxu0 0.0
      %1032 = vmatpush.msra.mxu0 0.0
      %1033 = vmatpush.msra.mxu0 0.0
      %1034 = vmatpush.msra.mxu0 0.0
      %1035 = vmatpush.msra.mxu0 0.0
      %1036 = vmatpush.msra.mxu0 0.0
      %1037 = vmatpush.msra.mxu0 0.0
      %1038 = vmatpush.msra.mxu0 0.0
      %1039 = vmatpush.msra.mxu0 0.0
      %1040 = vmatpush.msra.mxu0 0.0
      %1041 = vmatpush.msra.mxu0 0.0
      %1042 = vmatpush.msra.mxu0 0.0
      %1043 = vmatpush.msra.mxu0 0.0
      %1044 = vmatpush.msra.mxu0 0.0
      %1045 = vmatpush.msra.mxu0 0.0
      %1046 = vmatpush.msra.mxu0 %v1029
      %1047 = vmatmul.f32.gmra.mxu0 %v964
      %v1048 = vpop.f32.mrf.mxu0
      %v1049 = vadd.f32 0.0, %v1048
      %1050 = vmatmul.f32.gmra.mxu0 %v966
      %v1051 = vpop.f32.mrf.mxu0
      %v1052 = vadd.f32 0.0, %v1051
      %1053 = vmatmul.f32.gmra.mxu0 %v968
      %v1054 = vpop.f32.mrf.mxu0
      %v1055 = vadd.f32 0.0, %v1054
      %1056 = vmatmul.f32.gmra.mxu0 %v970
      %v1057 = vpop.f32.mrf.mxu0
      %v1058 = vadd.f32 0.0, %v1057
      %1059 = vmatmul.f32.gmra.mxu0 %v972
      %v1060 = vpop.f32.mrf.mxu0
      %v1061 = vadd.f32 0.0, %v1060
      %1062 = vmatmul.f32.gmra.mxu0 %v974
      %v1063 = vpop.f32.mrf.mxu0
      %v1064 = vadd.f32 0.0, %v1063
      %1065 = vmatmul.f32.gmra.mxu0 %v976
      %v1066 = vpop.f32.mrf.mxu0
      %v1067 = vadd.f32 0.0, %v1066
      %1068 = vmatmul.f32.gmra.mxu0 %v978
      %v1069 = vpop.f32.mrf.mxu0
      %v1070 = vadd.f32 0.0, %v1069
      %1071 = vmatmul.f32.gmra.mxu0 %v980
      %v1072 = vpop.f32.mrf.mxu0
      %v1073 = vadd.f32 0.0, %v1072
      %1074 = vmatmul.f32.gmra.mxu0 %v982
      %v1075 = vpop.f32.mrf.mxu0
      %v1076 = vadd.f32 0.0, %v1075
      %1077 = vmatmul.f32.gmra.mxu0 %v984
      %v1078 = vpop.f32.mrf.mxu0
      %v1079 = vadd.f32 0.0, %v1078
      %1080 = vmatmul.f32.gmra.mxu0 %v986
      %v1081 = vpop.f32.mrf.mxu0
      %v1082 = vadd.f32 0.0, %v1081
      %1083 = vmatmul.f32.gmra.mxu0 %v988
      %v1084 = vpop.f32.mrf.mxu0
      %v1085 = vadd.f32 0.0, %v1084
      %1086 = vmatmul.f32.gmra.mxu0 %v990
      %v1087 = vpop.f32.mrf.mxu0
      %v1088 = vadd.f32 0.0, %v1087
      %1089 = vmatmul.f32.gmra.mxu0 %v992
      %v1090 = vpop.f32.mrf.mxu0
      %v1091 = vadd.f32 0.0, %v1090
      %1092 = vmatmul.f32.gmra.mxu0 %v994
      %v1093 = vpop.f32.mrf.mxu0
      %v1094 = vadd.f32 0.0, %v1093
      %1095 = vmatmul.f32.gmra.mxu0 %v996
      %v1096 = vpop.f32.mrf.mxu0
      %v1097 = vadd.f32 0.0, %v1096
      %1098 = vmatmul.f32.gmra.mxu0 %v998
      %v1099 = vpop.f32.mrf.mxu0
      %v1100 = vadd.f32 0.0, %v1099
      %1101 = vmatmul.f32.gmra.mxu0 %v1000
      %v1102 = vpop.f32.mrf.mxu0
      %v1103 = vadd.f32 0.0, %v1102
      %1104 = vmatmul.f32.gmra.mxu0 %v1002
      %v1105 = vpop.f32.mrf.mxu0
      %v1106 = vadd.f32 0.0, %v1105
      %1107 = vmatmul.f32.gmra.mxu0 %v1004
      %v1108 = vpop.f32.mrf.mxu0
      %v1109 = vadd.f32 0.0, %v1108
      %1110 = vmatmul.f32.gmra.mxu0 %v1006
      %v1111 = vpop.f32.mrf.mxu0
      %v1112 = vadd.f32 0.0, %v1111
      %1113 = vmatmul.f32.gmra.mxu0 %v1008
      %v1114 = vpop.f32.mrf.mxu0
      %v1115 = vadd.f32 0.0, %v1114
      %1116 = vmatmul.f32.gmra.mxu0 %v1010
      %v1117 = vpop.f32.mrf.mxu0
      %v1118 = vadd.f32 0.0, %v1117
      %1119 = vmatmul.f32.gmra.mxu0 %v1012
      %v1120 = vpop.f32.mrf.mxu0
      %v1121 = vadd.f32 0.0, %v1120
      %1122 = vmatmul.f32.gmra.mxu0 %v1014
      %v1123 = vpop.f32.mrf.mxu0
      %v1124 = vadd.f32 0.0, %v1123
      %1125 = vmatmul.f32.gmra.mxu0 %v1016
      %v1126 = vpop.f32.mrf.mxu0
      %v1127 = vadd.f32 0.0, %v1126
      %1128 = vmatmul.f32.gmra.mxu0 %v1018
      %v1129 = vpop.f32.mrf.mxu0
      %v1130 = vadd.f32 0.0, %v1129
      %1131 = vmatmul.f32.gmra.mxu0 %v1020
      %v1132 = vpop.f32.mrf.mxu0
      %v1133 = vadd.f32 0.0, %v1132
      %1134 = vmatmul.f32.gmra.mxu0 %v1022
      %v1135 = vpop.f32.mrf.mxu0
      %v1136 = vadd.f32 0.0, %v1135
      %1137 = vmatmul.f32.gmra.mxu0 %v1024
      %v1138 = vpop.f32.mrf.mxu0
      %v1139 = vadd.f32 0.0, %v1138
      %1140 = vmatmul.f32.gmra.mxu0 %v1026
      %v1141 = vpop.f32.mrf.mxu0
      %v1142 = vadd.f32 0.0, %v1141
      %1143 = vdwg.mxu0
      %v1144 = vadd.f32 %v788, %v1049
      %v1145 = vadd.f32 %v791, %v1052
      %v1146 = vadd.f32 %v794, %v1055
      %v1147 = vadd.f32 %v797, %v1058
      %v1148 = vadd.f32 %v800, %v1061
      %v1149 = vadd.f32 %v803, %v1064
      %v1150 = vadd.f32 %v806, %v1067
      %v1151 = vadd.f32 %v809, %v1070
      %v1152 = vadd.f32 %v812, %v1073
      %v1153 = vadd.f32 %v815, %v1076
      %v1154 = vadd.f32 %v818, %v1079
      %v1155 = vadd.f32 %v821, %v1082
      %v1156 = vadd.f32 %v824, %v1085
      %v1157 = vadd.f32 %v827, %v1088
      %v1158 = vadd.f32 %v830, %v1091
      %v1159 = vadd.f32 %v833, %v1094
      %v1160 = vadd.f32 %v836, %v1097
      %v1161 = vadd.f32 %v839, %v1100
      %v1162 = vadd.f32 %v842, %v1103
      %v1163 = vadd.f32 %v845, %v1106
      %v1164 = vadd.f32 %v848, %v1109
      %v1165 = vadd.f32 %v851, %v1112
      %v1166 = vadd.f32 %v854, %v1115
      %v1167 = vadd.f32 %v857, %v1118
      %v1168 = vadd.f32 %v860, %v1121
      %v1169 = vadd.f32 %v863, %v1124
      %v1170 = vadd.f32 %v866, %v1127
      %v1171 = vadd.f32 %v869, %v1130
      %v1172 = vadd.f32 %v872, %v1133
      %v1173 = vadd.f32 %v875, %v1136
      %v1174 = vadd.f32 %v878, %v1139
      %v1175 = vadd.f32 %v881, %v1142
      %v1177 = vsel %vm243, %v387, 0
      %v1180 = vsel %vm243, %v388, 0
      %v1183 = vsel %vm586, %v328, 0
      %1185 = vmatpush.msra.mxu0 0.0
      %1186 = vmatpush.msra.mxu0 0.0
      %1187 = vmatpush.msra.mxu0 0.0
      %1188 = vmatpush.msra.mxu0 0.0
      %1189 = vmatpush.msra.mxu0 0.0
      %1190 = vmatpush.msra.mxu0 0.0
      %1191 = vmatpush.msra.mxu0 0.0
      %1192 = vmatpush.msra.mxu0 0.0
      %1193 = vmatpush.msra.mxu0 0.0
      %1194 = vmatpush.msra.mxu0 0.0
      %1195 = vmatpush.msra.mxu0 0.0
      %1196 = vmatpush.msra.mxu0 0.0
      %1197 = vmatpush.msra.mxu0 0.0
      %1198 = vmatpush.msra.mxu0 0.0
      %1199 = vmatpush.msra.mxu0 0.0
      %1200 = vmatpush.msra.mxu0 %v1183
      %1201 = vmatmul.f32.gmra.mxu0 %v707
      %v1202 = vpop.f32.mrf.mxu0
      %v1203 = vadd.f32 0.0, %v1202
      %1204 = vmatmul.f32.gmra.mxu0 %v709
      %v1205 = vpop.f32.mrf.mxu0
      %v1206 = vadd.f32 0.0, %v1205
      %1207 = vmatmul.f32.gmra.mxu0 %v711
      %v1208 = vpop.f32.mrf.mxu0
      %v1209 = vadd.f32 0.0, %v1208
      %1210 = vmatmul.f32.gmra.mxu0 %v713
      %v1211 = vpop.f32.mrf.mxu0
      %v1212 = vadd.f32 0.0, %v1211
      %1213 = vmatmul.f32.gmra.mxu0 %v715
      %v1214 = vpop.f32.mrf.mxu0
      %v1215 = vadd.f32 0.0, %v1214
      %1216 = vmatmul.f32.gmra.mxu0 %v717
      %v1217 = vpop.f32.mrf.mxu0
      %v1218 = vadd.f32 0.0, %v1217
      %1219 = vmatmul.f32.gmra.mxu0 %v719
      %v1220 = vpop.f32.mrf.mxu0
      %v1221 = vadd.f32 0.0, %v1220
      %1222 = vmatmul.f32.gmra.mxu0 %v721
      %v1223 = vpop.f32.mrf.mxu0
      %v1224 = vadd.f32 0.0, %v1223
      %1225 = vmatmul.f32.gmra.mxu0 %v723
      %v1226 = vpop.f32.mrf.mxu0
      %v1227 = vadd.f32 0.0, %v1226
      %1228 = vmatmul.f32.gmra.mxu0 %v725
      %v1229 = vpop.f32.mrf.mxu0
      %v1230 = vadd.f32 0.0, %v1229
      %1231 = vmatmul.f32.gmra.mxu0 %v727
      %v1232 = vpop.f32.mrf.mxu0
      %v1233 = vadd.f32 0.0, %v1232
      %1234 = vmatmul.f32.gmra.mxu0 %v729
      %v1235 = vpop.f32.mrf.mxu0
      %v1236 = vadd.f32 0.0, %v1235
      %1237 = vmatmul.f32.gmra.mxu0 %v731
      %v1238 = vpop.f32.mrf.mxu0
      %v1239 = vadd.f32 0.0, %v1238
      %1240 = vmatmul.f32.gmra.mxu0 %v733
      %v1241 = vpop.f32.mrf.mxu0
      %v1242 = vadd.f32 0.0, %v1241
      %1243 = vmatmul.f32.gmra.mxu0 %v735
      %v1244 = vpop.f32.mrf.mxu0
      %v1245 = vadd.f32 0.0, %v1244
      %1246 = vmatmul.f32.gmra.mxu0 %v737
      %v1247 = vpop.f32.mrf.mxu0
      %v1248 = vadd.f32 0.0, %v1247
      %1249 = vmatmul.f32.gmra.mxu0 %v739
      %v1250 = vpop.f32.mrf.mxu0
      %v1251 = vadd.f32 0.0, %v1250
      %1252 = vmatmul.f32.gmra.mxu0 %v741
      %v1253 = vpop.f32.mrf.mxu0
      %v1254 = vadd.f32 0.0, %v1253
      %1255 = vmatmul.f32.gmra.mxu0 %v743
      %v1256 = vpop.f32.mrf.mxu0
      %v1257 = vadd.f32 0.0, %v1256
      %1258 = vmatmul.f32.gmra.mxu0 %v745
      %v1259 = vpop.f32.mrf.mxu0
      %v1260 = vadd.f32 0.0, %v1259
      %1261 = vmatmul.f32.gmra.mxu0 %v747
      %v1262 = vpop.f32.mrf.mxu0
      %v1263 = vadd.f32 0.0, %v1262
      %1264 = vmatmul.f32.gmra.mxu0 %v749
      %v1265 = vpop.f32.mrf.mxu0
      %v1266 = vadd.f32 0.0, %v1265
      %1267 = vmatmul.f32.gmra.mxu0 %v751
      %v1268 = vpop.f32.mrf.mxu0
      %v1269 = vadd.f32 0.0, %v1268
      %1270 = vmatmul.f32.gmra.mxu0 %v753
      %v1271 = vpop.f32.mrf.mxu0
      %v1272 = vadd.f32 0.0, %v1271
      %1273 = vmatmul.f32.gmra.mxu0 %v755
      %v1274 = vpop.f32.mrf.mxu0
      %v1275 = vadd.f32 0.0, %v1274
      %1276 = vmatmul.f32.gmra.mxu0 %v757
      %v1277 = vpop.f32.mrf.mxu0
      %v1278 = vadd.f32 0.0, %v1277
      %1279 = vmatmul.f32.gmra.mxu0 %v759
      %v1280 = vpop.f32.mrf.mxu0
      %v1281 = vadd.f32 0.0, %v1280
      %1282 = vmatmul.f32.gmra.mxu0 %v761
      %v1283 = vpop.f32.mrf.mxu0
      %v1284 = vadd.f32 0.0, %v1283
      %1285 = vmatmul.f32.gmra.mxu0 %v763
      %v1286 = vpop.f32.mrf.mxu0
      %v1287 = vadd.f32 0.0, %v1286
      %1288 = vmatmul.f32.gmra.mxu0 %v765
      %v1289 = vpop.f32.mrf.mxu0
      %v1290 = vadd.f32 0.0, %v1289
      %1291 = vmatmul.f32.gmra.mxu0 %v1177
      %v1292 = vpop.f32.mrf.mxu0
      %v1293 = vadd.f32 0.0, %v1292
      %1294 = vmatmul.f32.gmra.mxu0 %v1180
      %v1295 = vpop.f32.mrf.mxu0
      %v1296 = vadd.f32 0.0, %v1295
      %1297 = vdwg.mxu0
      %v1298 = vadd.f32 %v1144, %v1203
      %v1299 = vadd.f32 %v1145, %v1206
      %v1300 = vadd.f32 %v1146, %v1209
      %v1301 = vadd.f32 %v1147, %v1212
      %v1302 = vadd.f32 %v1148, %v1215
      %v1303 = vadd.f32 %v1149, %v1218
      %v1304 = vadd.f32 %v1150, %v1221
      %v1305 = vadd.f32 %v1151, %v1224
      %v1306 = vadd.f32 %v1152, %v1227
      %v1307 = vadd.f32 %v1153, %v1230
      %v1308 = vadd.f32 %v1154, %v1233
      %v1309 = vadd.f32 %v1155, %v1236
      %v1310 = vadd.f32 %v1156, %v1239
      %v1311 = vadd.f32 %v1157, %v1242
      %v1312 = vadd.f32 %v1158, %v1245
      %v1313 = vadd.f32 %v1159, %v1248
      %v1314 = vadd.f32 %v1160, %v1251
      %v1315 = vadd.f32 %v1161, %v1254
      %v1316 = vadd.f32 %v1162, %v1257
      %v1317 = vadd.f32 %v1163, %v1260
      %v1318 = vadd.f32 %v1164, %v1263
      %v1319 = vadd.f32 %v1165, %v1266
      %v1320 = vadd.f32 %v1166, %v1269
      %v1321 = vadd.f32 %v1167, %v1272
      %v1322 = vadd.f32 %v1168, %v1275
      %v1323 = vadd.f32 %v1169, %v1278
      %v1324 = vadd.f32 %v1170, %v1281
      %v1325 = vadd.f32 %v1171, %v1284
      %v1326 = vadd.f32 %v1172, %v1287
      %v1327 = vadd.f32 %v1173, %v1290
      %v1328 = vadd.f32 %v1174, %v1293
      %v1329 = vadd.f32 %v1175, %v1296
      %v1331 = vrot.slane %v387, 1
      %v1332 = vrot.slane %v388, 1
      %v1333 = vsel %vm441, %v1331, %v1332
      %v1334 = vrot.slane %v389, 1
      %v1335 = vsel %vm441, %v1332, %v1334
      %v1336 = vsel %vm243, %v1333, 0
      %v1338 = vsel %vm243, %v1335, 0
      %v1341 = vsel %vm586, %v330, 0
      %1343 = vmatpush.msra.mxu0 0.0
      %1344 = vmatpush.msra.mxu0 0.0
      %1345 = vmatpush.msra.mxu0 0.0
      %1346 = vmatpush.msra.mxu0 0.0
      %1347 = vmatpush.msra.mxu0 0.0
      %1348 = vmatpush.msra.mxu0 0.0
      %1349 = vmatpush.msra.mxu0 0.0
      %1350 = vmatpush.msra.mxu0 0.0
      %1351 = vmatpush.msra.mxu0 0.0
      %1352 = vmatpush.msra.mxu0 0.0
      %1353 = vmatpush.msra.mxu0 0.0
      %1354 = vmatpush.msra.mxu0 0.0
      %1355 = vmatpush.msra.mxu0 0.0
      %1356 = vmatpush.msra.mxu0 0.0
      %1357 = vmatpush.msra.mxu0 0.0
      %1358 = vmatpush.msra.mxu0 %v1341
      %1359 = vmatmul.f32.gmra.mxu0 %v526
      %v1360 = vpop.f32.mrf.mxu0
      %v1361 = vadd.f32 0.0, %v1360
      %1362 = vmatmul.f32.gmra.mxu0 %v528
      %v1363 = vpop.f32.mrf.mxu0
      %v1364 = vadd.f32 0.0, %v1363
      %1365 = vmatmul.f32.gmra.mxu0 %v530
      %v1366 = vpop.f32.mrf.mxu0
      %v1367 = vadd.f32 0.0, %v1366
      %1368 = vmatmul.f32.gmra.mxu0 %v532
      %v1369 = vpop.f32.mrf.mxu0
      %v1370 = vadd.f32 0.0, %v1369
      %1371 = vmatmul.f32.gmra.mxu0 %v534
      %v1372 = vpop.f32.mrf.mxu0
      %v1373 = vadd.f32 0.0, %v1372
      %1374 = vmatmul.f32.gmra.mxu0 %v536
      %v1375 = vpop.f32.mrf.mxu0
      %v1376 = vadd.f32 0.0, %v1375
      %1377 = vmatmul.f32.gmra.mxu0 %v538
      %v1378 = vpop.f32.mrf.mxu0
      %v1379 = vadd.f32 0.0, %v1378
      %1380 = vmatmul.f32.gmra.mxu0 %v540
      %v1381 = vpop.f32.mrf.mxu0
      %v1382 = vadd.f32 0.0, %v1381
      %1383 = vmatmul.f32.gmra.mxu0 %v542
      %v1384 = vpop.f32.mrf.mxu0
      %v1385 = vadd.f32 0.0, %v1384
      %1386 = vmatmul.f32.gmra.mxu0 %v544
      %v1387 = vpop.f32.mrf.mxu0
      %v1388 = vadd.f32 0.0, %v1387
      %1389 = vmatmul.f32.gmra.mxu0 %v546
      %v1390 = vpop.f32.mrf.mxu0
      %v1391 = vadd.f32 0.0, %v1390
      %1392 = vmatmul.f32.gmra.mxu0 %v548
      %v1393 = vpop.f32.mrf.mxu0
      %v1394 = vadd.f32 0.0, %v1393
      %1395 = vmatmul.f32.gmra.mxu0 %v550
      %v1396 = vpop.f32.mrf.mxu0
      %v1397 = vadd.f32 0.0, %v1396
      %1398 = vmatmul.f32.gmra.mxu0 %v552
      %v1399 = vpop.f32.mrf.mxu0
      %v1400 = vadd.f32 0.0, %v1399
      %1401 = vmatmul.f32.gmra.mxu0 %v554
      %v1402 = vpop.f32.mrf.mxu0
      %v1403 = vadd.f32 0.0, %v1402
      %1404 = vmatmul.f32.gmra.mxu0 %v556
      %v1405 = vpop.f32.mrf.mxu0
      %v1406 = vadd.f32 0.0, %v1405
      %1407 = vmatmul.f32.gmra.mxu0 %v558
      %v1408 = vpop.f32.mrf.mxu0
      %v1409 = vadd.f32 0.0, %v1408
      %1410 = vmatmul.f32.gmra.mxu0 %v560
      %v1411 = vpop.f32.mrf.mxu0
      %v1412 = vadd.f32 0.0, %v1411
      %1413 = vmatmul.f32.gmra.mxu0 %v562
      %v1414 = vpop.f32.mrf.mxu0
      %v1415 = vadd.f32 0.0, %v1414
      %1416 = vmatmul.f32.gmra.mxu0 %v564
      %v1417 = vpop.f32.mrf.mxu0
      %v1418 = vadd.f32 0.0, %v1417
      %1419 = vmatmul.f32.gmra.mxu0 %v566
      %v1420 = vpop.f32.mrf.mxu0
      %v1421 = vadd.f32 0.0, %v1420
      %1422 = vmatmul.f32.gmra.mxu0 %v568
      %v1423 = vpop.f32.mrf.mxu0
      %v1424 = vadd.f32 0.0, %v1423
      %1425 = vmatmul.f32.gmra.mxu0 %v570
      %v1426 = vpop.f32.mrf.mxu0
      %v1427 = vadd.f32 0.0, %v1426
      %1428 = vmatmul.f32.gmra.mxu0 %v572
      %v1429 = vpop.f32.mrf.mxu0
      %v1430 = vadd.f32 0.0, %v1429
      %1431 = vmatmul.f32.gmra.mxu0 %v574
      %v1432 = vpop.f32.mrf.mxu0
      %v1433 = vadd.f32 0.0, %v1432
      %1434 = vmatmul.f32.gmra.mxu0 %v576
      %v1435 = vpop.f32.mrf.mxu0
      %v1436 = vadd.f32 0.0, %v1435
      %1437 = vmatmul.f32.gmra.mxu0 %v578
      %v1438 = vpop.f32.mrf.mxu0
      %v1439 = vadd.f32 0.0, %v1438
      %1440 = vmatmul.f32.gmra.mxu0 %v580
      %v1441 = vpop.f32.mrf.mxu0
      %v1442 = vadd.f32 0.0, %v1441
      %1443 = vmatmul.f32.gmra.mxu0 %v582
      %v1444 = vpop.f32.mrf.mxu0
      %v1445 = vadd.f32 0.0, %v1444
      %1446 = vmatmul.f32.gmra.mxu0 %v584
      %v1447 = vpop.f32.mrf.mxu0
      %v1448 = vadd.f32 0.0, %v1447
      %1449 = vmatmul.f32.gmra.mxu0 %v1336
      %v1450 = vpop.f32.mrf.mxu0
      %v1451 = vadd.f32 0.0, %v1450
      %1452 = vmatmul.f32.gmra.mxu0 %v1338
      %v1453 = vpop.f32.mrf.mxu0
      %v1454 = vadd.f32 0.0, %v1453
      %1455 = vdwg.mxu0
      %v1456 = vadd.f32 %v1298, %v1361
      %v1457 = vadd.f32 %v1299, %v1364
      %v1458 = vadd.f32 %v1300, %v1367
      %v1459 = vadd.f32 %v1301, %v1370
      %v1460 = vadd.f32 %v1302, %v1373
      %v1461 = vadd.f32 %v1303, %v1376
      %v1462 = vadd.f32 %v1304, %v1379
      %v1463 = vadd.f32 %v1305, %v1382
      %v1464 = vadd.f32 %v1306, %v1385
      %v1465 = vadd.f32 %v1307, %v1388
      %v1466 = vadd.f32 %v1308, %v1391
      %v1467 = vadd.f32 %v1309, %v1394
      %v1468 = vadd.f32 %v1310, %v1397
      %v1469 = vadd.f32 %v1311, %v1400
      %v1470 = vadd.f32 %v1312, %v1403
      %v1471 = vadd.f32 %v1313, %v1406
      %v1472 = vadd.f32 %v1314, %v1409
      %v1473 = vadd.f32 %v1315, %v1412
      %v1474 = vadd.f32 %v1316, %v1415
      %v1475 = vadd.f32 %v1317, %v1418
      %v1476 = vadd.f32 %v1318, %v1421
      %v1477 = vadd.f32 %v1319, %v1424
      %v1478 = vadd.f32 %v1320, %v1427
      %v1479 = vadd.f32 %v1321, %v1430
      %v1480 = vadd.f32 %v1322, %v1433
      %v1481 = vadd.f32 %v1323, %v1436
      %v1482 = vadd.f32 %v1324, %v1439
      %v1483 = vadd.f32 %v1325, %v1442
      %v1484 = vadd.f32 %v1326, %v1445
      %v1485 = vadd.f32 %v1327, %v1448
      %v1486 = vadd.f32 %v1328, %v1451
      %v1487 = vadd.f32 %v1329, %v1454
      %v1488 = vrot.slane %v387, 2
      %v1489 = vrot.slane %v388, 2
      %v1490 = vsel %vm883, %v1488, %v1489
      %v1491 = vrot.slane %v389, 2
      %v1492 = vsel %vm883, %v1489, %v1491
      %v1493 = vsel %vm243, %v1490, 0
      %v1495 = vsel %vm243, %v1492, 0
      %v1498 = vsel %vm586, %v332, 0
      %1500 = vmatpush.msra.mxu0 0.0
      %1501 = vmatpush.msra.mxu0 0.0
      %1502 = vmatpush.msra.mxu0 0.0
      %1503 = vmatpush.msra.mxu0 0.0
      %1504 = vmatpush.msra.mxu0 0.0
      %1505 = vmatpush.msra.mxu0 0.0
      %1506 = vmatpush.msra.mxu0 0.0
      %1507 = vmatpush.msra.mxu0 0.0
      %1508 = vmatpush.msra.mxu0 0.0
      %1509 = vmatpush.msra.mxu0 0.0
      %1510 = vmatpush.msra.mxu0 0.0
      %1511 = vmatpush.msra.mxu0 0.0
      %1512 = vmatpush.msra.mxu0 0.0
      %1513 = vmatpush.msra.mxu0 0.0
      %1514 = vmatpush.msra.mxu0 0.0
      %1515 = vmatpush.msra.mxu0 %v1498
      %1516 = vmatmul.f32.gmra.mxu0 %v968
      %v1517 = vpop.f32.mrf.mxu0
      %v1518 = vadd.f32 0.0, %v1517
      %1519 = vmatmul.f32.gmra.mxu0 %v970
      %v1520 = vpop.f32.mrf.mxu0
      %v1521 = vadd.f32 0.0, %v1520
      %1522 = vmatmul.f32.gmra.mxu0 %v972
      %v1523 = vpop.f32.mrf.mxu0
      %v1524 = vadd.f32 0.0, %v1523
      %1525 = vmatmul.f32.gmra.mxu0 %v974
      %v1526 = vpop.f32.mrf.mxu0
      %v1527 = vadd.f32 0.0, %v1526
      %1528 = vmatmul.f32.gmra.mxu0 %v976
      %v1529 = vpop.f32.mrf.mxu0
      %v1530 = vadd.f32 0.0, %v1529
      %1531 = vmatmul.f32.gmra.mxu0 %v978
      %v1532 = vpop.f32.mrf.mxu0
      %v1533 = vadd.f32 0.0, %v1532
      %1534 = vmatmul.f32.gmra.mxu0 %v980
      %v1535 = vpop.f32.mrf.mxu0
      %v1536 = vadd.f32 0.0, %v1535
      %1537 = vmatmul.f32.gmra.mxu0 %v982
      %v1538 = vpop.f32.mrf.mxu0
      %v1539 = vadd.f32 0.0, %v1538
      %1540 = vmatmul.f32.gmra.mxu0 %v984
      %v1541 = vpop.f32.mrf.mxu0
      %v1542 = vadd.f32 0.0, %v1541
      %1543 = vmatmul.f32.gmra.mxu0 %v986
      %v1544 = vpop.f32.mrf.mxu0
      %v1545 = vadd.f32 0.0, %v1544
      %1546 = vmatmul.f32.gmra.mxu0 %v988
      %v1547 = vpop.f32.mrf.mxu0
      %v1548 = vadd.f32 0.0, %v1547
      %1549 = vmatmul.f32.gmra.mxu0 %v990
      %v1550 = vpop.f32.mrf.mxu0
      %v1551 = vadd.f32 0.0, %v1550
      %1552 = vmatmul.f32.gmra.mxu0 %v992
      %v1553 = vpop.f32.mrf.mxu0
      %v1554 = vadd.f32 0.0, %v1553
      %1555 = vmatmul.f32.gmra.mxu0 %v994
      %v1556 = vpop.f32.mrf.mxu0
      %v1557 = vadd.f32 0.0, %v1556
      %1558 = vmatmul.f32.gmra.mxu0 %v996
      %v1559 = vpop.f32.mrf.mxu0
      %v1560 = vadd.f32 0.0, %v1559
      %1561 = vmatmul.f32.gmra.mxu0 %v998
      %v1562 = vpop.f32.mrf.mxu0
      %v1563 = vadd.f32 0.0, %v1562
      %1564 = vmatmul.f32.gmra.mxu0 %v1000
      %v1565 = vpop.f32.mrf.mxu0
      %v1566 = vadd.f32 0.0, %v1565
      %1567 = vmatmul.f32.gmra.mxu0 %v1002
      %v1568 = vpop.f32.mrf.mxu0
      %v1569 = vadd.f32 0.0, %v1568
      %1570 = vmatmul.f32.gmra.mxu0 %v1004
      %v1571 = vpop.f32.mrf.mxu0
      %v1572 = vadd.f32 0.0, %v1571
      %1573 = vmatmul.f32.gmra.mxu0 %v1006
      %v1574 = vpop.f32.mrf.mxu0
      %v1575 = vadd.f32 0.0, %v1574
      %1576 = vmatmul.f32.gmra.mxu0 %v1008
      %v1577 = vpop.f32.mrf.mxu0
      %v1578 = vadd.f32 0.0, %v1577
      %1579 = vmatmul.f32.gmra.mxu0 %v1010
      %v1580 = vpop.f32.mrf.mxu0
      %v1581 = vadd.f32 0.0, %v1580
      %1582 = vmatmul.f32.gmra.mxu0 %v1012
      %v1583 = vpop.f32.mrf.mxu0
      %v1584 = vadd.f32 0.0, %v1583
      %1585 = vmatmul.f32.gmra.mxu0 %v1014
      %v1586 = vpop.f32.mrf.mxu0
      %v1587 = vadd.f32 0.0, %v1586
      %1588 = vmatmul.f32.gmra.mxu0 %v1016
      %v1589 = vpop.f32.mrf.mxu0
      %v1590 = vadd.f32 0.0, %v1589
      %1591 = vmatmul.f32.gmra.mxu0 %v1018
      %v1592 = vpop.f32.mrf.mxu0
      %v1593 = vadd.f32 0.0, %v1592
      %1594 = vmatmul.f32.gmra.mxu0 %v1020
      %v1595 = vpop.f32.mrf.mxu0
      %v1596 = vadd.f32 0.0, %v1595
      %1597 = vmatmul.f32.gmra.mxu0 %v1022
      %v1598 = vpop.f32.mrf.mxu0
      %v1599 = vadd.f32 0.0, %v1598
      %1600 = vmatmul.f32.gmra.mxu0 %v1024
      %v1601 = vpop.f32.mrf.mxu0
      %v1602 = vadd.f32 0.0, %v1601
      %1603 = vmatmul.f32.gmra.mxu0 %v1026
      %v1604 = vpop.f32.mrf.mxu0
      %v1605 = vadd.f32 0.0, %v1604
      %1606 = vmatmul.f32.gmra.mxu0 %v1493
      %v1607 = vpop.f32.mrf.mxu0
      %v1608 = vadd.f32 0.0, %v1607
      %1609 = vmatmul.f32.gmra.mxu0 %v1495
      %v1610 = vpop.f32.mrf.mxu0
      %v1611 = vadd.f32 0.0, %v1610
      %1612 = vdwg.mxu0
      %v1613 = vadd.f32 %v1456, %v1518
      %v1614 = vadd.f32 %v1457, %v1521
      %v1615 = vadd.f32 %v1458, %v1524
      %v1616 = vadd.f32 %v1459, %v1527
      %v1617 = vadd.f32 %v1460, %v1530
      %v1618 = vadd.f32 %v1461, %v1533
      %v1619 = vadd.f32 %v1462, %v1536
      %v1620 = vadd.f32 %v1463, %v1539
      %v1621 = vadd.f32 %v1464, %v1542
      %v1622 = vadd.f32 %v1465, %v1545
      %v1623 = vadd.f32 %v1466, %v1548
      %v1624 = vadd.f32 %v1467, %v1551
      %v1625 = vadd.f32 %v1468, %v1554
      %v1626 = vadd.f32 %v1469, %v1557
      %v1627 = vadd.f32 %v1470, %v1560
      %v1628 = vadd.f32 %v1471, %v1563
      %v1629 = vadd.f32 %v1472, %v1566
      %v1630 = vadd.f32 %v1473, %v1569
      %v1631 = vadd.f32 %v1474, %v1572
      %v1632 = vadd.f32 %v1475, %v1575
      %v1633 = vadd.f32 %v1476, %v1578
      %v1634 = vadd.f32 %v1477, %v1581
      %v1635 = vadd.f32 %v1478, %v1584
      %v1636 = vadd.f32 %v1479, %v1587
      %v1637 = vadd.f32 %v1480, %v1590
      %v1638 = vadd.f32 %v1481, %v1593
      %v1639 = vadd.f32 %v1482, %v1596
      %v1640 = vadd.f32 %v1483, %v1599
      %v1641 = vadd.f32 %v1484, %v1602
      %v1642 = vadd.f32 %v1485, %v1605
      %v1643 = vadd.f32 %v1486, %v1608
      %v1644 = vadd.f32 %v1487, %v1611
      %v1646 = vsel %vm243, %v390, 0
      %v1649 = vsel %vm243, %v391, 0
      %v1652 = vsel %vm586, %v334, 0
      %1654 = vmatpush.msra.mxu0 0.0
      %1655 = vmatpush.msra.mxu0 0.0
      %1656 = vmatpush.msra.mxu0 0.0
      %1657 = vmatpush.msra.mxu0 0.0
      %1658 = vmatpush.msra.mxu0 0.0
      %1659 = vmatpush.msra.mxu0 0.0
      %1660 = vmatpush.msra.mxu0 0.0
      %1661 = vmatpush.msra.mxu0 0.0
      %1662 = vmatpush.msra.mxu0 0.0
      %1663 = vmatpush.msra.mxu0 0.0
      %1664 = vmatpush.msra.mxu0 0.0
      %1665 = vmatpush.msra.mxu0 0.0
      %1666 = vmatpush.msra.mxu0 0.0
      %1667 = vmatpush.msra.mxu0 0.0
      %1668 = vmatpush.msra.mxu0 0.0
      %1669 = vmatpush.msra.mxu0 %v1652
      %1670 = vmatmul.f32.gmra.mxu0 %v711
      %v1671 = vpop.f32.mrf.mxu0
      %v1672 = vadd.f32 0.0, %v1671
      %1673 = vmatmul.f32.gmra.mxu0 %v713
      %v1674 = vpop.f32.mrf.mxu0
      %v1675 = vadd.f32 0.0, %v1674
      %1676 = vmatmul.f32.gmra.mxu0 %v715
      %v1677 = vpop.f32.mrf.mxu0
      %v1678 = vadd.f32 0.0, %v1677
      %1679 = vmatmul.f32.gmra.mxu0 %v717
      %v1680 = vpop.f32.mrf.mxu0
      %v1681 = vadd.f32 0.0, %v1680
      %1682 = vmatmul.f32.gmra.mxu0 %v719
      %v1683 = vpop.f32.mrf.mxu0
      %v1684 = vadd.f32 0.0, %v1683
      %1685 = vmatmul.f32.gmra.mxu0 %v721
      %v1686 = vpop.f32.mrf.mxu0
      %v1687 = vadd.f32 0.0, %v1686
      %1688 = vmatmul.f32.gmra.mxu0 %v723
      %v1689 = vpop.f32.mrf.mxu0
      %v1690 = vadd.f32 0.0, %v1689
      %1691 = vmatmul.f32.gmra.mxu0 %v725
      %v1692 = vpop.f32.mrf.mxu0
      %v1693 = vadd.f32 0.0, %v1692
      %1694 = vmatmul.f32.gmra.mxu0 %v727
      %v1695 = vpop.f32.mrf.mxu0
      %v1696 = vadd.f32 0.0, %v1695
      %1697 = vmatmul.f32.gmra.mxu0 %v729
      %v1698 = vpop.f32.mrf.mxu0
      %v1699 = vadd.f32 0.0, %v1698
      %1700 = vmatmul.f32.gmra.mxu0 %v731
      %v1701 = vpop.f32.mrf.mxu0
      %v1702 = vadd.f32 0.0, %v1701
      %1703 = vmatmul.f32.gmra.mxu0 %v733
      %v1704 = vpop.f32.mrf.mxu0
      %v1705 = vadd.f32 0.0, %v1704
      %1706 = vmatmul.f32.gmra.mxu0 %v735
      %v1707 = vpop.f32.mrf.mxu0
      %v1708 = vadd.f32 0.0, %v1707
      %1709 = vmatmul.f32.gmra.mxu0 %v737
      %v1710 = vpop.f32.mrf.mxu0
      %v1711 = vadd.f32 0.0, %v1710
      %1712 = vmatmul.f32.gmra.mxu0 %v739
      %v1713 = vpop.f32.mrf.mxu0
      %v1714 = vadd.f32 0.0, %v1713
      %1715 = vmatmul.f32.gmra.mxu0 %v741
      %v1716 = vpop.f32.mrf.mxu0
      %v1717 = vadd.f32 0.0, %v1716
      %1718 = vmatmul.f32.gmra.mxu0 %v743
      %v1719 = vpop.f32.mrf.mxu0
      %v1720 = vadd.f32 0.0, %v1719
      %1721 = vmatmul.f32.gmra.mxu0 %v745
      %v1722 = vpop.f32.mrf.mxu0
      %v1723 = vadd.f32 0.0, %v1722
      %1724 = vmatmul.f32.gmra.mxu0 %v747
      %v1725 = vpop.f32.mrf.mxu0
      %v1726 = vadd.f32 0.0, %v1725
      %1727 = vmatmul.f32.gmra.mxu0 %v749
      %v1728 = vpop.f32.mrf.mxu0
      %v1729 = vadd.f32 0.0, %v1728
      %1730 = vmatmul.f32.gmra.mxu0 %v751
      %v1731 = vpop.f32.mrf.mxu0
      %v1732 = vadd.f32 0.0, %v1731
      %1733 = vmatmul.f32.gmra.mxu0 %v753
      %v1734 = vpop.f32.mrf.mxu0
      %v1735 = vadd.f32 0.0, %v1734
      %1736 = vmatmul.f32.gmra.mxu0 %v755
      %v1737 = vpop.f32.mrf.mxu0
      %v1738 = vadd.f32 0.0, %v1737
      %1739 = vmatmul.f32.gmra.mxu0 %v757
      %v1740 = vpop.f32.mrf.mxu0
      %v1741 = vadd.f32 0.0, %v1740
      %1742 = vmatmul.f32.gmra.mxu0 %v759
      %v1743 = vpop.f32.mrf.mxu0
      %v1744 = vadd.f32 0.0, %v1743
      %1745 = vmatmul.f32.gmra.mxu0 %v761
      %v1746 = vpop.f32.mrf.mxu0
      %v1747 = vadd.f32 0.0, %v1746
      %1748 = vmatmul.f32.gmra.mxu0 %v763
      %v1749 = vpop.f32.mrf.mxu0
      %v1750 = vadd.f32 0.0, %v1749
      %1751 = vmatmul.f32.gmra.mxu0 %v765
      %v1752 = vpop.f32.mrf.mxu0
      %v1753 = vadd.f32 0.0, %v1752
      %1754 = vmatmul.f32.gmra.mxu0 %v1177
      %v1755 = vpop.f32.mrf.mxu0
      %v1756 = vadd.f32 0.0, %v1755
      %1757 = vmatmul.f32.gmra.mxu0 %v1180
      %v1758 = vpop.f32.mrf.mxu0
      %v1759 = vadd.f32 0.0, %v1758
      %1760 = vmatmul.f32.gmra.mxu0 %v1646
      %v1761 = vpop.f32.mrf.mxu0
      %v1762 = vadd.f32 0.0, %v1761
      %1763 = vmatmul.f32.gmra.mxu0 %v1649
      %v1764 = vpop.f32.mrf.mxu0
      %v1765 = vadd.f32 0.0, %v1764
      %1766 = vdwg.mxu0
      %v1767 = vadd.f32 %v1613, %v1672
      %v1768 = vadd.f32 %v1614, %v1675
      %v1769 = vadd.f32 %v1615, %v1678
      %v1770 = vadd.f32 %v1616, %v1681
      %v1771 = vadd.f32 %v1617, %v1684
      %v1772 = vadd.f32 %v1618, %v1687
      %v1773 = vadd.f32 %v1619, %v1690
      %v1774 = vadd.f32 %v1620, %v1693
      %v1775 = vadd.f32 %v1621, %v1696
      %v1776 = vadd.f32 %v1622, %v1699
      %v1777 = vadd.f32 %v1623, %v1702
      %v1778 = vadd.f32 %v1624, %v1705
      %v1779 = vadd.f32 %v1625, %v1708
      %v1780 = vadd.f32 %v1626, %v1711
      %v1781 = vadd.f32 %v1627, %v1714
      %v1782 = vadd.f32 %v1628, %v1717
      %v1783 = vadd.f32 %v1629, %v1720
      %v1784 = vadd.f32 %v1630, %v1723
      %v1785 = vadd.f32 %v1631, %v1726
      %v1786 = vadd.f32 %v1632, %v1729
      %v1787 = vadd.f32 %v1633, %v1732
      %v1788 = vadd.f32 %v1634, %v1735
      %v1789 = vadd.f32 %v1635, %v1738
      %v1790 = vadd.f32 %v1636, %v1741
      %v1791 = vadd.f32 %v1637, %v1744
      %v1792 = vadd.f32 %v1638, %v1747
      %v1793 = vadd.f32 %v1639, %v1750
      %v1794 = vadd.f32 %v1640, %v1753
      %v1795 = vadd.f32 %v1641, %v1756
      %v1796 = vadd.f32 %v1642, %v1759
      %v1797 = vadd.f32 %v1643, %v1762
      %v1798 = vadd.f32 %v1644, %v1765
      %v1800 = vrot.slane %v390, 1
      %v1801 = vrot.slane %v391, 1
      %v1802 = vsel %vm441, %v1800, %v1801
      %v1803 = vrot.slane %v392, 1
      %v1804 = vsel %vm441, %v1801, %v1803
      %v1805 = vsel %vm243, %v1802, 0
      %v1807 = vsel %vm243, %v1804, 0
      %v1810 = vsel %vm586, %v336, 0
      %1812 = vmatpush.msra.mxu0 0.0
      %1813 = vmatpush.msra.mxu0 0.0
      %1814 = vmatpush.msra.mxu0 0.0
      %1815 = vmatpush.msra.mxu0 0.0
      %1816 = vmatpush.msra.mxu0 0.0
      %1817 = vmatpush.msra.mxu0 0.0
      %1818 = vmatpush.msra.mxu0 0.0
      %1819 = vmatpush.msra.mxu0 0.0
      %1820 = vmatpush.msra.mxu0 0.0
      %1821 = vmatpush.msra.mxu0 0.0
      %1822 = vmatpush.msra.mxu0 0.0
      %1823 = vmatpush.msra.mxu0 0.0
      %1824 = vmatpush.msra.mxu0 0.0
      %1825 = vmatpush.msra.mxu0 0.0
      %1826 = vmatpush.msra.mxu0 0.0
      %1827 = vmatpush.msra.mxu0 %v1810
      %1828 = vmatmul.f32.gmra.mxu0 %v530
      %v1829 = vpop.f32.mrf.mxu0
      %v1830 = vadd.f32 0.0, %v1829
      %1831 = vmatmul.f32.gmra.mxu0 %v532
      %v1832 = vpop.f32.mrf.mxu0
      %v1833 = vadd.f32 0.0, %v1832
      %1834 = vmatmul.f32.gmra.mxu0 %v534
      %v1835 = vpop.f32.mrf.mxu0
      %v1836 = vadd.f32 0.0, %v1835
      %1837 = vmatmul.f32.gmra.mxu0 %v536
      %v1838 = vpop.f32.mrf.mxu0
      %v1839 = vadd.f32 0.0, %v1838
      %1840 = vmatmul.f32.gmra.mxu0 %v538
      %v1841 = vpop.f32.mrf.mxu0
      %v1842 = vadd.f32 0.0, %v1841
      %1843 = vmatmul.f32.gmra.mxu0 %v540
      %v1844 = vpop.f32.mrf.mxu0
      %v1845 = vadd.f32 0.0, %v1844
      %1846 = vmatmul.f32.gmra.mxu0 %v542
      %v1847 = vpop.f32.mrf.mxu0
      %v1848 = vadd.f32 0.0, %v1847
      %1849 = vmatmul.f32.gmra.mxu0 %v544
      %v1850 = vpop.f32.mrf.mxu0
      %v1851 = vadd.f32 0.0, %v1850
      %1852 = vmatmul.f32.gmra.mxu0 %v546
      %v1853 = vpop.f32.mrf.mxu0
      %v1854 = vadd.f32 0.0, %v1853
      %1855 = vmatmul.f32.gmra.mxu0 %v548
      %v1856 = vpop.f32.mrf.mxu0
      %v1857 = vadd.f32 0.0, %v1856
      %1858 = vmatmul.f32.gmra.mxu0 %v550
      %v1859 = vpop.f32.mrf.mxu0
      %v1860 = vadd.f32 0.0, %v1859
      %1861 = vmatmul.f32.gmra.mxu0 %v552
      %v1862 = vpop.f32.mrf.mxu0
      %v1863 = vadd.f32 0.0, %v1862
      %1864 = vmatmul.f32.gmra.mxu0 %v554
      %v1865 = vpop.f32.mrf.mxu0
      %v1866 = vadd.f32 0.0, %v1865
      %1867 = vmatmul.f32.gmra.mxu0 %v556
      %v1868 = vpop.f32.mrf.mxu0
      %v1869 = vadd.f32 0.0, %v1868
      %1870 = vmatmul.f32.gmra.mxu0 %v558
      %v1871 = vpop.f32.mrf.mxu0
      %v1872 = vadd.f32 0.0, %v1871
      %1873 = vmatmul.f32.gmra.mxu0 %v560
      %v1874 = vpop.f32.mrf.mxu0
      %v1875 = vadd.f32 0.0, %v1874
      %1876 = vmatmul.f32.gmra.mxu0 %v562
      %v1877 = vpop.f32.mrf.mxu0
      %v1878 = vadd.f32 0.0, %v1877
      %1879 = vmatmul.f32.gmra.mxu0 %v564
      %v1880 = vpop.f32.mrf.mxu0
      %v1881 = vadd.f32 0.0, %v1880
      %1882 = vmatmul.f32.gmra.mxu0 %v566
      %v1883 = vpop.f32.mrf.mxu0
      %v1884 = vadd.f32 0.0, %v1883
      %1885 = vmatmul.f32.gmra.mxu0 %v568
      %v1886 = vpop.f32.mrf.mxu0
      %v1887 = vadd.f32 0.0, %v1886
      %1888 = vmatmul.f32.gmra.mxu0 %v570
      %v1889 = vpop.f32.mrf.mxu0
      %v1890 = vadd.f32 0.0, %v1889
      %1891 = vmatmul.f32.gmra.mxu0 %v572
      %v1892 = vpop.f32.mrf.mxu0
      %v1893 = vadd.f32 0.0, %v1892
      %1894 = vmatmul.f32.gmra.mxu0 %v574
      %v1895 = vpop.f32.mrf.mxu0
      %v1896 = vadd.f32 0.0, %v1895
      %1897 = vmatmul.f32.gmra.mxu0 %v576
      %v1898 = vpop.f32.mrf.mxu0
      %v1899 = vadd.f32 0.0, %v1898
      %1900 = vmatmul.f32.gmra.mxu0 %v578
      %v1901 = vpop.f32.mrf.mxu0
      %v1902 = vadd.f32 0.0, %v1901
      %1903 = vmatmul.f32.gmra.mxu0 %v580
      %v1904 = vpop.f32.mrf.mxu0
      %v1905 = vadd.f32 0.0, %v1904
      %1906 = vmatmul.f32.gmra.mxu0 %v582
      %v1907 = vpop.f32.mrf.mxu0
      %v1908 = vadd.f32 0.0, %v1907
      %1909 = vmatmul.f32.gmra.mxu0 %v584
      %v1910 = vpop.f32.mrf.mxu0
      %v1911 = vadd.f32 0.0, %v1910
      %1912 = vmatmul.f32.gmra.mxu0 %v1336
      %v1913 = vpop.f32.mrf.mxu0
      %v1914 = vadd.f32 0.0, %v1913
      %1915 = vmatmul.f32.gmra.mxu0 %v1338
      %v1916 = vpop.f32.mrf.mxu0
      %v1917 = vadd.f32 0.0, %v1916
      %1918 = vmatmul.f32.gmra.mxu0 %v1805
      %v1919 = vpop.f32.mrf.mxu0
      %v1920 = vadd.f32 0.0, %v1919
      %1921 = vmatmul.f32.gmra.mxu0 %v1807
      %v1922 = vpop.f32.mrf.mxu0
      %v1923 = vadd.f32 0.0, %v1922
      %1924 = vdwg.mxu0
      %v1925 = vadd.f32 %v1767, %v1830
      %v1926 = vadd.f32 %v1768, %v1833
      %v1927 = vadd.f32 %v1769, %v1836
      %v1928 = vadd.f32 %v1770, %v1839
      %v1929 = vadd.f32 %v1771, %v1842
      %v1930 = vadd.f32 %v1772, %v1845
      %v1931 = vadd.f32 %v1773, %v1848
      %v1932 = vadd.f32 %v1774, %v1851
      %v1933 = vadd.f32 %v1775, %v1854
      %v1934 = vadd.f32 %v1776, %v1857
      %v1935 = vadd.f32 %v1777, %v1860
      %v1936 = vadd.f32 %v1778, %v1863
      %v1937 = vadd.f32 %v1779, %v1866
      %v1938 = vadd.f32 %v1780, %v1869
      %v1939 = vadd.f32 %v1781, %v1872
      %v1940 = vadd.f32 %v1782, %v1875
      %v1941 = vadd.f32 %v1783, %v1878
      %v1942 = vadd.f32 %v1784, %v1881
      %v1943 = vadd.f32 %v1785, %v1884
      %v1944 = vadd.f32 %v1786, %v1887
      %v1945 = vadd.f32 %v1787, %v1890
      %v1946 = vadd.f32 %v1788, %v1893
      %v1947 = vadd.f32 %v1789, %v1896
      %v1948 = vadd.f32 %v1790, %v1899
      %v1949 = vadd.f32 %v1791, %v1902
      %v1950 = vadd.f32 %v1792, %v1905
      %v1951 = vadd.f32 %v1793, %v1908
      %v1952 = vadd.f32 %v1794, %v1911
      %v1953 = vadd.f32 %v1795, %v1914
      %v1954 = vadd.f32 %v1796, %v1917
      %v1955 = vadd.f32 %v1797, %v1920
      %v1956 = vadd.f32 %v1798, %v1923
      %v1957 = vrot.slane %v390, 2
      %v1958 = vrot.slane %v391, 2
      %v1959 = vsel %vm883, %v1957, %v1958
      %v1960 = vrot.slane %v392, 2
      %v1961 = vsel %vm883, %v1958, %v1960
      %v1962 = vsel %vm243, %v1959, 0
      %v1964 = vsel %vm243, %v1961, 0
      %v1967 = vsel %vm586, %v338, 0
      %1969 = vmatpush.msra.mxu0 0.0
      %1970 = vmatpush.msra.mxu0 0.0
      %1971 = vmatpush.msra.mxu0 0.0
      %1972 = vmatpush.msra.mxu0 0.0
      %1973 = vmatpush.msra.mxu0 0.0
      %1974 = vmatpush.msra.mxu0 0.0
      %1975 = vmatpush.msra.mxu0 0.0
      %1976 = vmatpush.msra.mxu0 0.0
      %1977 = vmatpush.msra.mxu0 0.0
      %1978 = vmatpush.msra.mxu0 0.0
      %1979 = vmatpush.msra.mxu0 0.0
      %1980 = vmatpush.msra.mxu0 0.0
      %1981 = vmatpush.msra.mxu0 0.0
      %1982 = vmatpush.msra.mxu0 0.0
      %1983 = vmatpush.msra.mxu0 0.0
      %1984 = vmatpush.msra.mxu0 %v1967
      %1985 = vmatmul.f32.gmra.mxu0 %v972
      %v1986 = vpop.f32.mrf.mxu0
      %v1987 = vadd.f32 0.0, %v1986
      %1988 = vmatmul.f32.gmra.mxu0 %v974
      %v1989 = vpop.f32.mrf.mxu0
      %v1990 = vadd.f32 0.0, %v1989
      %1991 = vmatmul.f32.gmra.mxu0 %v976
      %v1992 = vpop.f32.mrf.mxu0
      %v1993 = vadd.f32 0.0, %v1992
      %1994 = vmatmul.f32.gmra.mxu0 %v978
      %v1995 = vpop.f32.mrf.mxu0
      %v1996 = vadd.f32 0.0, %v1995
      %1997 = vmatmul.f32.gmra.mxu0 %v980
      %v1998 = vpop.f32.mrf.mxu0
      %v1999 = vadd.f32 0.0, %v1998
      %2000 = vmatmul.f32.gmra.mxu0 %v982
      %v2001 = vpop.f32.mrf.mxu0
      %v2002 = vadd.f32 0.0, %v2001
      %2003 = vmatmul.f32.gmra.mxu0 %v984
      %v2004 = vpop.f32.mrf.mxu0
      %v2005 = vadd.f32 0.0, %v2004
      %2006 = vmatmul.f32.gmra.mxu0 %v986
      %v2007 = vpop.f32.mrf.mxu0
      %v2008 = vadd.f32 0.0, %v2007
      %2009 = vmatmul.f32.gmra.mxu0 %v988
      %v2010 = vpop.f32.mrf.mxu0
      %v2011 = vadd.f32 0.0, %v2010
      %2012 = vmatmul.f32.gmra.mxu0 %v990
      %v2013 = vpop.f32.mrf.mxu0
      %v2014 = vadd.f32 0.0, %v2013
      %2015 = vmatmul.f32.gmra.mxu0 %v992
      %v2016 = vpop.f32.mrf.mxu0
      %v2017 = vadd.f32 0.0, %v2016
      %2018 = vmatmul.f32.gmra.mxu0 %v994
      %v2019 = vpop.f32.mrf.mxu0
      %v2020 = vadd.f32 0.0, %v2019
      %2021 = vmatmul.f32.gmra.mxu0 %v996
      %v2022 = vpop.f32.mrf.mxu0
      %v2023 = vadd.f32 0.0, %v2022
      %2024 = vmatmul.f32.gmra.mxu0 %v998
      %v2025 = vpop.f32.mrf.mxu0
      %v2026 = vadd.f32 0.0, %v2025
      %2027 = vmatmul.f32.gmra.mxu0 %v1000
      %v2028 = vpop.f32.mrf.mxu0
      %v2029 = vadd.f32 0.0, %v2028
      %2030 = vmatmul.f32.gmra.mxu0 %v1002
      %v2031 = vpop.f32.mrf.mxu0
      %v2032 = vadd.f32 0.0, %v2031
      %2033 = vmatmul.f32.gmra.mxu0 %v1004
      %v2034 = vpop.f32.mrf.mxu0
      %v2035 = vadd.f32 0.0, %v2034
      %2036 = vmatmul.f32.gmra.mxu0 %v1006
      %v2037 = vpop.f32.mrf.mxu0
      %v2038 = vadd.f32 0.0, %v2037
      %2039 = vmatmul.f32.gmra.mxu0 %v1008
      %v2040 = vpop.f32.mrf.mxu0
      %v2041 = vadd.f32 0.0, %v2040
      %2042 = vmatmul.f32.gmra.mxu0 %v1010
      %v2043 = vpop.f32.mrf.mxu0
      %v2044 = vadd.f32 0.0, %v2043
      %2045 = vmatmul.f32.gmra.mxu0 %v1012
      %v2046 = vpop.f32.mrf.mxu0
      %v2047 = vadd.f32 0.0, %v2046
      %2048 = vmatmul.f32.gmra.mxu0 %v1014
      %v2049 = vpop.f32.mrf.mxu0
      %v2050 = vadd.f32 0.0, %v2049
      %2051 = vmatmul.f32.gmra.mxu0 %v1016
      %v2052 = vpop.f32.mrf.mxu0
      %v2053 = vadd.f32 0.0, %v2052
      %2054 = vmatmul.f32.gmra.mxu0 %v1018
      %v2055 = vpop.f32.mrf.mxu0
      %v2056 = vadd.f32 0.0, %v2055
      %2057 = vmatmul.f32.gmra.mxu0 %v1020
      %v2058 = vpop.f32.mrf.mxu0
      %v2059 = vadd.f32 0.0, %v2058
      %2060 = vmatmul.f32.gmra.mxu0 %v1022
      %v2061 = vpop.f32.mrf.mxu0
      %v2062 = vadd.f32 0.0, %v2061
      %2063 = vmatmul.f32.gmra.mxu0 %v1024
      %v2064 = vpop.f32.mrf.mxu0
      %v2065 = vadd.f32 0.0, %v2064
      %2066 = vmatmul.f32.gmra.mxu0 %v1026
      %v2067 = vpop.f32.mrf.mxu0
      %v2068 = vadd.f32 0.0, %v2067
      %2069 = vmatmul.f32.gmra.mxu0 %v1493
      %v2070 = vpop.f32.mrf.mxu0
      %v2071 = vadd.f32 0.0, %v2070
      %2072 = vmatmul.f32.gmra.mxu0 %v1495
      %v2073 = vpop.f32.mrf.mxu0
      %v2074 = vadd.f32 0.0, %v2073
      %2075 = vmatmul.f32.gmra.mxu0 %v1962
      %v2076 = vpop.f32.mrf.mxu0
      %v2077 = vadd.f32 0.0, %v2076
      %2078 = vmatmul.f32.gmra.mxu0 %v1964
      %v2079 = vpop.f32.mrf.mxu0
      %v2080 = vadd.f32 0.0, %v2079
      %2081 = vdwg.mxu0
      %v2082 = vadd.f32 %v1925, %v1987
      %v2083 = vadd.f32 %v1926, %v1990
      %v2084 = vadd.f32 %v1927, %v1993
      %v2085 = vadd.f32 %v1928, %v1996
      %v2086 = vadd.f32 %v1929, %v1999
      %v2087 = vadd.f32 %v1930, %v2002
      %v2088 = vadd.f32 %v1931, %v2005
      %v2089 = vadd.f32 %v1932, %v2008
      %v2090 = vadd.f32 %v1933, %v2011
      %v2091 = vadd.f32 %v1934, %v2014
      %v2092 = vadd.f32 %v1935, %v2017
      %v2093 = vadd.f32 %v1936, %v2020
      %v2094 = vadd.f32 %v1937, %v2023
      %v2095 = vadd.f32 %v1938, %v2026
      %v2096 = vadd.f32 %v1939, %v2029
      %v2097 = vadd.f32 %v1940, %v2032
      %v2098 = vadd.f32 %v1941, %v2035
      %v2099 = vadd.f32 %v1942, %v2038
      %v2100 = vadd.f32 %v1943, %v2041
      %v2101 = vadd.f32 %v1944, %v2044
      %v2102 = vadd.f32 %v1945, %v2047
      %v2103 = vadd.f32 %v1946, %v2050
      %v2104 = vadd.f32 %v1947, %v2053
      %v2105 = vadd.f32 %v1948, %v2056
      %v2106 = vadd.f32 %v1949, %v2059
      %v2107 = vadd.f32 %v1950, %v2062
      %v2108 = vadd.f32 %v1951, %v2065
      %v2109 = vadd.f32 %v1952, %v2068
      %v2110 = vadd.f32 %v1953, %v2071
      %v2111 = vadd.f32 %v1954, %v2074
      %v2112 = vadd.f32 %v1955, %v2077
      %v2113 = vadd.f32 %v1956, %v2080
      %2114 = vst [vmem:[%s205] sm:$0xff] %v2082
      %2115 = vst [vmem:[%s205 + $0x8] sm:$0xff] %v2083
      %2116 = vst [vmem:[%s205 + $0x10] sm:$0xff] %v2084
      %2117 = vst [vmem:[%s205 + $0x18] sm:$0xff] %v2085
      %2118 = vst [vmem:[%s205 + $0x20] sm:$0xff] %v2086
      %2119 = vst [vmem:[%s205 + $0x28] sm:$0xff] %v2087
      %2120 = vst [vmem:[%s205 + $0x30] sm:$0xff] %v2088
      %2121 = vst [vmem:[%s205 + $0x38] sm:$0xff] %v2089
      %2122 = vst [vmem:[%s205 + $0x40] sm:$0xff] %v2090
      %2123 = vst [vmem:[%s205 + $0x48] sm:$0xff] %v2091
      %2124 = vst [vmem:[%s205 + $0x50] sm:$0xff] %v2092
      %2125 = vst [vmem:[%s205 + $0x58] sm:$0xff] %v2093
      %2126 = vst [vmem:[%s205 + $0x60] sm:$0xff] %v2094
      %2127 = vst [vmem:[%s205 + $0x68] sm:$0xff] %v2095
      %2128 = vst [vmem:[%s205 + $0x70] sm:$0xff] %v2096
      %2129 = vst [vmem:[%s205 + $0x78] sm:$0xff] %v2097
      %2130 = vst [vmem:[%s205 + $0x80] sm:$0xff] %v2098
      %2131 = vst [vmem:[%s205 + $0x88] sm:$0xff] %v2099
      %2132 = vst [vmem:[%s205 + $0x90] sm:$0xff] %v2100
      %2133 = vst [vmem:[%s205 + $0x98] sm:$0xff] %v2101
      %2134 = vst [vmem:[%s205 + $0xa0] sm:$0xff] %v2102
      %2135 = vst [vmem:[%s205 + $0xa8] sm:$0xff] %v2103
      %2136 = vst [vmem:[%s205 + $0xb0] sm:$0xff] %v2104
      %2137 = vst [vmem:[%s205 + $0xb8] sm:$0xff] %v2105
      %2138 = vst [vmem:[%s205 + $0xc0] sm:$0xff] %v2106
      %2139 = vst [vmem:[%s205 + $0xc8] sm:$0xff] %v2107
      %2140 = vst [vmem:[%s205 + $0xd0] sm:$0xff] %v2108
      %2141 = vst [vmem:[%s205 + $0xd8] sm:$0xff] %v2109
      %2142 = vst [vmem:[%s205 + $0xe0] sm:$0xff] %v2110
      %2143 = vst [vmem:[%s205 + $0xe8] sm:$0xff] %v2111
      %2144 = vst [vmem:[%s205 + $0xf0] sm:$0xff] %v2112
      %2145 = vst [vmem:[%s205 + $0xf8] sm:$0xff] %v2113
      %v2178 = vrot.slane %v211, 2
      %v2179 = vrot.slane %v211, 4
      %v2180 = vrot.slane %v211, 6
      %v2181 = vrot.slane %v212, 2
      %v2182 = vrot.slane %v212, 4
      %v2183 = vrot.slane %v212, 6
      %v2184 = vrot.slane %v213, 2
      %v2185 = vrot.slane %v213, 4
      %v2186 = vrot.slane %v213, 6
      %v2187 = vrot.slane %v214, 2
      %v2188 = vrot.slane %v214, 4
      %v2189 = vrot.slane %v214, 6
      %v2190 = vrot.slane %v215, 2
      %v2191 = vrot.slane %v215, 4
      %v2192 = vrot.slane %v215, 6
      %v2193 = vrot.slane %v216, 2
      %v2194 = vrot.slane %v216, 4
      %v2195 = vrot.slane %v216, 6
      %v2196 = vrot.slane %v217, 2
      %v2197 = vrot.slane %v217, 4
      %v2198 = vrot.slane %v217, 6
      %v2199 = vrot.slane %v218, 2
      %v2200 = vrot.slane %v218, 4
      %v2201 = vrot.slane %v218, 6
      %v2202 = vrot.slane %v219, 2
      %v2203 = vrot.slane %v219, 4
      %v2204 = vrot.slane %v219, 6
      %v2205 = vrot.slane %v220, 2
      %v2206 = vrot.slane %v220, 4
      %v2207 = vrot.slane %v220, 6
      %v2208 = vrot.slane %v221, 2
      %v2209 = vrot.slane %v221, 4
      %v2210 = vrot.slane %v221, 6
      %v2211 = vrot.slane %v222, 2
      %v2212 = vrot.slane %v222, 4
      %v2213 = vrot.slane %v222, 6
      %v2214 = vrot.slane %v223, 2
      %v2215 = vrot.slane %v223, 4
      %v2216 = vrot.slane %v223, 6
      %v2217 = vrot.slane %v224, 2
      %v2218 = vrot.slane %v224, 4
      %v2219 = vrot.slane %v224, 6
      %v2220 = vrot.slane %v225, 2
      %v2221 = vrot.slane %v225, 4
      %v2222 = vrot.slane %v225, 6
      %v2223 = vrot.slane %v226, 2
      %v2224 = vrot.slane %v226, 4
      %v2225 = vrot.slane %v226, 6
      %v2226 = vrot.slane %v227, 2
      %v2227 = vrot.slane %v227, 4
      %v2228 = vrot.slane %v227, 6
      %v2229 = vrot.slane %v228, 2
      %v2230 = vrot.slane %v228, 4
      %v2231 = vrot.slane %v228, 6
      %v2232 = vrot.slane %v229, 2
      %v2233 = vrot.slane %v229, 4
      %v2234 = vrot.slane %v229, 6
      %v2235 = vrot.slane %v230, 2
      %v2236 = vrot.slane %v230, 4
      %v2237 = vrot.slane %v230, 6
      %v2238 = vrot.slane %v231, 2
      %v2239 = vrot.slane %v231, 4
      %v2240 = vrot.slane %v231, 6
      %v2241 = vrot.slane %v232, 2
      %v2242 = vrot.slane %v232, 4
      %v2243 = vrot.slane %v232, 6
      %v2244 = vrot.slane %v233, 2
      %v2245 = vrot.slane %v233, 4
      %v2246 = vrot.slane %v233, 6
      %v2247 = vrot.slane %v234, 2
      %v2248 = vrot.slane %v234, 4
      %v2249 = vrot.slane %v234, 6
      %v2250 = vrot.slane %v235, 2
      %v2251 = vrot.slane %v235, 4
      %v2252 = vrot.slane %v235, 6
      %v2253 = vrot.slane %v236, 2
      %v2254 = vrot.slane %v236, 4
      %v2255 = vrot.slane %v236, 6
      %v2256 = vrot.slane %v237, 2
      %v2257 = vrot.slane %v237, 4
      %v2258 = vrot.slane %v237, 6
      %v2259 = vrot.slane %v238, 2
      %v2260 = vrot.slane %v238, 4
      %v2261 = vrot.slane %v238, 6
      %v2262 = vrot.slane %v239, 2
      %v2263 = vrot.slane %v239, 4
      %v2264 = vrot.slane %v239, 6
      %v2265 = vrot.slane %v240, 2
      %v2266 = vrot.slane %v240, 4
      %v2267 = vrot.slane %v240, 6
      %v2268 = vrot.slane %v241, 2
      %v2269 = vrot.slane %v241, 4
      %v2270 = vrot.slane %v241, 6
      %v2271 = vrot.slane %v242, 2
      %v2272 = vrot.slane %v242, 4
      %v2273 = vrot.slane %v242, 6
      %v2370 = vrot.slane %v211, 7
      %v2371 = vrot.slane %v2370, 2
      %v2372 = vrot.slane %v2178, 7
      %v2373 = vrot.slane %v2372, 2
      %v2374 = vrot.slane %v2179, 7
      %v2375 = vrot.slane %v2374, 2
      %v2376 = vrot.slane %v2180, 7
      %v2377 = vrot.slane %v2376, 2
      %v2378 = vrot.slane %v212, 7
      %v2379 = vrot.slane %v2378, 2
      %v2380 = vrot.slane %v2181, 7
      %v2381 = vrot.slane %v2380, 2
      %v2382 = vrot.slane %v2182, 7
      %v2383 = vrot.slane %v2382, 2
      %v2384 = vrot.slane %v2183, 7
      %v2385 = vrot.slane %v2384, 2
      %v2386 = vrot.slane %v213, 7
      %v2387 = vrot.slane %v2386, 2
      %v2388 = vrot.slane %v2184, 7
      %v2389 = vrot.slane %v2388, 2
      %v2390 = vrot.slane %v2185, 7
      %v2391 = vrot.slane %v2390, 2
      %v2392 = vrot.slane %v2186, 7
      %v2393 = vrot.slane %v2392, 2
      %v2394 = vrot.slane %v214, 7
      %v2395 = vrot.slane %v2394, 2
      %v2396 = vrot.slane %v2187, 7
      %v2397 = vrot.slane %v2396, 2
      %v2398 = vrot.slane %v2188, 7
      %v2399 = vrot.slane %v2398, 2
      %v2400 = vrot.slane %v2189, 7
      %v2401 = vrot.slane %v2400, 2
      %v2402 = vrot.slane %v215, 7
      %v2403 = vrot.slane %v2402, 2
      %v2404 = vrot.slane %v2190, 7
      %v2405 = vrot.slane %v2404, 2
      %v2406 = vrot.slane %v2191, 7
      %v2407 = vrot.slane %v2406, 2
      %v2408 = vrot.slane %v2192, 7
      %v2409 = vrot.slane %v2408, 2
      %v2410 = vrot.slane %v216, 7
      %v2411 = vrot.slane %v2410, 2
      %v2412 = vrot.slane %v2193, 7
      %v2413 = vrot.slane %v2412, 2
      %v2414 = vrot.slane %v2194, 7
      %v2415 = vrot.slane %v2414, 2
      %v2416 = vrot.slane %v2195, 7
      %v2417 = vrot.slane %v2416, 2
      %v2418 = vrot.slane %v217, 7
      %v2419 = vrot.slane %v2418, 2
      %v2420 = vrot.slane %v2196, 7
      %v2421 = vrot.slane %v2420, 2
      %v2422 = vrot.slane %v2197, 7
      %v2423 = vrot.slane %v2422, 2
      %v2424 = vrot.slane %v2198, 7
      %v2425 = vrot.slane %v2424, 2
      %v2426 = vrot.slane %v218, 7
      %v2427 = vrot.slane %v2426, 2
      %v2428 = vrot.slane %v2199, 7
      %v2429 = vrot.slane %v2428, 2
      %v2430 = vrot.slane %v2200, 7
      %v2431 = vrot.slane %v2430, 2
      %v2432 = vrot.slane %v2201, 7
      %v2433 = vrot.slane %v2432, 2
      %v2434 = vrot.slane %v219, 7
      %v2435 = vrot.slane %v2434, 2
      %v2436 = vrot.slane %v2202, 7
      %v2437 = vrot.slane %v2436, 2
      %v2438 = vrot.slane %v2203, 7
      %v2439 = vrot.slane %v2438, 2
      %v2440 = vrot.slane %v2204, 7
      %v2441 = vrot.slane %v2440, 2
      %v2442 = vrot.slane %v220, 7
      %v2443 = vrot.slane %v2442, 2
      %v2444 = vrot.slane %v2205, 7
      %v2445 = vrot.slane %v2444, 2
      %v2446 = vrot.slane %v2206, 7
      %v2447 = vrot.slane %v2446, 2
      %v2448 = vrot.slane %v2207, 7
      %v2449 = vrot.slane %v2448, 2
      %v2450 = vrot.slane %v221, 7
      %v2451 = vrot.slane %v2450, 2
      %v2452 = vrot.slane %v2208, 7
      %v2453 = vrot.slane %v2452, 2
      %v2454 = vrot.slane %v2209, 7
      %v2455 = vrot.slane %v2454, 2
      %v2456 = vrot.slane %v2210, 7
      %v2457 = vrot.slane %v2456, 2
      %v2458 = vrot.slane %v222, 7
      %v2459 = vrot.slane %v2458, 2
      %v2460 = vrot.slane %v2211, 7
      %v2461 = vrot.slane %v2460, 2
      %v2462 = vrot.slane %v2212, 7
      %v2463 = vrot.slane %v2462, 2
      %v2464 = vrot.slane %v2213, 7
      %v2465 = vrot.slane %v2464, 2
      %v2466 = vrot.slane %v223, 7
      %v2467 = vrot.slane %v2466, 2
      %v2468 = vrot.slane %v2214, 7
      %v2469 = vrot.slane %v2468, 2
      %v2470 = vrot.slane %v2215, 7
      %v2471 = vrot.slane %v2470, 2
      %v2472 = vrot.slane %v2216, 7
      %v2473 = vrot.slane %v2472, 2
      %v2474 = vrot.slane %v224, 7
      %v2475 = vrot.slane %v2474, 2
      %v2476 = vrot.slane %v2217, 7
      %v2477 = vrot.slane %v2476, 2
      %v2478 = vrot.slane %v2218, 7
      %v2479 = vrot.slane %v2478, 2
      %v2480 = vrot.slane %v2219, 7
      %v2481 = vrot.slane %v2480, 2
      %v2482 = vrot.slane %v225, 7
      %v2483 = vrot.slane %v2482, 2
      %v2484 = vrot.slane %v2220, 7
      %v2485 = vrot.slane %v2484, 2
      %v2486 = vrot.slane %v2221, 7
      %v2487 = vrot.slane %v2486, 2
      %v2488 = vrot.slane %v2222, 7
      %v2489 = vrot.slane %v2488, 2
      %v2490 = vrot.slane %v226, 7
      %v2491 = vrot.slane %v2490, 2
      %v2492 = vrot.slane %v2223, 7
      %v2493 = vrot.slane %v2492, 2
      %v2494 = vrot.slane %v2224, 7
      %v2495 = vrot.slane %v2494, 2
      %v2496 = vrot.slane %v2225, 7
      %v2497 = vrot.slane %v2496, 2
      %v2498 = vrot.slane %v227, 7
      %v2499 = vrot.slane %v2498, 2
      %v2500 = vrot.slane %v2226, 7
      %v2501 = vrot.slane %v2500, 2
      %v2502 = vrot.slane %v2227, 7
      %v2503 = vrot.slane %v2502, 2
      %v2504 = vrot.slane %v2228, 7
      %v2505 = vrot.slane %v2504, 2
      %v2506 = vrot.slane %v228, 7
      %v2507 = vrot.slane %v2506, 2
      %v2508 = vrot.slane %v2229, 7
      %v2509 = vrot.slane %v2508, 2
      %v2510 = vrot.slane %v2230, 7
      %v2511 = vrot.slane %v2510, 2
      %v2512 = vrot.slane %v2231, 7
      %v2513 = vrot.slane %v2512, 2
      %v2514 = vrot.slane %v229, 7
      %v2515 = vrot.slane %v2514, 2
      %v2516 = vrot.slane %v2232, 7
      %v2517 = vrot.slane %v2516, 2
      %v2518 = vrot.slane %v2233, 7
      %v2519 = vrot.slane %v2518, 2
      %v2520 = vrot.slane %v2234, 7
      %v2521 = vrot.slane %v2520, 2
      %v2522 = vrot.slane %v230, 7
      %v2523 = vrot.slane %v2522, 2
      %v2524 = vrot.slane %v2235, 7
      %v2525 = vrot.slane %v2524, 2
      %v2526 = vrot.slane %v2236, 7
      %v2527 = vrot.slane %v2526, 2
      %v2528 = vrot.slane %v2237, 7
      %v2529 = vrot.slane %v2528, 2
      %v2530 = vrot.slane %v231, 7
      %v2531 = vrot.slane %v2530, 2
      %v2532 = vrot.slane %v2238, 7
      %v2533 = vrot.slane %v2532, 2
      %v2534 = vrot.slane %v2239, 7
      %v2535 = vrot.slane %v2534, 2
      %v2536 = vrot.slane %v2240, 7
      %v2537 = vrot.slane %v2536, 2
      %v2538 = vrot.slane %v232, 7
      %v2539 = vrot.slane %v2538, 2
      %v2540 = vrot.slane %v2241, 7
      %v2541 = vrot.slane %v2540, 2
      %v2542 = vrot.slane %v2242, 7
      %v2543 = vrot.slane %v2542, 2
      %v2544 = vrot.slane %v2243, 7
      %v2545 = vrot.slane %v2544, 2
      %v2546 = vrot.slane %v233, 7
      %v2547 = vrot.slane %v2546, 2
      %v2548 = vrot.slane %v2244, 7
      %v2549 = vrot.slane %v2548, 2
      %v2550 = vrot.slane %v2245, 7
      %v2551 = vrot.slane %v2550, 2
      %v2552 = vrot.slane %v2246, 7
      %v2553 = vrot.slane %v2552, 2
      %v2554 = vrot.slane %v234, 7
      %v2555 = vrot.slane %v2554, 2
      %v2556 = vrot.slane %v2247, 7
      %v2557 = vrot.slane %v2556, 2
      %v2558 = vrot.slane %v2248, 7
      %v2559 = vrot.slane %v2558, 2
      %v2560 = vrot.slane %v2249, 7
      %v2561 = vrot.slane %v2560, 2
      %v2562 = vrot.slane %v235, 7
      %v2563 = vrot.slane %v2562, 2
      %v2564 = vrot.slane %v2250, 7
      %v2565 = vrot.slane %v2564, 2
      %v2566 = vrot.slane %v2251, 7
      %v2567 = vrot.slane %v2566, 2
      %v2568 = vrot.slane %v2252, 7
      %v2569 = vrot.slane %v2568, 2
      %v2570 = vrot.slane %v236, 7
      %v2571 = vrot.slane %v2570, 2
      %v2572 = vrot.slane %v2253, 7
      %v2573 = vrot.slane %v2572, 2
      %v2574 = vrot.slane %v2254, 7
      %v2575 = vrot.slane %v2574, 2
      %v2576 = vrot.slane %v2255, 7
      %v2577 = vrot.slane %v2576, 2
      %v2578 = vrot.slane %v237, 7
      %v2579 = vrot.slane %v2578, 2
      %v2580 = vrot.slane %v2256, 7
      %v2581 = vrot.slane %v2580, 2
      %v2582 = vrot.slane %v2257, 7
      %v2583 = vrot.slane %v2582, 2
      %v2584 = vrot.slane %v2258, 7
      %v2585 = vrot.slane %v2584, 2
      %v2586 = vrot.slane %v238, 7
      %v2587 = vrot.slane %v2586, 2
      %v2588 = vrot.slane %v2259, 7
      %v2589 = vrot.slane %v2588, 2
      %v2590 = vrot.slane %v2260, 7
      %v2591 = vrot.slane %v2590, 2
      %v2592 = vrot.slane %v2261, 7
      %v2593 = vrot.slane %v2592, 2
      %v2594 = vrot.slane %v239, 7
      %v2595 = vrot.slane %v2594, 2
      %v2596 = vrot.slane %v2262, 7
      %v2597 = vrot.slane %v2596, 2
      %v2598 = vrot.slane %v2263, 7
      %v2599 = vrot.slane %v2598, 2
      %v2600 = vrot.slane %v2264, 7
      %v2601 = vrot.slane %v2600, 2
      %v2602 = vrot.slane %v240, 7
      %v2603 = vrot.slane %v2602, 2
      %v2604 = vrot.slane %v2265, 7
      %v2605 = vrot.slane %v2604, 2
      %v2606 = vrot.slane %v2266, 7
      %v2607 = vrot.slane %v2606, 2
      %v2608 = vrot.slane %v2267, 7
      %v2609 = vrot.slane %v2608, 2
      %v2610 = vrot.slane %v241, 7
      %v2611 = vrot.slane %v2610, 2
      %v2612 = vrot.slane %v2268, 7
      %v2613 = vrot.slane %v2612, 2
      %v2614 = vrot.slane %v2269, 7
      %v2615 = vrot.slane %v2614, 2
      %v2616 = vrot.slane %v2270, 7
      %v2617 = vrot.slane %v2616, 2
      %v2618 = vrot.slane %v242, 7
      %v2619 = vrot.slane %v2618, 2
      %v2620 = vrot.slane %v2271, 7
      %v2621 = vrot.slane %v2620, 2
      %v2622 = vrot.slane %v2272, 7
      %v2623 = vrot.slane %v2622, 2
      %v2624 = vrot.slane %v2273, 7
      %v2625 = vrot.slane %v2624, 2
      %v2754 = vadd.f32 %v211, %v2371
      %v2755 = vadd.f32 %v2178, %v2373
      %v2756 = vadd.f32 %v2179, %v2375
      %v2757 = vadd.f32 %v2180, %v2377
      %v2758 = vadd.f32 %v212, %v2379
      %v2759 = vadd.f32 %v2181, %v2381
      %v2760 = vadd.f32 %v2182, %v2383
      %v2761 = vadd.f32 %v2183, %v2385
      %v2762 = vadd.f32 %v213, %v2387
      %v2763 = vadd.f32 %v2184, %v2389
      %v2764 = vadd.f32 %v2185, %v2391
      %v2765 = vadd.f32 %v2186, %v2393
      %v2766 = vadd.f32 %v214, %v2395
      %v2767 = vadd.f32 %v2187, %v2397
      %v2768 = vadd.f32 %v2188, %v2399
      %v2769 = vadd.f32 %v2189, %v2401
      %v2770 = vadd.f32 %v215, %v2403
      %v2771 = vadd.f32 %v2190, %v2405
      %v2772 = vadd.f32 %v2191, %v2407
      %v2773 = vadd.f32 %v2192, %v2409
      %v2774 = vadd.f32 %v216, %v2411
      %v2775 = vadd.f32 %v2193, %v2413
      %v2776 = vadd.f32 %v2194, %v2415
      %v2777 = vadd.f32 %v2195, %v2417
      %v2778 = vadd.f32 %v217, %v2419
      %v2779 = vadd.f32 %v2196, %v2421
      %v2780 = vadd.f32 %v2197, %v2423
      %v2781 = vadd.f32 %v2198, %v2425
      %v2782 = vadd.f32 %v218, %v2427
      %v2783 = vadd.f32 %v2199, %v2429
      %v2784 = vadd.f32 %v2200, %v2431
      %v2785 = vadd.f32 %v2201, %v2433
      %v2786 = vadd.f32 %v219, %v2435
      %v2787 = vadd.f32 %v2202, %v2437
      %v2788 = vadd.f32 %v2203, %v2439
      %v2789 = vadd.f32 %v2204, %v2441
      %v2790 = vadd.f32 %v220, %v2443
      %v2791 = vadd.f32 %v2205, %v2445
      %v2792 = vadd.f32 %v2206, %v2447
      %v2793 = vadd.f32 %v2207, %v2449
      %v2794 = vadd.f32 %v221, %v2451
      %v2795 = vadd.f32 %v2208, %v2453
      %v2796 = vadd.f32 %v2209, %v2455
      %v2797 = vadd.f32 %v2210, %v2457
      %v2798 = vadd.f32 %v222, %v2459
      %v2799 = vadd.f32 %v2211, %v2461
      %v2800 = vadd.f32 %v2212, %v2463
      %v2801 = vadd.f32 %v2213, %v2465
      %v2802 = vadd.f32 %v223, %v2467
      %v2803 = vadd.f32 %v2214, %v2469
      %v2804 = vadd.f32 %v2215, %v2471
      %v2805 = vadd.f32 %v2216, %v2473
      %v2806 = vadd.f32 %v224, %v2475
      %v2807 = vadd.f32 %v2217, %v2477
      %v2808 = vadd.f32 %v2218, %v2479
      %v2809 = vadd.f32 %v2219, %v2481
      %v2810 = vadd.f32 %v225, %v2483
      %v2811 = vadd.f32 %v2220, %v2485
      %v2812 = vadd.f32 %v2221, %v2487
      %v2813 = vadd.f32 %v2222, %v2489
      %v2814 = vadd.f32 %v226, %v2491
      %v2815 = vadd.f32 %v2223, %v2493
      %v2816 = vadd.f32 %v2224, %v2495
      %v2817 = vadd.f32 %v2225, %v2497
      %v2818 = vadd.f32 %v227, %v2499
      %v2819 = vadd.f32 %v2226, %v2501
      %v2820 = vadd.f32 %v2227, %v2503
      %v2821 = vadd.f32 %v2228, %v2505
      %v2822 = vadd.f32 %v228, %v2507
      %v2823 = vadd.f32 %v2229, %v2509
      %v2824 = vadd.f32 %v2230, %v2511
      %v2825 = vadd.f32 %v2231, %v2513
      %v2826 = vadd.f32 %v229, %v2515
      %v2827 = vadd.f32 %v2232, %v2517
      %v2828 = vadd.f32 %v2233, %v2519
      %v2829 = vadd.f32 %v2234, %v2521
      %v2830 = vadd.f32 %v230, %v2523
      %v2831 = vadd.f32 %v2235, %v2525
      %v2832 = vadd.f32 %v2236, %v2527
      %v2833 = vadd.f32 %v2237, %v2529
      %v2834 = vadd.f32 %v231, %v2531
      %v2835 = vadd.f32 %v2238, %v2533
      %v2836 = vadd.f32 %v2239, %v2535
      %v2837 = vadd.f32 %v2240, %v2537
      %v2838 = vadd.f32 %v232, %v2539
      %v2839 = vadd.f32 %v2241, %v2541
      %v2840 = vadd.f32 %v2242, %v2543
      %v2841 = vadd.f32 %v2243, %v2545
      %v2842 = vadd.f32 %v233, %v2547
      %v2843 = vadd.f32 %v2244, %v2549
      %v2844 = vadd.f32 %v2245, %v2551
      %v2845 = vadd.f32 %v2246, %v2553
      %v2846 = vadd.f32 %v234, %v2555
      %v2847 = vadd.f32 %v2247, %v2557
      %v2848 = vadd.f32 %v2248, %v2559
      %v2849 = vadd.f32 %v2249, %v2561
      %v2850 = vadd.f32 %v235, %v2563
      %v2851 = vadd.f32 %v2250, %v2565
      %v2852 = vadd.f32 %v2251, %v2567
      %v2853 = vadd.f32 %v2252, %v2569
      %v2854 = vadd.f32 %v236, %v2571
      %v2855 = vadd.f32 %v2253, %v2573
      %v2856 = vadd.f32 %v2254, %v2575
      %v2857 = vadd.f32 %v2255, %v2577
      %v2858 = vadd.f32 %v237, %v2579
      %v2859 = vadd.f32 %v2256, %v2581
      %v2860 = vadd.f32 %v2257, %v2583
      %v2861 = vadd.f32 %v2258, %v2585
      %v2862 = vadd.f32 %v238, %v2587
      %v2863 = vadd.f32 %v2259, %v2589
      %v2864 = vadd.f32 %v2260, %v2591
      %v2865 = vadd.f32 %v2261, %v2593
      %v2866 = vadd.f32 %v239, %v2595
      %v2867 = vadd.f32 %v2262, %v2597
      %v2868 = vadd.f32 %v2263, %v2599
      %v2869 = vadd.f32 %v2264, %v2601
      %v2870 = vadd.f32 %v240, %v2603
      %v2871 = vadd.f32 %v2265, %v2605
      %v2872 = vadd.f32 %v2266, %v2607
      %v2873 = vadd.f32 %v2267, %v2609
      %v2874 = vadd.f32 %v241, %v2611
      %v2875 = vadd.f32 %v2268, %v2613
      %v2876 = vadd.f32 %v2269, %v2615
      %v2877 = vadd.f32 %v2270, %v2617
      %v2878 = vadd.f32 %v242, %v2619
      %v2879 = vadd.f32 %v2271, %v2621
      %v2880 = vadd.f32 %v2272, %v2623
      %v2881 = vadd.f32 %v2273, %v2625
      %v2882 = vadd.f32 %v2754, %v2762
      %v2883 = vadd.f32 %v2755, %v2763
      %v2884 = vadd.f32 %v2756, %v2764
      %v2885 = vadd.f32 %v2757, %v2765
      %v2886 = vadd.f32 %v2758, %v2766
      %v2887 = vadd.f32 %v2759, %v2767
      %v2888 = vadd.f32 %v2760, %v2768
      %v2889 = vadd.f32 %v2761, %v2769
      %v2890 = vadd.f32 %v2770, %v2778
      %v2891 = vadd.f32 %v2771, %v2779
      %v2892 = vadd.f32 %v2772, %v2780
      %v2893 = vadd.f32 %v2773, %v2781
      %v2894 = vadd.f32 %v2774, %v2782
      %v2895 = vadd.f32 %v2775, %v2783
      %v2896 = vadd.f32 %v2776, %v2784
      %v2897 = vadd.f32 %v2777, %v2785
      %v2898 = vadd.f32 %v2786, %v2794
      %v2899 = vadd.f32 %v2787, %v2795
      %v2900 = vadd.f32 %v2788, %v2796
      %v2901 = vadd.f32 %v2789, %v2797
      %v2902 = vadd.f32 %v2790, %v2798
      %v2903 = vadd.f32 %v2791, %v2799
      %v2904 = vadd.f32 %v2792, %v2800
      %v2905 = vadd.f32 %v2793, %v2801
      %v2906 = vadd.f32 %v2802, %v2810
      %v2907 = vadd.f32 %v2803, %v2811
      %v2908 = vadd.f32 %v2804, %v2812
      %v2909 = vadd.f32 %v2805, %v2813
      %v2910 = vadd.f32 %v2806, %v2814
      %v2911 = vadd.f32 %v2807, %v2815
      %v2912 = vadd.f32 %v2808, %v2816
      %v2913 = vadd.f32 %v2809, %v2817
      %v2914 = vadd.f32 %v2818, %v2826
      %v2915 = vadd.f32 %v2819, %v2827
      %v2916 = vadd.f32 %v2820, %v2828
      %v2917 = vadd.f32 %v2821, %v2829
      %v2918 = vadd.f32 %v2822, %v2830
      %v2919 = vadd.f32 %v2823, %v2831
      %v2920 = vadd.f32 %v2824, %v2832
      %v2921 = vadd.f32 %v2825, %v2833
      %v2922 = vadd.f32 %v2834, %v2842
      %v2923 = vadd.f32 %v2835, %v2843
      %v2924 = vadd.f32 %v2836, %v2844
      %v2925 = vadd.f32 %v2837, %v2845
      %v2926 = vadd.f32 %v2838, %v2846
      %v2927 = vadd.f32 %v2839, %v2847
      %v2928 = vadd.f32 %v2840, %v2848
      %v2929 = vadd.f32 %v2841, %v2849
      %v2930 = vadd.f32 %v2850, %v2858
      %v2931 = vadd.f32 %v2851, %v2859
      %v2932 = vadd.f32 %v2852, %v2860
      %v2933 = vadd.f32 %v2853, %v2861
      %v2934 = vadd.f32 %v2854, %v2862
      %v2935 = vadd.f32 %v2855, %v2863
      %v2936 = vadd.f32 %v2856, %v2864
      %v2937 = vadd.f32 %v2857, %v2865
      %v2938 = vadd.f32 %v2866, %v2874
      %v2939 = vadd.f32 %v2867, %v2875
      %v2940 = vadd.f32 %v2868, %v2876
      %v2941 = vadd.f32 %v2869, %v2877
      %v2942 = vadd.f32 %v2870, %v2878
      %v2943 = vadd.f32 %v2871, %v2879
      %v2944 = vadd.f32 %v2872, %v2880
      %v2945 = vadd.f32 %v2873, %v2881
      %v2946 = vmul.f32 %v2882, 0.25
      %v2947 = vmul.f32 %v2883, 0.25
      %v2948 = vmul.f32 %v2884, 0.25
      %v2949 = vmul.f32 %v2885, 0.25
      %v2950 = vmul.f32 %v2886, 0.25
      %v2951 = vmul.f32 %v2887, 0.25
      %v2952 = vmul.f32 %v2888, 0.25
      %v2953 = vmul.f32 %v2889, 0.25
      %v2954 = vmul.f32 %v2890, 0.25
      %v2955 = vmul.f32 %v2891, 0.25
      %v2956 = vmul.f32 %v2892, 0.25
      %v2957 = vmul.f32 %v2893, 0.25
      %v2958 = vmul.f32 %v2894, 0.25
      %v2959 = vmul.f32 %v2895, 0.25
      %v2960 = vmul.f32 %v2896, 0.25
      %v2961 = vmul.f32 %v2897, 0.25
      %v2962 = vmul.f32 %v2898, 0.25
      %v2963 = vmul.f32 %v2899, 0.25
      %v2964 = vmul.f32 %v2900, 0.25
      %v2965 = vmul.f32 %v2901, 0.25
      %v2966 = vmul.f32 %v2902, 0.25
      %v2967 = vmul.f32 %v2903, 0.25
      %v2968 = vmul.f32 %v2904, 0.25
      %v2969 = vmul.f32 %v2905, 0.25
      %v2970 = vmul.f32 %v2906, 0.25
      %v2971 = vmul.f32 %v2907, 0.25
      %v2972 = vmul.f32 %v2908, 0.25
      %v2973 = vmul.f32 %v2909, 0.25
      %v2974 = vmul.f32 %v2910, 0.25
      %v2975 = vmul.f32 %v2911, 0.25
      %v2976 = vmul.f32 %v2912, 0.25
      %v2977 = vmul.f32 %v2913, 0.25
      %v2978 = vmul.f32 %v2914, 0.25
      %v2979 = vmul.f32 %v2915, 0.25
      %v2980 = vmul.f32 %v2916, 0.25
      %v2981 = vmul.f32 %v2917, 0.25
      %v2982 = vmul.f32 %v2918, 0.25
      %v2983 = vmul.f32 %v2919, 0.25
      %v2984 = vmul.f32 %v2920, 0.25
      %v2985 = vmul.f32 %v2921, 0.25
      %v2986 = vmul.f32 %v2922, 0.25
      %v2987 = vmul.f32 %v2923, 0.25
      %v2988 = vmul.f32 %v2924, 0.25
      %v2989 = vmul.f32 %v2925, 0.25
      %v2990 = vmul.f32 %v2926, 0.25
      %v2991 = vmul.f32 %v2927, 0.25
      %v2992 = vmul.f32 %v2928, 0.25
      %v2993 = vmul.f32 %v2929, 0.25
      %v2994 = vmul.f32 %v2930, 0.25
      %v2995 = vmul.f32 %v2931, 0.25
      %v2996 = vmul.f32 %v2932, 0.25
      %v2997 = vmul.f32 %v2933, 0.25
      %v2998 = vmul.f32 %v2934, 0.25
      %v2999 = vmul.f32 %v2935, 0.25
      %v3000 = vmul.f32 %v2936, 0.25
      %v3001 = vmul.f32 %v2937, 0.25
      %v3002 = vmul.f32 %v2938, 0.25
      %v3003 = vmul.f32 %v2939, 0.25
      %v3004 = vmul.f32 %v2940, 0.25
      %v3005 = vmul.f32 %v2941, 0.25
      %v3006 = vmul.f32 %v2942, 0.25
      %v3007 = vmul.f32 %v2943, 0.25
      %v3008 = vmul.f32 %v2944, 0.25
      %v3009 = vmul.f32 %v2945, 0.25
      %3010 = vst.msk [vmem:[#allocation3] sm:$0xff] %vm243, 0.0
      %3011 = vst.msk [vmem:[#allocation3 + $0x8] sm:$0xff] %vm243, 0.0
      %s3012 = scalar_lea.vmem [#allocation3], 144
      %3013 = vst.msk [vmem:[%s3012] sm:$0xff] %vm243, 0.0
      %3014 = vst.msk [vmem:[%s3012 + $0x8] sm:$0xff] %vm243, 0.0
      %3015 = vst.msk [vmem:[#allocation3] sm:$0x1] %vm251, 0.0
      %3016 = vst.msk [vmem:[#allocation3 + $0x10] sm:$0x1] %vm251, 0.0
      %3017 = vst.msk [vmem:[#allocation3 + $0x20] sm:$0x1] %vm251, 0.0
      %3018 = vst.msk [vmem:[#allocation3 + $0x30] sm:$0x1] %vm251, 0.0
      %3019 = vst.msk [vmem:[#allocation3 + $0x40] sm:$0x1] %vm251, 0.0
      %3020 = vst.msk [vmem:[#allocation3 + $0x50] sm:$0x1] %vm251, 0.0
      %3021 = vst.msk [vmem:[#allocation3 + $0x60] sm:$0x1] %vm251, 0.0
      %3022 = vst.msk [vmem:[#allocation3 + $0x70] sm:$0x1] %vm251, 0.0
      %3023 = vst.msk [vmem:[#allocation3 + $0x80] sm:$0x1] %vm251, 0.0
      %3024 = vst.msk [vmem:[#allocation3 + $0x90] sm:$0x1] %vm251, 0.0
      %3025 = vst.msk [vmem:[#allocation3 + $0x9] sm:$0x7f] %vm270, 0.0
      %3026 = vst.msk [vmem:[#allocation3 + $0x19] sm:$0x7f] %vm270, 0.0
      %3027 = vst.msk [vmem:[#allocation3 + $0x29] sm:$0x7f] %vm270, 0.0
      %3028 = vst.msk [vmem:[#allocation3 + $0x39] sm:$0x7f] %vm270, 0.0
      %3029 = vst.msk [vmem:[#allocation3 + $0x49] sm:$0x7f] %vm270, 0.0
      %3030 = vst.msk [vmem:[#allocation3 + $0x59] sm:$0x7f] %vm270, 0.0
      %3031 = vst.msk [vmem:[#allocation3 + $0x69] sm:$0x7f] %vm270, 0.0
      %3032 = vst.msk [vmem:[#allocation3 + $0x79] sm:$0x7f] %vm270, 0.0
      %3033 = vst.msk [vmem:[#allocation3 + $0x89] sm:$0x7f] %vm270, 0.0
      %3034 = vst.msk [vmem:[#allocation3 + $0x99] sm:$0x7f] %vm270, 0.0
      %v3099 = vperm.slane %v2946, 0
      %v3100 = vperm.slane %v2947, 0
      %v3101 = vperm.slane %v2948, 0
      %v3102 = vperm.slane %v2949, 0
      %v3103 = vperm.slane %v2950, 0
      %v3104 = vperm.slane %v2951, 0
      %v3105 = vperm.slane %v2952, 0
      %v3106 = vperm.slane %v2953, 0
      %v3107 = vperm.slane %v2954, 0
      %v3108 = vperm.slane %v2955, 0
      %v3109 = vperm.slane %v2956, 0
      %v3110 = vperm.slane %v2957, 0
      %v3111 = vperm.slane %v2958, 0
      %v3112 = vperm.slane %v2959, 0
      %v3113 = vperm.slane %v2960, 0
      %v3114 = vperm.slane %v2961, 0
      %v3115 = vperm.slane %v2962, 0
      %v3116 = vperm.slane %v2963, 0
      %v3117 = vperm.slane %v2964, 0
      %v3118 = vperm.slane %v2965, 0
      %v3119 = vperm.slane %v2966, 0
      %v3120 = vperm.slane %v2967, 0
      %v3121 = vperm.slane %v2968, 0
      %v3122 = vperm.slane %v2969, 0
      %v3123 = vperm.slane %v2970, 0
      %v3124 = vperm.slane %v2971, 0
      %v3125 = vperm.slane %v2972, 0
      %v3126 = vperm.slane %v2973, 0
      %v3127 = vperm.slane %v2974, 0
      %v3128 = vperm.slane %v2975, 0
      %v3129 = vperm.slane %v2976, 0
      %v3130 = vperm.slane %v2977, 0
      %v3131 = vperm.slane %v2978, 0
      %v3132 = vperm.slane %v2979, 0
      %v3133 = vperm.slane %v2980, 0
      %v3134 = vperm.slane %v2981, 0
      %v3135 = vperm.slane %v2982, 0
      %v3136 = vperm.slane %v2983, 0
      %v3137 = vperm.slane %v2984, 0
      %v3138 = vperm.slane %v2985, 0
      %v3139 = vperm.slane %v2986, 0
      %v3140 = vperm.slane %v2987, 0
      %v3141 = vperm.slane %v2988, 0
      %v3142 = vperm.slane %v2989, 0
      %v3143 = vperm.slane %v2990, 0
      %v3144 = vperm.slane %v2991, 0
      %v3145 = vperm.slane %v2992, 0
      %v3146 = vperm.slane %v2993, 0
      %v3147 = vperm.slane %v2994, 0
      %v3148 = vperm.slane %v2995, 0
      %v3149 = vperm.slane %v2996, 0
      %v3150 = vperm.slane %v2997, 0
      %v3151 = vperm.slane %v2998, 0
      %v3152 = vperm.slane %v2999, 0
      %v3153 = vperm.slane %v3000, 0
      %v3154 = vperm.slane %v3001, 0
      %v3155 = vperm.slane %v3002, 0
      %v3156 = vperm.slane %v3003, 0
      %v3157 = vperm.slane %v3004, 0
      %v3158 = vperm.slane %v3005, 0
      %v3159 = vperm.slane %v3006, 0
      %v3160 = vperm.slane %v3007, 0
      %v3161 = vperm.slane %v3008, 0
      %v3162 = vperm.slane %v3009, 0
      %vm3163 = vcmask 1041409
      %v3164 = vsel %vm3163, %v3100, %v3099
      %vm3165 = vcmask 1042434
      %v3166 = vsel %vm3165, %v3101, %v3164
      %vm3167 = vcmask 1043459
      %v3168 = vsel %vm3167, %v3102, %v3166
      %vm3169 = vcmask 1044484
      %v3170 = vsel %vm3169, %v3103, %v3168
      %vm3171 = vcmask 1045509
      %v3172 = vsel %vm3171, %v3104, %v3170
      %vm3173 = vcmask 1046534
      %v3174 = vsel %vm3173, %v3105, %v3172
      %vm3175 = vcmask 1047559
      %v3176 = vsel %vm3175, %v3106, %v3174
      %v3177 = vsel %vm3163, %v3108, %v3107
      %v3178 = vsel %vm3165, %v3109, %v3177
      %v3179 = vsel %vm3167, %v3110, %v3178
      %v3180 = vsel %vm3169, %v3111, %v3179
      %v3181 = vsel %vm3171, %v3112, %v3180
      %v3182 = vsel %vm3173, %v3113, %v3181
      %v3183 = vsel %vm3175, %v3114, %v3182
      %v3184 = vsel %vm3163, %v3116, %v3115
      %v3185 = vsel %vm3165, %v3117, %v3184
      %v3186 = vsel %vm3167, %v3118, %v3185
      %v3187 = vsel %vm3169, %v3119, %v3186
      %v3188 = vsel %vm3171, %v3120, %v3187
      %v3189 = vsel %vm3173, %v3121, %v3188
      %v3190 = vsel %vm3175, %v3122, %v3189
      %v3191 = vsel %vm3163, %v3124, %v3123
      %v3192 = vsel %vm3165, %v3125, %v3191
      %v3193 = vsel %vm3167, %v3126, %v3192
      %v3194 = vsel %vm3169, %v3127, %v3193
      %v3195 = vsel %vm3171, %v3128, %v3194
      %v3196 = vsel %vm3173, %v3129, %v3195
      %v3197 = vsel %vm3175, %v3130, %v3196
      %v3198 = vsel %vm3163, %v3132, %v3131
      %v3199 = vsel %vm3165, %v3133, %v3198
      %v3200 = vsel %vm3167, %v3134, %v3199
      %v3201 = vsel %vm3169, %v3135, %v3200
      %v3202 = vsel %vm3171, %v3136, %v3201
      %v3203 = vsel %vm3173, %v3137, %v3202
      %v3204 = vsel %vm3175, %v3138, %v3203
      %v3205 = vsel %vm3163, %v3140, %v3139
      %v3206 = vsel %vm3165, %v3141, %v3205
      %v3207 = vsel %vm3167, %v3142, %v3206
      %v3208 = vsel %vm3169, %v3143, %v3207
      %v3209 = vsel %vm3171, %v3144, %v3208
      %v3210 = vsel %vm3173, %v3145, %v3209
      %v3211 = vsel %vm3175, %v3146, %v3210
      %v3212 = vsel %vm3163, %v3148, %v3147
      %v3213 = vsel %vm3165, %v3149, %v3212
      %v3214 = vsel %vm3167, %v3150, %v3213
      %v3215 = vsel %vm3169, %v3151, %v3214
      %v3216 = vsel %vm3171, %v3152, %v3215
      %v3217 = vsel %vm3173, %v3153, %v3216
      %v3218 = vsel %vm3175, %v3154, %v3217
      %v3219 = vsel %vm3163, %v3156, %v3155
      %v3220 = vsel %vm3165, %v3157, %v3219
      %v3221 = vsel %vm3167, %v3158, %v3220
      %v3222 = vsel %vm3169, %v3159, %v3221
      %v3223 = vsel %vm3171, %v3160, %v3222
      %v3224 = vsel %vm3173, %v3161, %v3223
      %v3225 = vsel %vm3175, %v3162, %v3224
      %s3234 = scalar_lea.vmem [#allocation3], 16
      %3235 = vst.msk [vmem:[%s3234 + $0x1] sm:$0xff] %vm243, %v3176
      %3236 = vst.msk [vmem:[%s3234 + $0x11] sm:$0xff] %vm243, %v3183
      %3237 = vst.msk [vmem:[%s3234 + $0x21] sm:$0xff] %vm243, %v3190
      %3238 = vst.msk [vmem:[%s3234 + $0x31] sm:$0xff] %vm243, %v3197
      %3239 = vst.msk [vmem:[%s3234 + $0x41] sm:$0xff] %vm243, %v3204
      %3240 = vst.msk [vmem:[%s3234 + $0x51] sm:$0xff] %vm243, %v3211
      %3241 = vst.msk [vmem:[%s3234 + $0x61] sm:$0xff] %vm243, %v3218
      %3242 = vst.msk [vmem:[%s3234 + $0x71] sm:$0xff] %vm243, %v3225
      %v3243 = vld [vmem:[%s2] sm:$0xf]
      %s3244 = scalar_lea.vmem %s2, 4
      %v3245 = vld [vmem:[%s3244] sm:$0xf]
      %s3246 = scalar_lea.vmem %s2, 8
      %v3247 = vld [vmem:[%s3246] sm:$0xf]
      %s3248 = scalar_lea.vmem %s2, 12
      %v3249 = vld [vmem:[%s3248] sm:$0xf]
      %s3250 = scalar_lea.vmem %s2, 16
      %v3251 = vld [vmem:[%s3250] sm:$0xf]
      %s3252 = scalar_lea.vmem %s2, 20
      %v3253 = vld [vmem:[%s3252] sm:$0xf]
      %s3254 = scalar_lea.vmem %s2, 24
      %v3255 = vld [vmem:[%s3254] sm:$0xf]
      %s3256 = scalar_lea.vmem %s2, 28
      %v3257 = vld [vmem:[%s3256] sm:$0xf]
      %s3258 = scalar_lea.vmem %s2, 32
      %v3259 = vld [vmem:[%s3258] sm:$0xf]
      %v3260 = vld [vmem:[#allocation3] sm:$0xff]
      %v3261 = vld [vmem:[#allocation3 + $0x8] sm:$0xff]
      %v3262 = vld [vmem:[#allocation3 + $0x10] sm:$0xff]
      %v3263 = vld [vmem:[#allocation3 + $0x18] sm:$0xff]
      %v3264 = vld [vmem:[#allocation3 + $0x20] sm:$0xff]
      %v3265 = vld [vmem:[#allocation3 + $0x28] sm:$0xff]
      %v3266 = vld [vmem:[#allocation3 + $0x30] sm:$0xff]
      %v3267 = vld [vmem:[#allocation3 + $0x38] sm:$0xff]
      %v3268 = vld [vmem:[#allocation3 + $0x40] sm:$0xff]
      %v3269 = vld [vmem:[#allocation3 + $0x48] sm:$0xff]
      %v3270 = vld [vmem:[#allocation3 + $0x50] sm:$0xff]
      %v3271 = vld [vmem:[#allocation3 + $0x58] sm:$0xff]
      %v3272 = vld [vmem:[#allocation3 + $0x60] sm:$0xff]
      %v3273 = vld [vmem:[#allocation3 + $0x68] sm:$0xff]
      %v3274 = vld [vmem:[#allocation3 + $0x70] sm:$0xff]
      %v3275 = vld [vmem:[#allocation3 + $0x78] sm:$0xff]
      %v3276 = vld [vmem:[#allocation3 + $0x80] sm:$0xff]
      %v3277 = vld [vmem:[#allocation3 + $0x88] sm:$0xff]
      %v3278 = vld [vmem:[#allocation3 + $0x90] sm:$0xff]
      %v3279 = vld [vmem:[#allocation3 + $0x98] sm:$0xff]
      %v3296 = vrot.slane %v3260, 1
      %v3297 = vrot.slane %v3261, 1
      %v3298 = vsel %vm441, %v3296, %v3297
      %v3299 = vrot.slane %v3262, 1
      %v3300 = vrot.slane %v3263, 1
      %v3301 = vsel %vm441, %v3299, %v3300
      %v3302 = vrot.slane %v3264, 1
      %v3303 = vrot.slane %v3265, 1
      %v3304 = vsel %vm441, %v3302, %v3303
      %v3305 = vrot.slane %v3266, 1
      %v3306 = vrot.slane %v3267, 1
      %v3307 = vsel %vm441, %v3305, %v3306
      %v3308 = vrot.slane %v3268, 1
      %v3309 = vrot.slane %v3269, 1
      %v3310 = vsel %vm441, %v3308, %v3309
      %v3311 = vrot.slane %v3270, 1
      %v3312 = vrot.slane %v3271, 1
      %v3313 = vsel %vm441, %v3311, %v3312
      %v3314 = vrot.slane %v3272, 1
      %v3315 = vrot.slane %v3273, 1
      %v3316 = vsel %vm441, %v3314, %v3315
      %v3317 = vrot.slane %v3274, 1
      %v3318 = vrot.slane %v3275, 1
      %v3319 = vsel %vm441, %v3317, %v3318
      %v3320 = vsel %vm243, %v3298, 0
      %v3322 = vsel %vm243, %v3301, 0
      %v3324 = vsel %vm243, %v3304, 0
      %v3326 = vsel %vm243, %v3307, 0
      %v3328 = vsel %vm243, %v3310, 0
      %v3330 = vsel %vm243, %v3313, 0
      %v3332 = vsel %vm243, %v3316, 0
      %v3334 = vsel %vm243, %v3319, 0
      %v3337 = vsel %vm586, %v3245, 0
      %3339 = vmatpush.msra.mxu0 0.0
      %3340 = vmatpush.msra.mxu0 0.0
      %3341 = vmatpush.msra.mxu0 0.0
      %3342 = vmatpush.msra.mxu0 0.0
      %3343 = vmatpush.msra.mxu0 0.0
      %3344 = vmatpush.msra.mxu0 0.0
      %3345 = vmatpush.msra.mxu0 0.0
      %3346 = vmatpush.msra.mxu0 0.0
      %3347 = vmatpush.msra.mxu0 0.0
      %3348 = vmatpush.msra.mxu0 0.0
      %3349 = vmatpush.msra.mxu0 0.0
      %3350 = vmatpush.msra.mxu0 0.0
      %3351 = vmatpush.msra.mxu0 0.0
      %3352 = vmatpush.msra.mxu0 0.0
      %3353 = vmatpush.msra.mxu0 0.0
      %3354 = vmatpush.msra.mxu0 %v3337
      %3355 = vmatmul.f32.gmra.mxu0 %v3320
      %v3356 = vpop.f32.mrf.mxu0
      %v3357 = vadd.f32 0.0, %v3356
      %3358 = vmatmul.f32.gmra.mxu0 %v3322
      %v3359 = vpop.f32.mrf.mxu0
      %v3360 = vadd.f32 0.0, %v3359
      %3361 = vmatmul.f32.gmra.mxu0 %v3324
      %v3362 = vpop.f32.mrf.mxu0
      %v3363 = vadd.f32 0.0, %v3362
      %3364 = vmatmul.f32.gmra.mxu0 %v3326
      %v3365 = vpop.f32.mrf.mxu0
      %v3366 = vadd.f32 0.0, %v3365
      %3367 = vmatmul.f32.gmra.mxu0 %v3328
      %v3368 = vpop.f32.mrf.mxu0
      %v3369 = vadd.f32 0.0, %v3368
      %3370 = vmatmul.f32.gmra.mxu0 %v3330
      %v3371 = vpop.f32.mrf.mxu0
      %v3372 = vadd.f32 0.0, %v3371
      %3373 = vmatmul.f32.gmra.mxu0 %v3332
      %v3374 = vpop.f32.mrf.mxu0
      %v3375 = vadd.f32 0.0, %v3374
      %3376 = vmatmul.f32.gmra.mxu0 %v3334
      %v3377 = vpop.f32.mrf.mxu0
      %v3378 = vadd.f32 0.0, %v3377
      %3379 = vdwg.mxu0
      %v3380 = vsel %vm243, %v3260, 0
      %v3382 = vsel %vm243, %v3262, 0
      %v3384 = vsel %vm243, %v3264, 0
      %v3386 = vsel %vm243, %v3266, 0
      %v3388 = vsel %vm243, %v3268, 0
      %v3390 = vsel %vm243, %v3270, 0
      %v3392 = vsel %vm243, %v3272, 0
      %v3394 = vsel %vm243, %v3274, 0
      %v3397 = vsel %vm586, %v3243, 0
      %3399 = vmatpush.msra.mxu0 0.0
      %3400 = vmatpush.msra.mxu0 0.0
      %3401 = vmatpush.msra.mxu0 0.0
      %3402 = vmatpush.msra.mxu0 0.0
      %3403 = vmatpush.msra.mxu0 0.0
      %3404 = vmatpush.msra.mxu0 0.0
      %3405 = vmatpush.msra.mxu0 0.0
      %3406 = vmatpush.msra.mxu0 0.0
      %3407 = vmatpush.msra.mxu0 0.0
      %3408 = vmatpush.msra.mxu0 0.0
      %3409 = vmatpush.msra.mxu0 0.0
      %3410 = vmatpush.msra.mxu0 0.0
      %3411 = vmatpush.msra.mxu0 0.0
      %3412 = vmatpush.msra.mxu0 0.0
      %3413 = vmatpush.msra.mxu0 0.0
      %3414 = vmatpush.msra.mxu0 %v3397
      %3415 = vmatmul.f32.gmra.mxu0 %v3380
      %v3416 = vpop.f32.mrf.mxu0
      %v3417 = vadd.f32 %v3357, %v3416
      %3418 = vmatmul.f32.gmra.mxu0 %v3382
      %v3419 = vpop.f32.mrf.mxu0
      %v3420 = vadd.f32 %v3360, %v3419
      %3421 = vmatmul.f32.gmra.mxu0 %v3384
      %v3422 = vpop.f32.mrf.mxu0
      %v3423 = vadd.f32 %v3363, %v3422
      %3424 = vmatmul.f32.gmra.mxu0 %v3386
      %v3425 = vpop.f32.mrf.mxu0
      %v3426 = vadd.f32 %v3366, %v3425
      %3427 = vmatmul.f32.gmra.mxu0 %v3388
      %v3428 = vpop.f32.mrf.mxu0
      %v3429 = vadd.f32 %v3369, %v3428
      %3430 = vmatmul.f32.gmra.mxu0 %v3390
      %v3431 = vpop.f32.mrf.mxu0
      %v3432 = vadd.f32 %v3372, %v3431
      %3433 = vmatmul.f32.gmra.mxu0 %v3392
      %v3434 = vpop.f32.mrf.mxu0
      %v3435 = vadd.f32 %v3375, %v3434
      %3436 = vmatmul.f32.gmra.mxu0 %v3394
      %v3437 = vpop.f32.mrf.mxu0
      %v3438 = vadd.f32 %v3378, %v3437
      %3439 = vdwg.mxu0
      %v3440 = vrot.slane %v3260, 2
      %v3441 = vrot.slane %v3261, 2
      %v3442 = vsel %vm883, %v3440, %v3441
      %v3443 = vrot.slane %v3262, 2
      %v3444 = vrot.slane %v3263, 2
      %v3445 = vsel %vm883, %v3443, %v3444
      %v3446 = vrot.slane %v3264, 2
      %v3447 = vrot.slane %v3265, 2
      %v3448 = vsel %vm883, %v3446, %v3447
      %v3449 = vrot.slane %v3266, 2
      %v3450 = vrot.slane %v3267, 2
      %v3451 = vsel %vm883, %v3449, %v3450
      %v3452 = vrot.slane %v3268, 2
      %v3453 = vrot.slane %v3269, 2
      %v3454 = vsel %vm883, %v3452, %v3453
      %v3455 = vrot.slane %v3270, 2
      %v3456 = vrot.slane %v3271, 2
      %v3457 = vsel %vm883, %v3455, %v3456
      %v3458 = vrot.slane %v3272, 2
      %v3459 = vrot.slane %v3273, 2
      %v3460 = vsel %vm883, %v3458, %v3459
      %v3461 = vrot.slane %v3274, 2
      %v3462 = vrot.slane %v3275, 2
      %v3463 = vsel %vm883, %v3461, %v3462
      %v3464 = vsel %vm243, %v3442, 0
      %v3466 = vsel %vm243, %v3445, 0
      %v3468 = vsel %vm243, %v3448, 0
      %v3470 = vsel %vm243, %v3451, 0
      %v3472 = vsel %vm243, %v3454, 0
      %v3474 = vsel %vm243, %v3457, 0
      %v3476 = vsel %vm243, %v3460, 0
      %v3478 = vsel %vm243, %v3463, 0
      %v3481 = vsel %vm586, %v3247, 0
      %3483 = vmatpush.msra.mxu0 0.0
      %3484 = vmatpush.msra.mxu0 0.0
      %3485 = vmatpush.msra.mxu0 0.0
      %3486 = vmatpush.msra.mxu0 0.0
      %3487 = vmatpush.msra.mxu0 0.0
      %3488 = vmatpush.msra.mxu0 0.0
      %3489 = vmatpush.msra.mxu0 0.0
      %3490 = vmatpush.msra.mxu0 0.0
      %3491 = vmatpush.msra.mxu0 0.0
      %3492 = vmatpush.msra.mxu0 0.0
      %3493 = vmatpush.msra.mxu0 0.0
      %3494 = vmatpush.msra.mxu0 0.0
      %3495 = vmatpush.msra.mxu0 0.0
      %3496 = vmatpush.msra.mxu0 0.0
      %3497 = vmatpush.msra.mxu0 0.0
      %3498 = vmatpush.msra.mxu0 %v3481
      %3499 = vmatmul.f32.gmra.mxu0 %v3464
      %v3500 = vpop.f32.mrf.mxu0
      %v3501 = vadd.f32 0.0, %v3500
      %3502 = vmatmul.f32.gmra.mxu0 %v3466
      %v3503 = vpop.f32.mrf.mxu0
      %v3504 = vadd.f32 0.0, %v3503
      %3505 = vmatmul.f32.gmra.mxu0 %v3468
      %v3506 = vpop.f32.mrf.mxu0
      %v3507 = vadd.f32 0.0, %v3506
      %3508 = vmatmul.f32.gmra.mxu0 %v3470
      %v3509 = vpop.f32.mrf.mxu0
      %v3510 = vadd.f32 0.0, %v3509
      %3511 = vmatmul.f32.gmra.mxu0 %v3472
      %v3512 = vpop.f32.mrf.mxu0
      %v3513 = vadd.f32 0.0, %v3512
      %3514 = vmatmul.f32.gmra.mxu0 %v3474
      %v3515 = vpop.f32.mrf.mxu0
      %v3516 = vadd.f32 0.0, %v3515
      %3517 = vmatmul.f32.gmra.mxu0 %v3476
      %v3518 = vpop.f32.mrf.mxu0
      %v3519 = vadd.f32 0.0, %v3518
      %3520 = vmatmul.f32.gmra.mxu0 %v3478
      %v3521 = vpop.f32.mrf.mxu0
      %v3522 = vadd.f32 0.0, %v3521
      %3523 = vdwg.mxu0
      %v3524 = vadd.f32 %v3417, %v3501
      %v3525 = vadd.f32 %v3420, %v3504
      %v3526 = vadd.f32 %v3423, %v3507
      %v3527 = vadd.f32 %v3426, %v3510
      %v3528 = vadd.f32 %v3429, %v3513
      %v3529 = vadd.f32 %v3432, %v3516
      %v3530 = vadd.f32 %v3435, %v3519
      %v3531 = vadd.f32 %v3438, %v3522
      %v3533 = vsel %vm243, %v3276, 0
      %v3536 = vsel %vm586, %v3249, 0
      %3538 = vmatpush.msra.mxu0 0.0
      %3539 = vmatpush.msra.mxu0 0.0
      %3540 = vmatpush.msra.mxu0 0.0
      %3541 = vmatpush.msra.mxu0 0.0
      %3542 = vmatpush.msra.mxu0 0.0
      %3543 = vmatpush.msra.mxu0 0.0
      %3544 = vmatpush.msra.mxu0 0.0
      %3545 = vmatpush.msra.mxu0 0.0
      %3546 = vmatpush.msra.mxu0 0.0
      %3547 = vmatpush.msra.mxu0 0.0
      %3548 = vmatpush.msra.mxu0 0.0
      %3549 = vmatpush.msra.mxu0 0.0
      %3550 = vmatpush.msra.mxu0 0.0
      %3551 = vmatpush.msra.mxu0 0.0
      %3552 = vmatpush.msra.mxu0 0.0
      %3553 = vmatpush.msra.mxu0 %v3536
      %3554 = vmatmul.f32.gmra.mxu0 %v3382
      %v3555 = vpop.f32.mrf.mxu0
      %v3556 = vadd.f32 0.0, %v3555
      %3557 = vmatmul.f32.gmra.mxu0 %v3384
      %v3558 = vpop.f32.mrf.mxu0
      %v3559 = vadd.f32 0.0, %v3558
      %3560 = vmatmul.f32.gmra.mxu0 %v3386
      %v3561 = vpop.f32.mrf.mxu0
      %v3562 = vadd.f32 0.0, %v3561
      %3563 = vmatmul.f32.gmra.mxu0 %v3388
      %v3564 = vpop.f32.mrf.mxu0
      %v3565 = vadd.f32 0.0, %v3564
      %3566 = vmatmul.f32.gmra.mxu0 %v3390
      %v3567 = vpop.f32.mrf.mxu0
      %v3568 = vadd.f32 0.0, %v3567
      %3569 = vmatmul.f32.gmra.mxu0 %v3392
      %v3570 = vpop.f32.mrf.mxu0
      %v3571 = vadd.f32 0.0, %v3570
      %3572 = vmatmul.f32.gmra.mxu0 %v3394
      %v3573 = vpop.f32.mrf.mxu0
      %v3574 = vadd.f32 0.0, %v3573
      %3575 = vmatmul.f32.gmra.mxu0 %v3533
      %v3576 = vpop.f32.mrf.mxu0
      %v3577 = vadd.f32 0.0, %v3576
      %3578 = vdwg.mxu0
      %v3579 = vadd.f32 %v3524, %v3556
      %v3580 = vadd.f32 %v3525, %v3559
      %v3581 = vadd.f32 %v3526, %v3562
      %v3582 = vadd.f32 %v3527, %v3565
      %v3583 = vadd.f32 %v3528, %v3568
      %v3584 = vadd.f32 %v3529, %v3571
      %v3585 = vadd.f32 %v3530, %v3574
      %v3586 = vadd.f32 %v3531, %v3577
      %v3588 = vrot.slane %v3276, 1
      %v3589 = vrot.slane %v3277, 1
      %v3590 = vsel %vm441, %v3588, %v3589
      %v3591 = vsel %vm243, %v3590, 0
      %v3594 = vsel %vm586, %v3251, 0
      %3596 = vmatpush.msra.mxu0 0.0
      %3597 = vmatpush.msra.mxu0 0.0
      %3598 = vmatpush.msra.mxu0 0.0
      %3599 = vmatpush.msra.mxu0 0.0
      %3600 = vmatpush.msra.mxu0 0.0
      %3601 = vmatpush.msra.mxu0 0.0
      %3602 = vmatpush.msra.mxu0 0.0
      %3603 = vmatpush.msra.mxu0 0.0
      %3604 = vmatpush.msra.mxu0 0.0
      %3605 = vmatpush.msra.mxu0 0.0
      %3606 = vmatpush.msra.mxu0 0.0
      %3607 = vmatpush.msra.mxu0 0.0
      %3608 = vmatpush.msra.mxu0 0.0
      %3609 = vmatpush.msra.mxu0 0.0
      %3610 = vmatpush.msra.mxu0 0.0
      %3611 = vmatpush.msra.mxu0 %v3594
      %3612 = vmatmul.f32.gmra.mxu0 %v3322
      %v3613 = vpop.f32.mrf.mxu0
      %v3614 = vadd.f32 0.0, %v3613
      %3615 = vmatmul.f32.gmra.mxu0 %v3324
      %v3616 = vpop.f32.mrf.mxu0
      %v3617 = vadd.f32 0.0, %v3616
      %3618 = vmatmul.f32.gmra.mxu0 %v3326
      %v3619 = vpop.f32.mrf.mxu0
      %v3620 = vadd.f32 0.0, %v3619
      %3621 = vmatmul.f32.gmra.mxu0 %v3328
      %v3622 = vpop.f32.mrf.mxu0
      %v3623 = vadd.f32 0.0, %v3622
      %3624 = vmatmul.f32.gmra.mxu0 %v3330
      %v3625 = vpop.f32.mrf.mxu0
      %v3626 = vadd.f32 0.0, %v3625
      %3627 = vmatmul.f32.gmra.mxu0 %v3332
      %v3628 = vpop.f32.mrf.mxu0
      %v3629 = vadd.f32 0.0, %v3628
      %3630 = vmatmul.f32.gmra.mxu0 %v3334
      %v3631 = vpop.f32.mrf.mxu0
      %v3632 = vadd.f32 0.0, %v3631
      %3633 = vmatmul.f32.gmra.mxu0 %v3591
      %v3634 = vpop.f32.mrf.mxu0
      %v3635 = vadd.f32 0.0, %v3634
      %3636 = vdwg.mxu0
      %v3637 = vadd.f32 %v3579, %v3614
      %v3638 = vadd.f32 %v3580, %v3617
      %v3639 = vadd.f32 %v3581, %v3620
      %v3640 = vadd.f32 %v3582, %v3623
      %v3641 = vadd.f32 %v3583, %v3626
      %v3642 = vadd.f32 %v3584, %v3629
      %v3643 = vadd.f32 %v3585, %v3632
      %v3644 = vadd.f32 %v3586, %v3635
      %v3645 = vrot.slane %v3276, 2
      %v3646 = vrot.slane %v3277, 2
      %v3647 = vsel %vm883, %v3645, %v3646
      %v3648 = vsel %vm243, %v3647, 0
      %v3651 = vsel %vm586, %v3253, 0
      %3653 = vmatpush.msra.mxu0 0.0
      %3654 = vmatpush.msra.mxu0 0.0
      %3655 = vmatpush.msra.mxu0 0.0
      %3656 = vmatpush.msra.mxu0 0.0
      %3657 = vmatpush.msra.mxu0 0.0
      %3658 = vmatpush.msra.mxu0 0.0
      %3659 = vmatpush.msra.mxu0 0.0
      %3660 = vmatpush.msra.mxu0 0.0
      %3661 = vmatpush.msra.mxu0 0.0
      %3662 = vmatpush.msra.mxu0 0.0
      %3663 = vmatpush.msra.mxu0 0.0
      %3664 = vmatpush.msra.mxu0 0.0
      %3665 = vmatpush.msra.mxu0 0.0
      %3666 = vmatpush.msra.mxu0 0.0
      %3667 = vmatpush.msra.mxu0 0.0
      %3668 = vmatpush.msra.mxu0 %v3651
      %3669 = vmatmul.f32.gmra.mxu0 %v3466
      %v3670 = vpop.f32.mrf.mxu0
      %v3671 = vadd.f32 0.0, %v3670
      %3672 = vmatmul.f32.gmra.mxu0 %v3468
      %v3673 = vpop.f32.mrf.mxu0
      %v3674 = vadd.f32 0.0, %v3673
      %3675 = vmatmul.f32.gmra.mxu0 %v3470
      %v3676 = vpop.f32.mrf.mxu0
      %v3677 = vadd.f32 0.0, %v3676
      %3678 = vmatmul.f32.gmra.mxu0 %v3472
      %v3679 = vpop.f32.mrf.mxu0
      %v3680 = vadd.f32 0.0, %v3679
      %3681 = vmatmul.f32.gmra.mxu0 %v3474
      %v3682 = vpop.f32.mrf.mxu0
      %v3683 = vadd.f32 0.0, %v3682
      %3684 = vmatmul.f32.gmra.mxu0 %v3476
      %v3685 = vpop.f32.mrf.mxu0
      %v3686 = vadd.f32 0.0, %v3685
      %3687 = vmatmul.f32.gmra.mxu0 %v3478
      %v3688 = vpop.f32.mrf.mxu0
      %v3689 = vadd.f32 0.0, %v3688
      %3690 = vmatmul.f32.gmra.mxu0 %v3648
      %v3691 = vpop.f32.mrf.mxu0
      %v3692 = vadd.f32 0.0, %v3691
      %3693 = vdwg.mxu0
      %v3694 = vadd.f32 %v3637, %v3671
      %v3695 = vadd.f32 %v3638, %v3674
      %v3696 = vadd.f32 %v3639, %v3677
      %v3697 = vadd.f32 %v3640, %v3680
      %v3698 = vadd.f32 %v3641, %v3683
      %v3699 = vadd.f32 %v3642, %v3686
      %v3700 = vadd.f32 %v3643, %v3689
      %v3701 = vadd.f32 %v3644, %v3692
      %v3703 = vsel %vm243, %v3278, 0
      %v3706 = vsel %vm586, %v3255, 0
      %3708 = vmatpush.msra.mxu0 0.0
      %3709 = vmatpush.msra.mxu0 0.0
      %3710 = vmatpush.msra.mxu0 0.0
      %3711 = vmatpush.msra.mxu0 0.0
      %3712 = vmatpush.msra.mxu0 0.0
      %3713 = vmatpush.msra.mxu0 0.0
      %3714 = vmatpush.msra.mxu0 0.0
      %3715 = vmatpush.msra.mxu0 0.0
      %3716 = vmatpush.msra.mxu0 0.0
      %3717 = vmatpush.msra.mxu0 0.0
      %3718 = vmatpush.msra.mxu0 0.0
      %3719 = vmatpush.msra.mxu0 0.0
      %3720 = vmatpush.msra.mxu0 0.0
      %3721 = vmatpush.msra.mxu0 0.0
      %3722 = vmatpush.msra.mxu0 0.0
      %3723 = vmatpush.msra.mxu0 %v3706
      %3724 = vmatmul.f32.gmra.mxu0 %v3384
      %v3725 = vpop.f32.mrf.mxu0
      %v3726 = vadd.f32 0.0, %v3725
      %3727 = vmatmul.f32.gmra.mxu0 %v3386
      %v3728 = vpop.f32.mrf.mxu0
      %v3729 = vadd.f32 0.0, %v3728
      %3730 = vmatmul.f32.gmra.mxu0 %v3388
      %v3731 = vpop.f32.mrf.mxu0
      %v3732 = vadd.f32 0.0, %v3731
      %3733 = vmatmul.f32.gmra.mxu0 %v3390
      %v3734 = vpop.f32.mrf.mxu0
      %v3735 = vadd.f32 0.0, %v3734
      %3736 = vmatmul.f32.gmra.mxu0 %v3392
      %v3737 = vpop.f32.mrf.mxu0
      %v3738 = vadd.f32 0.0, %v3737
      %3739 = vmatmul.f32.gmra.mxu0 %v3394
      %v3740 = vpop.f32.mrf.mxu0
      %v3741 = vadd.f32 0.0, %v3740
      %3742 = vmatmul.f32.gmra.mxu0 %v3533
      %v3743 = vpop.f32.mrf.mxu0
      %v3744 = vadd.f32 0.0, %v3743
      %3745 = vmatmul.f32.gmra.mxu0 %v3703
      %v3746 = vpop.f32.mrf.mxu0
      %v3747 = vadd.f32 0.0, %v3746
      %3748 = vdwg.mxu0
      %v3749 = vadd.f32 %v3694, %v3726
      %v3750 = vadd.f32 %v3695, %v3729
      %v3751 = vadd.f32 %v3696, %v3732
      %v3752 = vadd.f32 %v3697, %v3735
      %v3753 = vadd.f32 %v3698, %v3738
      %v3754 = vadd.f32 %v3699, %v3741
      %v3755 = vadd.f32 %v3700, %v3744
      %v3756 = vadd.f32 %v3701, %v3747
      %v3758 = vrot.slane %v3278, 1
      %v3759 = vrot.slane %v3279, 1
      %v3760 = vsel %vm441, %v3758, %v3759
      %v3761 = vsel %vm243, %v3760, 0
      %v3764 = vsel %vm586, %v3257, 0
      %3766 = vmatpush.msra.mxu0 0.0
      %3767 = vmatpush.msra.mxu0 0.0
      %3768 = vmatpush.msra.mxu0 0.0
      %3769 = vmatpush.msra.mxu0 0.0
      %3770 = vmatpush.msra.mxu0 0.0
      %3771 = vmatpush.msra.mxu0 0.0
      %3772 = vmatpush.msra.mxu0 0.0
      %3773 = vmatpush.msra.mxu0 0.0
      %3774 = vmatpush.msra.mxu0 0.0
      %3775 = vmatpush.msra.mxu0 0.0
      %3776 = vmatpush.msra.mxu0 0.0
      %3777 = vmatpush.msra.mxu0 0.0
      %3778 = vmatpush.msra.mxu0 0.0
      %3779 = vmatpush.msra.mxu0 0.0
      %3780 = vmatpush.msra.mxu0 0.0
      %3781 = vmatpush.msra.mxu0 %v3764
      %3782 = vmatmul.f32.gmra.mxu0 %v3324
      %v3783 = vpop.f32.mrf.mxu0
      %v3784 = vadd.f32 0.0, %v3783
      %3785 = vmatmul.f32.gmra.mxu0 %v3326
      %v3786 = vpop.f32.mrf.mxu0
      %v3787 = vadd.f32 0.0, %v3786
      %3788 = vmatmul.f32.gmra.mxu0 %v3328
      %v3789 = vpop.f32.mrf.mxu0
      %v3790 = vadd.f32 0.0, %v3789
      %3791 = vmatmul.f32.gmra.mxu0 %v3330
      %v3792 = vpop.f32.mrf.mxu0
      %v3793 = vadd.f32 0.0, %v3792
      %3794 = vmatmul.f32.gmra.mxu0 %v3332
      %v3795 = vpop.f32.mrf.mxu0
      %v3796 = vadd.f32 0.0, %v3795
      %3797 = vmatmul.f32.gmra.mxu0 %v3334
      %v3798 = vpop.f32.mrf.mxu0
      %v3799 = vadd.f32 0.0, %v3798
      %3800 = vmatmul.f32.gmra.mxu0 %v3591
      %v3801 = vpop.f32.mrf.mxu0
      %v3802 = vadd.f32 0.0, %v3801
      %3803 = vmatmul.f32.gmra.mxu0 %v3761
      %v3804 = vpop.f32.mrf.mxu0
      %v3805 = vadd.f32 0.0, %v3804
      %3806 = vdwg.mxu0
      %v3807 = vadd.f32 %v3749, %v3784
      %v3808 = vadd.f32 %v3750, %v3787
      %v3809 = vadd.f32 %v3751, %v3790
      %v3810 = vadd.f32 %v3752, %v3793
      %v3811 = vadd.f32 %v3753, %v3796
      %v3812 = vadd.f32 %v3754, %v3799
      %v3813 = vadd.f32 %v3755, %v3802
      %v3814 = vadd.f32 %v3756, %v3805
      %v3815 = vrot.slane %v3278, 2
      %v3816 = vrot.slane %v3279, 2
      %v3817 = vsel %vm883, %v3815, %v3816
      %v3818 = vsel %vm243, %v3817, 0
      %v3821 = vsel %vm586, %v3259, 0
      %3823 = vmatpush.msra.mxu0 0.0
      %3824 = vmatpush.msra.mxu0 0.0
      %3825 = vmatpush.msra.mxu0 0.0
      %3826 = vmatpush.msra.mxu0 0.0
      %3827 = vmatpush.msra.mxu0 0.0
      %3828 = vmatpush.msra.mxu0 0.0
      %3829 = vmatpush.msra.mxu0 0.0
      %3830 = vmatpush.msra.mxu0 0.0
      %3831 = vmatpush.msra.mxu0 0.0
      %3832 = vmatpush.msra.mxu0 0.0
      %3833 = vmatpush.msra.mxu0 0.0
      %3834 = vmatpush.msra.mxu0 0.0
      %3835 = vmatpush.msra.mxu0 0.0
      %3836 = vmatpush.msra.mxu0 0.0
      %3837 = vmatpush.msra.mxu0 0.0
      %3838 = vmatpush.msra.mxu0 %v3821
      %3839 = vmatmul.f32.gmra.mxu0 %v3468
      %v3840 = vpop.f32.mrf.mxu0
      %v3841 = vadd.f32 0.0, %v3840
      %3842 = vmatmul.f32.gmra.mxu0 %v3470
      %v3843 = vpop.f32.mrf.mxu0
      %v3844 = vadd.f32 0.0, %v3843
      %3845 = vmatmul.f32.gmra.mxu0 %v3472
      %v3846 = vpop.f32.mrf.mxu0
      %v3847 = vadd.f32 0.0, %v3846
      %3848 = vmatmul.f32.gmra.mxu0 %v3474
      %v3849 = vpop.f32.mrf.mxu0
      %v3850 = vadd.f32 0.0, %v3849
      %3851 = vmatmul.f32.gmra.mxu0 %v3476
      %v3852 = vpop.f32.mrf.mxu0
      %v3853 = vadd.f32 0.0, %v3852
      %3854 = vmatmul.f32.gmra.mxu0 %v3478
      %v3855 = vpop.f32.mrf.mxu0
      %v3856 = vadd.f32 0.0, %v3855
      %3857 = vmatmul.f32.gmra.mxu0 %v3648
      %v3858 = vpop.f32.mrf.mxu0
      %v3859 = vadd.f32 0.0, %v3858
      %3860 = vmatmul.f32.gmra.mxu0 %v3818
      %v3861 = vpop.f32.mrf.mxu0
      %v3862 = vadd.f32 0.0, %v3861
      %3863 = vdwg.mxu0
      %v3864 = vadd.f32 %v3807, %v3841
      %v3865 = vadd.f32 %v3808, %v3844
      %v3866 = vadd.f32 %v3809, %v3847
      %v3867 = vadd.f32 %v3810, %v3850
      %v3868 = vadd.f32 %v3811, %v3853
      %v3869 = vadd.f32 %v3812, %v3856
      %v3870 = vadd.f32 %v3813, %v3859
      %v3871 = vadd.f32 %v3814, %v3862
      %3872 = vst [vmem:[%s210] sm:$0xff] %v3864
      %3873 = vst [vmem:[%s210 + $0x8] sm:$0xff] %v3865
      %3874 = vst [vmem:[%s210 + $0x10] sm:$0xff] %v3866
      %3875 = vst [vmem:[%s210 + $0x18] sm:$0xff] %v3867
      %3876 = vst [vmem:[%s210 + $0x20] sm:$0xff] %v3868
      %3877 = vst [vmem:[%s210 + $0x28] sm:$0xff] %v3869
      %3878 = vst [vmem:[%s210 + $0x30] sm:$0xff] %v3870
      %3879 = vst [vmem:[%s210 + $0x38] sm:$0xff] %v3871
      %p3880 = scmp.lt.s32.totalorder %s16, 1
      %s3881 = scalar_select %p3880, %s16, 1
      %s3882 = smul.addr %s3881, 32
      %s3883 = smul.addr %s3882, 8
      %s3884 = scalar_lea.vmem %s3, %s3883
      %p3885 = scmp.lt.s32.totalorder %s16, 1
      %s3886 = scalar_select %p3885, %s16, 1
      %s3887 = smul.addr %s3886, 8
      %s3888 = smul.addr %s3887, 8
      %s3889 = scalar_lea.vmem %s4, %s3888
      // Predicated region
      $region33: #{first_octave_conv_forward.1} parent=31 // pred_check
        %p3890 = pneg %p102
      $region34: #{first_octave_conv_forward.1} parent=31 // pred_check_branch
        %3892 = sbr.rel (%p3890) target = $region36
      $region35: #{first_octave_conv_forward.1} parent=31 // pred_region
        _
      $region36: #{first_octave_conv_forward.1} parent=31 // pred_fallthru
        _
      // Predicated region
      $region37: #{first_octave_conv_forward.1} parent=31 // pred_check
        %p3893 = pneg %p128
      $region38: #{first_octave_conv_forward.1} parent=31 // pred_check_branch
        %3895 = sbr.rel (%p3893) target = $region40
      $region39: #{first_octave_conv_forward.1} parent=31 // pred_region
        _
      $region40: #{first_octave_conv_forward.1} parent=31 // pred_fallthru
        _
    $region32: #{first_octave_conv_forward.1} parent=5 // pred_fallthru
      _
    %p3896 = scmp.le.s32.totalorder 2, %s11
    // Predicated region
    $region41: #{first_octave_conv_forward.1} parent=5 // pred_check
      %p3897 = pneg %p3896
    $region42: #{first_octave_conv_forward.1} parent=5 // pred_check_branch
      %3899 = sbr.rel (%p3897) target = $region44
    $region43: #{first_octave_conv_forward.1} parent=5 // pred_region
      %s3900 = ssub.s32 %s11, 2
      // Predicated region
      $region45: #{first_octave_conv_forward.1} parent=43 // pred_check
        %p3901 = pneg %p108
      $region46: #{first_octave_conv_forward.1} parent=43 // pred_check_branch
        %3903 = sbr.rel (%p3901) target = $region48
      $region47: #{first_octave_conv_forward.1} parent=43 // pred_region
        %p3904 = scmp.lt.s32.totalorder %s17, 1
        %s3905 = scalar_select %p3904, %s17, 1
        %s3906 = smul.addr %s3905, 32
        %s3907 = smul.addr %s3906, 8
        %s3908 = scalar_lea.vmem %s3, %s3907
      $region48: #{first_octave_conv_forward.1} parent=43 // pred_fallthru
        _
      // Predicated region
      $region49: #{first_octave_conv_forward.1} parent=43 // pred_check
        %p3909 = pneg %p134
      $region50: #{first_octave_conv_forward.1} parent=43 // pred_check_branch
        %3911 = sbr.rel (%p3909) target = $region52
      $region51: #{first_octave_conv_forward.1} parent=43 // pred_region
        %p3912 = scmp.lt.s32.totalorder %s17, 1
        %s3913 = scalar_select %p3912, %s17, 1
        %s3914 = smul.addr %s3913, 8
        %s3915 = smul.addr %s3914, 8
        %s3916 = scalar_lea.vmem %s4, %s3915
      $region52: #{first_octave_conv_forward.1} parent=43 // pred_fallthru
        _
    $region44: #{first_octave_conv_forward.1} parent=5 // pred_fallthru
      _
  $region6: #{first_octave_conv_forward.1} parent=0 // loop_footer
    %s15 = sadd.s32 1, %s11
  $region7: #{first_octave_conv_forward.1} parent=0 // loop_footer_branch
    %10 = sbr.rel target = $region3
  $region8: #{first_octave_conv_forward.1} parent=0 // loop_exit
    _

</llo_original>
